<compile_context>
chip_gen: v5e
topology: v5e:2x2
jax: 0.10.0
libtpu: 0.0.40
codegen_flags: <defaults>
</compile_context>

<pallas_src>
import functools

import jax
import jax.numpy as jnp
from jax import lax
from jax.experimental import pallas as pl
from jax.experimental.pallas import tpu as pltpu

_GRAY_R, _GRAY_G, _GRAY_B = 0.2989, 0.587, 0.114  # torchvision rgb_to_grayscale weights
_TINY = 1e-20


def _clip01(x):
    return jnp.clip(x, 0.0, 1.0)


def _safe_recip(d):
    # EUP approximate reciprocal + one Newton refinement on a clamped denominator:
    # ~f32 accuracy, never inf/NaN even for (near-)zero chroma.
    d = jnp.maximum(d, _TINY)
    r0 = pl.reciprocal(d, approx=True)
    return r0 * (2.0 - d * r0)


def _color_jitter_kernel(perm_ref, fac_ref, frames_ref, out_ref, work_ref,
                         *, chunk_rows, frame_unroll):
    """One grid step == one block of F frames.

    perm_ref  : SMEM int32   (4*N,)  per-frame op order, flattened (values in {0..3})
    fac_ref   : SMEM float32 (4*N,)  per-frame [brightness, contrast, saturation, hue]
    frames_ref: VMEM (F, 3, R, L)  input dtype
    out_ref   : VMEM (F, 3, R, L)  input dtype
    work_ref  : VMEM (3, R, L) float32 scratch — the current frame's chain state
    """
    blk = pl.program_id(0)
    F, _, R, L = frames_ref.shape
    inv_pixels = 1.0 / float(R * L)

    n_full = R // chunk_rows
    tail = R - n_full * chunk_rows
    single_chunk = (n_full == 1 and tail == 0)

    def for_each_chunk(fn):
        """Apply fn(row_start, n_rows) over disjoint row sub-slabs covering R."""
        if single_chunk:
            fn(0, chunk_rows)
            return
        if n_full > 0:
            def body(c, carry):
                fn(pl.multiple_of(c * chunk_rows, chunk_rows), chunk_rows)
                return carry
            lax.fori_loop(0, n_full, body, 0)
        if tail > 0:
            fn(n_full * chunk_rows, tail)

    def sum_over_chunks(fn):
        """Sum the scalar fn(row_start, n_rows) over the same row sub-slabs."""
        if single_chunk:
            return fn(0, chunk_rows)
        total = jnp.float32(0.0)
        if n_full > 0:
            def body(c, acc):
                return acc + fn(pl.multiple_of(c * chunk_rows, chunk_rows), chunk_rows)
            total = lax.fori_loop(0, n_full, body, total)
        if tail > 0:
            total = total + fn(n_full * chunk_rows, tail)
        return total

    def gray(r, g, b):
        return _GRAY_R * r + _GRAY_G * g + _GRAY_B * b

    def frame_body(f, carry):
        base = 4 * (blk * F + f)  # 4 * global frame index
        bf = fac_ref[base + 0]
        cf = fac_ref[base + 1]
        sf = fac_ref[base + 2]
        hf = fac_ref[base + 3]

        # --- load + up-cast the frame once into the f32 working buffer ---
        def load_chunk(r0, nr):
            sl = pl.ds(r0, nr)
            for c in range(3):
                work_ref[c, sl, :] = frames_ref[f, c, sl, :].astype(jnp.float32)
        for_each_chunk(load_chunk)

        # --- the four ColorJitter ops, each updating work_ref in place ---
        def brightness_op():
            def chunk(r0, nr):
                sl = pl.ds(r0, nr)
                for c in range(3):
                    work_ref[c, sl, :] = _clip01(work_ref[c, sl, :] * bf)
            for_each_chunk(chunk)

        def contrast_op():
            # torchvision adjust_contrast blends with the grayscale mean of the
            # *current* intermediate image, so it must be computed here (not precomputed
            # from the original frame).  Two passes: reduce, then blend.
            def red(r0, nr):
                sl = pl.ds(r0, nr)
                return jnp.sum(gray(work_ref[0, sl, :], work_ref[1, sl, :],
                                    work_ref[2, sl, :]))
            mean = sum_over_chunks(red) * inv_pixels
            bias = (1.0 - cf) * mean

            def chunk(r0, nr):
                sl = pl.ds(r0, nr)
                for c in range(3):
                    work_ref[c, sl, :] = _clip01(cf * work_ref[c, sl, :] + bias)
            for_each_chunk(chunk)

        def saturation_op():
            one_m_sf = 1.0 - sf

            def chunk(r0, nr):
                sl = pl.ds(r0, nr)
                r = work_ref[0, sl, :]
                g = work_ref[1, sl, :]
                b = work_ref[2, sl, :]
                gr = one_m_sf * gray(r, g, b)
                work_ref[0, sl, :] = _clip01(sf * r + gr)
                work_ref[1, sl, :] = _clip01(sf * g + gr)
                work_ref[2, sl, :] = _clip01(sf * b + gr)
            for_each_chunk(chunk)

        def hue_op():
            def chunk(r0, nr):
                sl = pl.ds(r0, nr)
                r = work_ref[0, sl, :]
                g = work_ref[1, sl, :]
                b = work_ref[2, sl, :]
                # rgb -> (h, v=maxc, chroma)   (torchvision _rgb2hsv; v*s == chroma)
                maxc = jnp.maximum(jnp.maximum(r, g), b)
                minc = jnp.minimum(jnp.minimum(r, g), b)
                cr = maxc - minc
                inv_cr = _safe_recip(cr)
                rc = (maxc - r) * inv_cr
                gc = (maxc - g) * inv_cr
                bc = (maxc - b) * inv_cr
                h = jnp.where(maxc == r, bc - gc,
                              jnp.where(maxc == g, 2.0 + rc - bc, 4.0 + gc - rc))
                # hue shift with a single fused floor-mod (the +1.0 in _rgb2hsv is an
                # integer shift and is absorbed by the mod).
                h = h * (1.0 / 6.0) + hf
                h = h - jnp.floor(h)
                # hsv -> rgb, arithmetic form (no nested select tree):
                #   c_n = v - chroma * clip(min(k, 4-k), 0, 1),  k = (n + 6h) mod 6
                # with n = 5, 3, 1 for R, G, B.  No post-clamp needed: result in [0, v].
                h6 = h * 6.0

                def chan(shift):
                    k = h6 + shift
                    k = jnp.where(k >= 6.0, k - 6.0, k)
                    a = _clip01(jnp.minimum(k, 4.0 - k))
                    return maxc - cr * a

                work_ref[0, sl, :] = chan(5.0)
                work_ref[1, sl, :] = chan(3.0)
                work_ref[2, sl, :] = chan(1.0)
            for_each_chunk(chunk)

        ops = (brightness_op, contrast_op, saturation_op, hue_op)

        # Random op order: 4 sequential stages.  The per-frame op id is an SMEM scalar;
        # only the selected op's body executes at runtime.
        for stage in range(4):
            op_id = perm_ref[base + stage]
            for k, op in enumerate(ops):
                pl.when(op_id == k)(op)

        # --- store + down-cast once to the output dtype ---
        def store_chunk(r0, nr):
            sl = pl.ds(r0, nr)
            for c in range(3):
                out_ref[f, c, sl, :] = work_ref[c, sl, :].astype(out_ref.dtype)
        for_each_chunk(store_chunk)
        return carry

    lax.fori_loop(0, F, frame_body, 0, unroll=frame_unroll)


def _choose_frames_per_block(n_frames, bytes_per_frame, target_bytes=4 << 20):
    """Largest divisor of n_frames whose input block is ~target_bytes, preferring
    >= 6 grid steps (>= 3 per v7x TensorCore) and an even step count."""
    cap = max(1, min(n_frames, target_bytes // max(1, bytes_per_frame)))
    divisors = [f for f in range(1, n_frames + 1) if n_frames % f == 0 and f <= cap]
    min_steps = min(6, n_frames)
    good = [f for f in divisors if n_frames // f >= min_steps]
    even = [f for f in good if (n_frames // f) % 2 == 0]
    cands = even or good or divisors
    return max(cands)


@functools.partial(jax.jit, static_argnames=("s",))
def color_jitter_framewise(video, key, s=1.0):
    """video: (T, 3, H, W) or (B, T, 3, H, W), float values in [0, 1]."""
    orig_shape = video.shape
    orig_dtype = video.dtype
    assert orig_shape[-3] == 3, "expected RGB channel dim of size 3"
    H, W = orig_shape[-2], orig_shape[-1]
    hw = H * W

    if jnp.issubdtype(orig_dtype, jnp.floating):
        io_dtype = orig_dtype  # native-dtype DMA in and out, no wrapper casts
    else:
        # TODO(synk): integer (e.g. uint8) inputs take the float path here; torchvision's
        # per-op integer rounding/clamping semantics are not reproduced.
        io_dtype = jnp.float32

    # Lane/sublane-dense layout without any padded HBM copy: merge H*W into
    # (hw/128, 128) when possible (free contiguous reshape), else keep full-extent (H, W).
    if hw % 128 == 0:
        R, L = hw // 128, 128
    else:
        R, L = H, W
    frames = video.reshape((-1, 3, R, L))
    if frames.dtype != io_dtype:
        frames = frames.astype(io_dtype)
    n = frames.shape[0]

    # --- per-frame ColorJitter parameter sampling (plain-JAX glue) ---
    kb, kc, ks, kh, kp = jax.random.split(key, 5)
    lo = max(0.0, 1.0 - 0.8 * s)
    hi = 1.0 + 0.8 * s
    bright = jax.random.uniform(kb, (n,), minval=lo, maxval=hi)
    contr = jax.random.uniform(kc, (n,), minval=lo, maxval=hi)
    satur = jax.random.uniform(ks, (n,), minval=lo, maxval=hi)
    hue = jax.random.uniform(kh, (n,), minval=-0.2 * s, maxval=0.2 * s)
    fac = jnp.stack([bright, contr, satur, hue], axis=1).astype(jnp.float32).reshape(-1)
    perm_keys = jax.random.split(kp, n)
    perm = jax.vmap(lambda k: jax.random.permutation(k, 4))(perm_keys)
    perm = perm.astype(jnp.int32).reshape(-1)

    itemsize = jnp.dtype(io_dtype).itemsize
    bytes_per_frame = 3 * R * L * itemsize
    f_per_block = _choose_frames_per_block(n, bytes_per_frame)
    # TODO(synk): frames too large to double-buffer in VMEM (e.g. 1080p f32 on v7x's
    # 64 MiB) need a spatial grid axis; because the contrast mean is taken over the
    # *intermediate* image at its position in the op chain, that requires a two-pass
    # row-tiled scheme (reduce pass, then blend pass), not a precomputed input mean.

    chunk_rows = R if R <= 64 else 64
    frame_unroll = 2 if f_per_block >= 2 else 1

    block_bytes = f_per_block * 3 * R * L * itemsize
    scratch_bytes = 3 * R * L * 4
    vmem_need = 4 * block_bytes + scratch_bytes + (2 << 20)  # double-buffered in + out
    vmem_limit = int(min(max(vmem_need, 32 << 20), 96 << 20))

    out = pl.pallas_call(
        functools.partial(_color_jitter_kernel, chunk_rows=chunk_rows,
                          frame_unroll=frame_unroll),
        out_shape=jax.ShapeDtypeStruct((n, 3, R, L), io_dtype),
        grid_spec=pltpu.PrefetchScalarGridSpec(
            num_scalar_prefetch=2,
            grid=(n // f_per_block,),
            in_specs=[pl.BlockSpec((f_per_block, 3, R, L),
                                   lambda i, perm, fac: (i, 0, 0, 0))],
            out_specs=pl.BlockSpec((f_per_block, 3, R, L),
                                   lambda i, perm, fac: (i, 0, 0, 0)),
            scratch_shapes=[pltpu.VMEM((3, R, L), jnp.float32)],
        ),
        compiler_params=pltpu.CompilerParams(
            dimension_semantics=("parallel",),
            vmem_limit_bytes=vmem_limit),
    )(perm, fac, frames)

    out = out.reshape(orig_shape)
    if out.dtype != orig_dtype:
        out = out.astype(orig_dtype)
    return out


def apply_color_jitter_framewise(item, key, s=1.0):
    """Mirror of ApplyColorJitterFrameWise.forward: jitters item['video'] frame-wise."""
    item = dict(item)
    item["video"] = color_jitter_framewise(item["video"], key, s=s)
    return item


if __name__ == "__main__":
    key = jax.random.PRNGKey(0)
    k_data, k_jit = jax.random.split(key)

    # Batched case: (B, T, C, H, W) = (2, 4, 3, 16, 16), values in [0, 1].
    video = jax.random.uniform(k_data, (2, 4, 3, 16, 16), dtype=jnp.float32)
    item = {"video": video}

    out_item = apply_color_jitter_framewise(item, k_jit, s=1.0)
    out = jax.block_until_ready(out_item["video"])
    assert out.shape == video.shape and out.dtype == video.dtype
    assert bool(jnp.all(jnp.isfinite(out)))
    assert bool(jnp.all((out >= 0.0) & (out <= 1.0)))

    # Un-batched case: (T, C, H, W).
    clip_item = {"video": video[0]}
    out_clip = jax.block_until_ready(
        apply_color_jitter_framewise(clip_item, k_jit, s=1.0)["video"]
    )
    assert out_clip.shape == video[0].shape

    # Native bf16 path: no f32 round trip through HBM.
    out_bf16 = jax.block_until_ready(
        apply_color_jitter_framewise({"video": video.astype(jnp.bfloat16)}, k_jit, s=1.0)["video"]
    )
    assert out_bf16.shape == video.shape and out_bf16.dtype == jnp.bfloat16
    assert bool(jnp.all(jnp.isfinite(out_bf16.astype(jnp.float32))))

    print("KERNEL_OK")
</pallas_src>

<mosaic_0001>
module attributes {stable_mosaic.version = 11 : i64} {
  func.func @_color_jitter_kernel(%arg0: i32, %arg1: memref<32xi32, #tpu.memory_space<smem>>, %arg2: memref<32xf32, #tpu.memory_space<smem>>, %arg3: memref<1x3x2x128xf32, #tpu.memory_space<vmem>>, %arg4: memref<1x3x2x128xf32, #tpu.memory_space<vmem>>, %arg5: memref<3x2x128xf32, #tpu.memory_space<vmem>>) attributes {dimension_semantics = [#tpu.dimension_semantics<parallel>], iteration_bounds = array<i64: 8>, scalar_prefetch = 2 : i64, scratch_operands = 1 : i64, tpu.core_type = #tpu.core_type<tc>, window_params = [{transform_indices = @transform_0, window_bounds = array<i64: 1, 3, 2, 128>}, {transform_indices = @transform_1, window_bounds = array<i64: 1, 3, 2, 128>}]} {
    %c0_i32 = arith.constant 0 : i32
    %c1_i32 = arith.constant 1 : i32
    %0 = arith.muli %arg0, %c1_i32 : i32
    %1 = arith.addi %0, %c0_i32 : i32
    %c4_i32 = arith.constant 4 : i32
    %2 = arith.muli %c4_i32, %1 : i32
    %c0_i32_0 = arith.constant 0 : i32
    %3 = arith.addi %2, %c0_i32_0 : i32
    %4 = arith.index_cast %3 : i32 to index
    %5 = memref.load %arg2[%4] : memref<32xf32, #tpu.memory_space<smem>>
    %c1_i32_1 = arith.constant 1 : i32
    %6 = arith.addi %2, %c1_i32_1 : i32
    %7 = arith.index_cast %6 : i32 to index
    %8 = memref.load %arg2[%7] : memref<32xf32, #tpu.memory_space<smem>>
    %c2_i32 = arith.constant 2 : i32
    %9 = arith.addi %2, %c2_i32 : i32
    %10 = arith.index_cast %9 : i32 to index
    %11 = memref.load %arg2[%10] : memref<32xf32, #tpu.memory_space<smem>>
    %c3_i32 = arith.constant 3 : i32
    %12 = arith.addi %2, %c3_i32 : i32
    %13 = arith.index_cast %12 : i32 to index
    %14 = memref.load %arg2[%13] : memref<32xf32, #tpu.memory_space<smem>>
    %15 = arith.index_cast %c0_i32 : i32 to index
    %c0 = arith.constant 0 : index
    %c0_2 = arith.constant 0 : index
    %c0_3 = arith.constant 0 : index
    %16 = vector.load %arg3[%15, %c0, %c0_2, %c0_3] : memref<1x3x2x128xf32, #tpu.memory_space<vmem>>, vector<1x1x2x128xf32>
    %17 = vector.shape_cast %16 : vector<1x1x2x128xf32> to vector<2x128xf32>
    %c0_4 = arith.constant 0 : index
    %c0_5 = arith.constant 0 : index
    %c0_6 = arith.constant 0 : index
    %18 = vector.load %arg5[%c0_4, %c0_5, %c0_6] : memref<3x2x128xf32, #tpu.memory_space<vmem>>, vector<1x2x128xf32>
    %19 = vector.shape_cast %18 : vector<1x2x128xf32> to vector<2x128xf32>
    %20 = vector.shape_cast %17 : vector<2x128xf32> to vector<1x2x128xf32>
    tpu.vector_store %arg5[%c0_4, %c0_5, %c0_6], %20 {strides = array<i32>} : memref<3x2x128xf32, #tpu.memory_space<vmem>>, vector<1x2x128xf32>,
    %21 = arith.index_cast %c0_i32 : i32 to index
    %c1 = arith.constant 1 : index
    %c0_7 = arith.constant 0 : index
    %c0_8 = arith.constant 0 : index
    %22 = vector.load %arg3[%21, %c1, %c0_7, %c0_8] : memref<1x3x2x128xf32, #tpu.memory_space<vmem>>, vector<1x1x2x128xf32>
    %23 = vector.shape_cast %22 : vector<1x1x2x128xf32> to vector<2x128xf32>
    %c1_9 = arith.constant 1 : index
    %c0_10 = arith.constant 0 : index
    %c0_11 = arith.constant 0 : index
    %24 = vector.load %arg5[%c1_9, %c0_10, %c0_11] : memref<3x2x128xf32, #tpu.memory_space<vmem>>, vector<1x2x128xf32>
    %25 = vector.shape_cast %24 : vector<1x2x128xf32> to vector<2x128xf32>
    %26 = vector.shape_cast %23 : vector<2x128xf32> to vector<1x2x128xf32>
    tpu.vector_store %arg5[%c1_9, %c0_10, %c0_11], %26 {strides = array<i32>} : memref<3x2x128xf32, #tpu.memory_space<vmem>>, vector<1x2x128xf32>,
    %27 = arith.index_cast %c0_i32 : i32 to index
    %c2 = arith.constant 2 : index
    %c0_12 = arith.constant 0 : index
    %c0_13 = arith.constant 0 : index
    %28 = vector.load %arg3[%27, %c2, %c0_12, %c0_13] : memref<1x3x2x128xf32, #tpu.memory_space<vmem>>, vector<1x1x2x128xf32>
    %29 = vector.shape_cast %28 : vector<1x1x2x128xf32> to vector<2x128xf32>
    %c2_14 = arith.constant 2 : index
    %c0_15 = arith.constant 0 : index
    %c0_16 = arith.constant 0 : index
    %30 = vector.load %arg5[%c2_14, %c0_15, %c0_16] : memref<3x2x128xf32, #tpu.memory_space<vmem>>, vector<1x2x128xf32>
    %31 = vector.shape_cast %30 : vector<1x2x128xf32> to vector<2x128xf32>
    %32 = vector.shape_cast %29 : vector<2x128xf32> to vector<1x2x128xf32>
    tpu.vector_store %arg5[%c2_14, %c0_15, %c0_16], %32 {strides = array<i32>} : memref<3x2x128xf32, #tpu.memory_space<vmem>>, vector<1x2x128xf32>,
    %c0_i32_17 = arith.constant 0 : i32
    %33 = arith.addi %2, %c0_i32_17 : i32
    %34 = arith.index_cast %33 : i32 to index
    %35 = memref.load %arg1[%34] : memref<32xi32, #tpu.memory_space<smem>>
    %c0_i32_18 = arith.constant 0 : i32
    %36 = arith.cmpi eq, %35, %c0_i32_18 : i32
    %37 = arith.extui %36 : i1 to i32
    %c0_i32_19 = arith.constant 0 : i32
    %38 = arith.cmpi ne, %37, %c0_i32_19 : i32
    scf.if %38 {
      %c0_72 = arith.constant 0 : index
      %c0_73 = arith.constant 0 : index
      %c0_74 = arith.constant 0 : index
      %111 = vector.load %arg5[%c0_72, %c0_73, %c0_74] : memref<3x2x128xf32, #tpu.memory_space<vmem>>, vector<1x2x128xf32>
      %112 = vector.shape_cast %111 : vector<1x2x128xf32> to vector<2x128xf32>
      %113 = vector.broadcast %5 : f32 to vector<2x128xf32>
      %114 = arith.mulf %112, %113 : vector<2x128xf32>
      %cst = arith.constant 0.000000e+00 : f32
      %cst_75 = arith.constant 1.000000e+00 : f32
      %115 = vector.broadcast %cst : f32 to vector<2x128xf32>
      %116 = arith.maximumf %115, %114 : vector<2x128xf32>
      %117 = vector.broadcast %cst_75 : f32 to vector<2x128xf32>
      %118 = arith.minimumf %117, %116 : vector<2x128xf32>
      %c0_76 = arith.constant 0 : index
      %c0_77 = arith.constant 0 : index
      %c0_78 = arith.constant 0 : index
      %119 = vector.load %arg5[%c0_76, %c0_77, %c0_78] : memref<3x2x128xf32, #tpu.memory_space<vmem>>, vector<1x2x128xf32>
      %120 = vector.shape_cast %119 : vector<1x2x128xf32> to vector<2x128xf32>
      %121 = vector.shape_cast %118 : vector<2x128xf32> to vector<1x2x128xf32>
      tpu.vector_store %arg5[%c0_76, %c0_77, %c0_78], %121 {strides = array<i32>} : memref<3x2x128xf32, #tpu.memory_space<vmem>>, vector<1x2x128xf32>,
      %c1_79 = arith.constant 1 : index
      %c0_80 = arith.constant 0 : index
      %c0_81 = arith.constant 0 : index
      %122 = vector.load %arg5[%c1_79, %c0_80, %c0_81] : memref<3x2x128xf32, #tpu.memory_space<vmem>>, vector<1x2x128xf32>
      %123 = vector.shape_cast %122 : vector<1x2x128xf32> to vector<2x128xf32>
      %124 = vector.broadcast %5 : f32 to vector<2x128xf32>
      %125 = arith.mulf %123, %124 : vector<2x128xf32>
      %cst_82 = arith.constant 0.000000e+00 : f32
      %cst_83 = arith.constant 1.000000e+00 : f32
      %126 = vector.broadcast %cst_82 : f32 to vector<2x128xf32>
      %127 = arith.maximumf %126, %125 : vector<2x128xf32>
      %128 = vector.broadcast %cst_83 : f32 to vector<2x128xf32>
      %129 = arith.minimumf %128, %127 : vector<2x128xf32>
      %c1_84 = arith.constant 1 : index
      %c0_85 = arith.constant 0 : index
      %c0_86 = arith.constant 0 : index
      %130 = vector.load %arg5[%c1_84, %c0_85, %c0_86] : memref<3x2x128xf32, #tpu.memory_space<vmem>>, vector<1x2x128xf32>
      %131 = vector.shape_cast %130 : vector<1x2x128xf32> to vector<2x128xf32>
      %132 = vector.shape_cast %129 : vector<2x128xf32> to vector<1x2x128xf32>
      tpu.vector_store %arg5[%c1_84, %c0_85, %c0_86], %132 {strides = array<i32>} : memref<3x2x128xf32, #tpu.memory_space<vmem>>, vector<1x2x128xf32>,
      %c2_87 = arith.constant 2 : index
      %c0_88 = arith.constant 0 : index
      %c0_89 = arith.constant 0 : index
      %133 = vector.load %arg5[%c2_87, %c0_88, %c0_89] : memref<3x2x128xf32, #tpu.memory_space<vmem>>, vector<1x2x128xf32>
      %134 = vector.shape_cast %133 : vector<1x2x128xf32> to vector<2x128xf32>
      %135 = vector.broadcast %5 : f32 to vector<2x128xf32>
      %136 = arith.mulf %134, %135 : vector<2x128xf32>
      %cst_90 = arith.constant 0.000000e+00 : f32
      %cst_91 = arith.constant 1.000000e+00 : f32
      %137 = vector.broadcast %cst_90 : f32 to vector<2x128xf32>
      %138 = arith.maximumf %137, %136 : vector<2x128xf32>
      %139 = vector.broadcast %cst_91 : f32 to vector<2x128xf32>
      %140 = arith.minimumf %139, %138 : vector<2x128xf32>
      %c2_92 = arith.constant 2 : index
      %c0_93 = arith.constant 0 : index
      %c0_94 = arith.constant 0 : index
      %141 = vector.load %arg5[%c2_92, %c0_93, %c0_94] : memref<3x2x128xf32, #tpu.memory_space<vmem>>, vector<1x2x128xf32>
      %142 = vector.shape_cast %141 : vector<1x2x128xf32> to vector<2x128xf32>
      %143 = vector.shape_cast %140 : vector<2x128xf32> to vector<1x2x128xf32>
      tpu.vector_store %arg5[%c2_92, %c0_93, %c0_94], %143 {strides = array<i32>} : memref<3x2x128xf32, #tpu.memory_space<vmem>>, vector<1x2x128xf32>,
    } else {
    }
    %c1_i32_20 = arith.constant 1 : i32
    %39 = arith.cmpi eq, %35, %c1_i32_20 : i32
    %40 = arith.extui %39 : i1 to i32
    %c0_i32_21 = arith.constant 0 : i32
    %41 = arith.cmpi ne, %40, %c0_i32_21 : i32
    scf.if %41 {
      %c0_72 = arith.constant 0 : index
      %c0_73 = arith.constant 0 : index
      %c0_74 = arith.constant 0 : index
      %111 = vector.load %arg5[%c0_72, %c0_73, %c0_74] : memref<3x2x128xf32, #tpu.memory_space<vmem>>, vector<1x2x128xf32>
      %112 = vector.shape_cast %111 : vector<1x2x128xf32> to vector<2x128xf32>
      %c1_75 = arith.constant 1 : index
      %c0_76 = arith.constant 0 : index
      %c0_77 = arith.constant 0 : index
      %113 = vector.load %arg5[%c1_75, %c0_76, %c0_77] : memref<3x2x128xf32, #tpu.memory_space<vmem>>, vector<1x2x128xf32>
      %114 = vector.shape_cast %113 : vector<1x2x128xf32> to vector<2x128xf32>
      %c2_78 = arith.constant 2 : index
      %c0_79 = arith.constant 0 : index
      %c0_80 = arith.constant 0 : index
      %115 = vector.load %arg5[%c2_78, %c0_79, %c0_80] : memref<3x2x128xf32, #tpu.memory_space<vmem>>, vector<1x2x128xf32>
      %116 = vector.shape_cast %115 : vector<1x2x128xf32> to vector<2x128xf32>
      %cst = arith.constant 2.989000e-01 : f32
      %117 = vector.broadcast %cst : f32 to vector<2x128xf32>
      %118 = arith.mulf %117, %112 : vector<2x128xf32>
      %cst_81 = arith.constant 5.870000e-01 : f32
      %119 = vector.broadcast %cst_81 : f32 to vector<2x128xf32>
      %120 = arith.mulf %119, %114 : vector<2x128xf32>
      %121 = arith.addf %118, %120 : vector<2x128xf32>
      %cst_82 = arith.constant 1.140000e-01 : f32
      %122 = vector.broadcast %cst_82 : f32 to vector<2x128xf32>
      %123 = arith.mulf %122, %116 : vector<2x128xf32>
      %124 = arith.addf %121, %123 : vector<2x128xf32>
      %125 = vector.shape_cast %124 : vector<2x128xf32> to vector<1x2x128xf32>
      %cst_83 = arith.constant dense<0.000000e+00> : vector<1xf32>
      %126 = vector.multi_reduction <add>, %125, %cst_83 [1, 2] : vector<1x2x128xf32> to vector<1xf32>
      %127 = vector.shape_cast %126 : vector<1xf32> to vector<1x1x1xf32>
      %128 = vector.extract %127[0, 0, 0] : f32 from vector<1x1x1xf32>
      %cst_84 = arith.constant 3.906250e-03 : f32
      %129 = arith.mulf %128, %cst_84 : f32
      %cst_85 = arith.constant 1.000000e+00 : f32
      %130 = arith.subf %cst_85, %8 : f32
      %131 = arith.mulf %130, %129 : f32
      %c0_86 = arith.constant 0 : index
      %c0_87 = arith.constant 0 : index
      %c0_88 = arith.constant 0 : index
      %132 = vector.load %arg5[%c0_86, %c0_87, %c0_88] : memref<3x2x128xf32, #tpu.memory_space<vmem>>, vector<1x2x128xf32>
      %133 = vector.shape_cast %132 : vector<1x2x128xf32> to vector<2x128xf32>
      %134 = vector.broadcast %8 : f32 to vector<2x128xf32>
      %135 = arith.mulf %134, %133 : vector<2x128xf32>
      %136 = vector.broadcast %131 : f32 to vector<2x128xf32>
      %137 = arith.addf %135, %136 : vector<2x128xf32>
      %cst_89 = arith.constant 0.000000e+00 : f32
      %cst_90 = arith.constant 1.000000e+00 : f32
      %138 = vector.broadcast %cst_89 : f32 to vector<2x128xf32>
      %139 = arith.maximumf %138, %137 : vector<2x128xf32>
      %140 = vector.broadcast %cst_90 : f32 to vector<2x128xf32>
      %141 = arith.minimumf %140, %139 : vector<2x128xf32>
      %c0_91 = arith.constant 0 : index
      %c0_92 = arith.constant 0 : index
      %c0_93 = arith.constant 0 : index
      %142 = vector.load %arg5[%c0_91, %c0_92, %c0_93] : memref<3x2x128xf32, #tpu.memory_space<vmem>>, vector<1x2x128xf32>
      %143 = vector.shape_cast %142 : vector<1x2x128xf32> to vector<2x128xf32>
      %144 = vector.shape_cast %141 : vector<2x128xf32> to vector<1x2x128xf32>
      tpu.vector_store %arg5[%c0_91, %c0_92, %c0_93], %144 {strides = array<i32>} : memref<3x2x128xf32, #tpu.memory_space<vmem>>, vector<1x2x128xf32>,
      %c1_94 = arith.constant 1 : index
      %c0_95 = arith.constant 0 : index
      %c0_96 = arith.constant 0 : index
      %145 = vector.load %arg5[%c1_94, %c0_95, %c0_96] : memref<3x2x128xf32, #tpu.memory_space<vmem>>, vector<1x2x128xf32>
      %146 = vector.shape_cast %145 : vector<1x2x128xf32> to vector<2x128xf32>
      %147 = vector.broadcast %8 : f32 to vector<2x128xf32>
      %148 = arith.mulf %147, %146 : vector<2x128xf32>
      %149 = vector.broadcast %131 : f32 to vector<2x128xf32>
      %150 = arith.addf %148, %149 : vector<2x128xf32>
      %cst_97 = arith.constant 0.000000e+00 : f32
      %cst_98 = arith.constant 1.000000e+00 : f32
      %151 = vector.broadcast %cst_97 : f32 to vector<2x128xf32>
      %152 = arith.maximumf %151, %150 : vector<2x128xf32>
      %153 = vector.broadcast %cst_98 : f32 to vector<2x128xf32>
      %154 = arith.minimumf %153, %152 : vector<2x128xf32>
      %c1_99 = arith.constant 1 : index
      %c0_100 = arith.constant 0 : index
      %c0_101 = arith.constant 0 : index
      %155 = vector.load %arg5[%c1_99, %c0_100, %c0_101] : memref<3x2x128xf32, #tpu.memory_space<vmem>>, vector<1x2x128xf32>
      %156 = vector.shape_cast %155 : vector<1x2x128xf32> to vector<2x128xf32>
      %157 = vector.shape_cast %154 : vector<2x128xf32> to vector<1x2x128xf32>
      tpu.vector_store %arg5[%c1_99, %c0_100, %c0_101], %157 {strides = array<i32>} : memref<3x2x128xf32, #tpu.memory_space<vmem>>, vector<1x2x128xf32>,
      %c2_102 = arith.constant 2 : index
      %c0_103 = arith.constant 0 : index
      %c0_104 = arith.constant 0 : index
      %158 = vector.load %arg5[%c2_102, %c0_103, %c0_104] : memref<3x2x128xf32, #tpu.memory_space<vmem>>, vector<1x2x128xf32>
      %159 = vector.shape_cast %158 : vector<1x2x128xf32> to vector<2x128xf32>
      %160 = vector.broadcast %8 : f32 to vector<2x128xf32>
      %161 = arith.mulf %160, %159 : vector<2x128xf32>
      %162 = vector.broadcast %131 : f32 to vector<2x128xf32>
      %163 = arith.addf %161, %162 : vector<2x128xf32>
      %cst_105 = arith.constant 0.000000e+00 : f32
      %cst_106 = arith.constant 1.000000e+00 : f32
      %164 = vector.broadcast %cst_105 : f32 to vector<2x128xf32>
      %165 = arith.maximumf %164, %163 : vector<2x128xf32>
      %166 = vector.broadcast %cst_106 : f32 to vector<2x128xf32>
      %167 = arith.minimumf %166, %165 : vector<2x128xf32>
      %c2_107 = arith.constant 2 : index
      %c0_108 = arith.constant 0 : index
      %c0_109 = arith.constant 0 : index
      %168 = vector.load %arg5[%c2_107, %c0_108, %c0_109] : memref<3x2x128xf32, #tpu.memory_space<vmem>>, vector<1x2x128xf32>
      %169 = vector.shape_cast %168 : vector<1x2x128xf32> to vector<2x128xf32>
      %170 = vector.shape_cast %167 : vector<2x128xf32> to vector<1x2x128xf32>
      tpu.vector_store %arg5[%c2_107, %c0_108, %c0_109], %170 {strides = array<i32>} : memref<3x2x128xf32, #tpu.memory_space<vmem>>, vector<1x2x128xf32>,
    } else {
    }
    %c2_i32_22 = arith.constant 2 : i32
    %42 = arith.cmpi eq, %35, %c2_i32_22 : i32
    %43 = arith.extui %42 : i1 to i32
    %c0_i32_23 = arith.constant 0 : i32
    %44 = arith.cmpi ne, %43, %c0_i32_23 : i32
    scf.if %44 {
      %cst = arith.constant 1.000000e+00 : f32
      %111 = arith.subf %cst, %11 : f32
      %c0_72 = arith.constant 0 : index
      %c0_73 = arith.constant 0 : index
      %c0_74 = arith.constant 0 : index
      %112 = vector.load %arg5[%c0_72, %c0_73, %c0_74] : memref<3x2x128xf32, #tpu.memory_space<vmem>>, vector<1x2x128xf32>
      %113 = vector.shape_cast %112 : vector<1x2x128xf32> to vector<2x128xf32>
      %c1_75 = arith.constant 1 : index
      %c0_76 = arith.constant 0 : index
      %c0_77 = arith.constant 0 : index
      %114 = vector.load %arg5[%c1_75, %c0_76, %c0_77] : memref<3x2x128xf32, #tpu.memory_space<vmem>>, vector<1x2x128xf32>
      %115 = vector.shape_cast %114 : vector<1x2x128xf32> to vector<2x128xf32>
      %c2_78 = arith.constant 2 : index
      %c0_79 = arith.constant 0 : index
      %c0_80 = arith.constant 0 : index
      %116 = vector.load %arg5[%c2_78, %c0_79, %c0_80] : memref<3x2x128xf32, #tpu.memory_space<vmem>>, vector<1x2x128xf32>
      %117 = vector.shape_cast %116 : vector<1x2x128xf32> to vector<2x128xf32>
      %cst_81 = arith.constant 2.989000e-01 : f32
      %118 = vector.broadcast %cst_81 : f32 to vector<2x128xf32>
      %119 = arith.mulf %118, %113 : vector<2x128xf32>
      %cst_82 = arith.constant 5.870000e-01 : f32
      %120 = vector.broadcast %cst_82 : f32 to vector<2x128xf32>
      %121 = arith.mulf %120, %115 : vector<2x128xf32>
      %122 = arith.addf %119, %121 : vector<2x128xf32>
      %cst_83 = arith.constant 1.140000e-01 : f32
      %123 = vector.broadcast %cst_83 : f32 to vector<2x128xf32>
      %124 = arith.mulf %123, %117 : vector<2x128xf32>
      %125 = arith.addf %122, %124 : vector<2x128xf32>
      %126 = vector.broadcast %111 : f32 to vector<2x128xf32>
      %127 = arith.mulf %126, %125 : vector<2x128xf32>
      %128 = vector.broadcast %11 : f32 to vector<2x128xf32>
      %129 = arith.mulf %128, %113 : vector<2x128xf32>
      %130 = arith.addf %129, %127 : vector<2x128xf32>
      %cst_84 = arith.constant 0.000000e+00 : f32
      %cst_85 = arith.constant 1.000000e+00 : f32
      %131 = vector.broadcast %cst_84 : f32 to vector<2x128xf32>
      %132 = arith.maximumf %131, %130 : vector<2x128xf32>
      %133 = vector.broadcast %cst_85 : f32 to vector<2x128xf32>
      %134 = arith.minimumf %133, %132 : vector<2x128xf32>
      %c0_86 = arith.constant 0 : index
      %c0_87 = arith.constant 0 : index
      %c0_88 = arith.constant 0 : index
      %135 = vector.load %arg5[%c0_86, %c0_87, %c0_88] : memref<3x2x128xf32, #tpu.memory_space<vmem>>, vector<1x2x128xf32>
      %136 = vector.shape_cast %135 : vector<1x2x128xf32> to vector<2x128xf32>
      %137 = vector.shape_cast %134 : vector<2x128xf32> to vector<1x2x128xf32>
      tpu.vector_store %arg5[%c0_86, %c0_87, %c0_88], %137 {strides = array<i32>} : memref<3x2x128xf32, #tpu.memory_space<vmem>>, vector<1x2x128xf32>,
      %138 = vector.broadcast %11 : f32 to vector<2x128xf32>
      %139 = arith.mulf %138, %115 : vector<2x128xf32>
      %140 = arith.addf %139, %127 : vector<2x128xf32>
      %cst_89 = arith.constant 0.000000e+00 : f32
      %cst_90 = arith.constant 1.000000e+00 : f32
      %141 = vector.broadcast %cst_89 : f32 to vector<2x128xf32>
      %142 = arith.maximumf %141, %140 : vector<2x128xf32>
      %143 = vector.broadcast %cst_90 : f32 to vector<2x128xf32>
      %144 = arith.minimumf %143, %142 : vector<2x128xf32>
      %c1_91 = arith.constant 1 : index
      %c0_92 = arith.constant 0 : index
      %c0_93 = arith.constant 0 : index
      %145 = vector.load %arg5[%c1_91, %c0_92, %c0_93] : memref<3x2x128xf32, #tpu.memory_space<vmem>>, vector<1x2x128xf32>
      %146 = vector.shape_cast %145 : vector<1x2x128xf32> to vector<2x128xf32>
      %147 = vector.shape_cast %144 : vector<2x128xf32> to vector<1x2x128xf32>
      tpu.vector_store %arg5[%c1_91, %c0_92, %c0_93], %147 {strides = array<i32>} : memref<3x2x128xf32, #tpu.memory_space<vmem>>, vector<1x2x128xf32>,
      %148 = vector.broadcast %11 : f32 to vector<2x128xf32>
      %149 = arith.mulf %148, %117 : vector<2x128xf32>
      %150 = arith.addf %149, %127 : vector<2x128xf32>
      %cst_94 = arith.constant 0.000000e+00 : f32
      %cst_95 = arith.constant 1.000000e+00 : f32
      %151 = vector.broadcast %cst_94 : f32 to vector<2x128xf32>
      %152 = arith.maximumf %151, %150 : vector<2x128xf32>
      %153 = vector.broadcast %cst_95 : f32 to vector<2x128xf32>
      %154 = arith.minimumf %153, %152 : vector<2x128xf32>
      %c2_96 = arith.constant 2 : index
      %c0_97 = arith.constant 0 : index
      %c0_98 = arith.constant 0 : index
      %155 = vector.load %arg5[%c2_96, %c0_97, %c0_98] : memref<3x2x128xf32, #tpu.memory_space<vmem>>, vector<1x2x128xf32>
      %156 = vector.shape_cast %155 : vector<1x2x128xf32> to vector<2x128xf32>
      %157 = vector.shape_cast %154 : vector<2x128xf32> to vector<1x2x128xf32>
      tpu.vector_store %arg5[%c2_96, %c0_97, %c0_98], %157 {strides = array<i32>} : memref<3x2x128xf32, #tpu.memory_space<vmem>>, vector<1x2x128xf32>,
    } else {
    }
    %c3_i32_24 = arith.constant 3 : i32
    %45 = arith.cmpi eq, %35, %c3_i32_24 : i32
    %46 = arith.extui %45 : i1 to i32
    %c0_i32_25 = arith.constant 0 : i32
    %47 = arith.cmpi ne, %46, %c0_i32_25 : i32
    scf.if %47 {
      %c0_72 = arith.constant 0 : index
      %c0_73 = arith.constant 0 : index
      %c0_74 = arith.constant 0 : index
      %111 = vector.load %arg5[%c0_72, %c0_73, %c0_74] : memref<3x2x128xf32, #tpu.memory_space<vmem>>, vector<1x2x128xf32>
      %112 = vector.shape_cast %111 : vector<1x2x128xf32> to vector<2x128xf32>
      %c1_75 = arith.constant 1 : index
      %c0_76 = arith.constant 0 : index
      %c0_77 = arith.constant 0 : index
      %113 = vector.load %arg5[%c1_75, %c0_76, %c0_77] : memref<3x2x128xf32, #tpu.memory_space<vmem>>, vector<1x2x128xf32>
      %114 = vector.shape_cast %113 : vector<1x2x128xf32> to vector<2x128xf32>
      %c2_78 = arith.constant 2 : index
      %c0_79 = arith.constant 0 : index
      %c0_80 = arith.constant 0 : index
      %115 = vector.load %arg5[%c2_78, %c0_79, %c0_80] : memref<3x2x128xf32, #tpu.memory_space<vmem>>, vector<1x2x128xf32>
      %116 = vector.shape_cast %115 : vector<1x2x128xf32> to vector<2x128xf32>
      %117 = arith.maximumf %112, %114 : vector<2x128xf32>
      %118 = arith.maximumf %117, %116 : vector<2x128xf32>
      %119 = arith.minimumf %112, %114 : vector<2x128xf32>
      %120 = arith.minimumf %119, %116 : vector<2x128xf32>
      %121 = arith.subf %118, %120 : vector<2x128xf32>
      %cst = arith.constant 9.99999968E-21 : f32
      %122 = vector.broadcast %cst : f32 to vector<2x128xf32>
      %123 = arith.maximumf %121, %122 : vector<2x128xf32>
      %124 = tpu.reciprocal %123 {approx = true} : vector<2x128xf32> -> vector<2x128xf32>
      %125 = arith.mulf %123, %124 : vector<2x128xf32>
      %cst_81 = arith.constant 2.000000e+00 : f32
      %126 = vector.broadcast %cst_81 : f32 to vector<2x128xf32>
      %127 = arith.subf %126, %125 : vector<2x128xf32>
      %128 = arith.mulf %124, %127 : vector<2x128xf32>
      %129 = arith.subf %118, %112 : vector<2x128xf32>
      %130 = arith.mulf %129, %128 : vector<2x128xf32>
      %131 = arith.subf %118, %114 : vector<2x128xf32>
      %132 = arith.mulf %131, %128 : vector<2x128xf32>
      %133 = arith.subf %118, %116 : vector<2x128xf32>
      %134 = arith.mulf %133, %128 : vector<2x128xf32>
      %135 = arith.cmpf oeq, %118, %112 : vector<2x128xf32>
      %136 = arith.subf %134, %132 : vector<2x128xf32>
      %137 = arith.cmpf oeq, %118, %114 : vector<2x128xf32>
      %cst_82 = arith.constant 2.000000e+00 : f32
      %138 = vector.broadcast %cst_82 : f32 to vector<2x128xf32>
      %139 = arith.addf %138, %130 : vector<2x128xf32>
      %140 = arith.subf %139, %134 : vector<2x128xf32>
      %cst_83 = arith.constant 4.000000e+00 : f32
      %141 = vector.broadcast %cst_83 : f32 to vector<2x128xf32>
      %142 = arith.addf %141, %132 : vector<2x128xf32>
      %143 = arith.subf %142, %130 : vector<2x128xf32>
      %144 = arith.select %137, %140, %143 : vector<2x128xi1>, vector<2x128xf32>
      %145 = arith.select %135, %136, %144 : vector<2x128xi1>, vector<2x128xf32>
      %cst_84 = arith.constant 0.166666672 : f32
      %146 = vector.broadcast %cst_84 : f32 to vector<2x128xf32>
      %147 = arith.mulf %145, %146 : vector<2x128xf32>
      %148 = vector.broadcast %14 : f32 to vector<2x128xf32>
      %149 = arith.addf %147, %148 : vector<2x128xf32>
      %150 = math.floor %149 : vector<2x128xf32>
      %151 = arith.subf %149, %150 : vector<2x128xf32>
      %cst_85 = arith.constant 6.000000e+00 : f32
      %152 = vector.broadcast %cst_85 : f32 to vector<2x128xf32>
      %153 = arith.mulf %151, %152 : vector<2x128xf32>
      %cst_86 = arith.constant 5.000000e+00 : f32
      %154 = vector.broadcast %cst_86 : f32 to vector<2x128xf32>
      %155 = arith.addf %153, %154 : vector<2x128xf32>
      %cst_87 = arith.constant 6.000000e+00 : f32
      %156 = vector.broadcast %cst_87 : f32 to vector<2x128xf32>
      %157 = arith.cmpf oge, %155, %156 : vector<2x128xf32>
      %cst_88 = arith.constant 6.000000e+00 : f32
      %158 = vector.broadcast %cst_88 : f32 to vector<2x128xf32>
      %159 = arith.subf %155, %158 : vector<2x128xf32>
      %160 = arith.select %157, %159, %155 : vector<2x128xi1>, vector<2x128xf32>
      %cst_89 = arith.constant 4.000000e+00 : f32
      %161 = vector.broadcast %cst_89 : f32 to vector<2x128xf32>
      %162 = arith.subf %161, %160 : vector<2x128xf32>
      %163 = arith.minimumf %160, %162 : vector<2x128xf32>
      %cst_90 = arith.constant 0.000000e+00 : f32
      %cst_91 = arith.constant 1.000000e+00 : f32
      %164 = vector.broadcast %cst_90 : f32 to vector<2x128xf32>
      %165 = arith.maximumf %164, %163 : vector<2x128xf32>
      %166 = vector.broadcast %cst_91 : f32 to vector<2x128xf32>
      %167 = arith.minimumf %166, %165 : vector<2x128xf32>
      %168 = arith.mulf %121, %167 : vector<2x128xf32>
      %169 = arith.subf %118, %168 : vector<2x128xf32>
      %c0_92 = arith.constant 0 : index
      %c0_93 = arith.constant 0 : index
      %c0_94 = arith.constant 0 : index
      %170 = vector.load %arg5[%c0_92, %c0_93, %c0_94] : memref<3x2x128xf32, #tpu.memory_space<vmem>>, vector<1x2x128xf32>
      %171 = vector.shape_cast %170 : vector<1x2x128xf32> to vector<2x128xf32>
      %172 = vector.shape_cast %169 : vector<2x128xf32> to vector<1x2x128xf32>
      tpu.vector_store %arg5[%c0_92, %c0_93, %c0_94], %172 {strides = array<i32>} : memref<3x2x128xf32, #tpu.memory_space<vmem>>, vector<1x2x128xf32>,
      %cst_95 = arith.constant 3.000000e+00 : f32
      %173 = vector.broadcast %cst_95 : f32 to vector<2x128xf32>
      %174 = arith.addf %153, %173 : vector<2x128xf32>
      %cst_96 = arith.constant 6.000000e+00 : f32
      %175 = vector.broadcast %cst_96 : f32 to vector<2x128xf32>
      %176 = arith.cmpf oge, %174, %175 : vector<2x128xf32>
      %cst_97 = arith.constant 6.000000e+00 : f32
      %177 = vector.broadcast %cst_97 : f32 to vector<2x128xf32>
      %178 = arith.subf %174, %177 : vector<2x128xf32>
      %179 = arith.select %176, %178, %174 : vector<2x128xi1>, vector<2x128xf32>
      %cst_98 = arith.constant 4.000000e+00 : f32
      %180 = vector.broadcast %cst_98 : f32 to vector<2x128xf32>
      %181 = arith.subf %180, %179 : vector<2x128xf32>
      %182 = arith.minimumf %179, %181 : vector<2x128xf32>
      %cst_99 = arith.constant 0.000000e+00 : f32
      %cst_100 = arith.constant 1.000000e+00 : f32
      %183 = vector.broadcast %cst_99 : f32 to vector<2x128xf32>
      %184 = arith.maximumf %183, %182 : vector<2x128xf32>
      %185 = vector.broadcast %cst_100 : f32 to vector<2x128xf32>
      %186 = arith.minimumf %185, %184 : vector<2x128xf32>
      %187 = arith.mulf %121, %186 : vector<2x128xf32>
      %188 = arith.subf %118, %187 : vector<2x128xf32>
      %c1_101 = arith.constant 1 : index
      %c0_102 = arith.constant 0 : index
      %c0_103 = arith.constant 0 : index
      %189 = vector.load %arg5[%c1_101, %c0_102, %c0_103] : memref<3x2x128xf32, #tpu.memory_space<vmem>>, vector<1x2x128xf32>
      %190 = vector.shape_cast %189 : vector<1x2x128xf32> to vector<2x128xf32>
      %191 = vector.shape_cast %188 : vector<2x128xf32> to vector<1x2x128xf32>
      tpu.vector_store %arg5[%c1_101, %c0_102, %c0_103], %191 {strides = array<i32>} : memref<3x2x128xf32, #tpu.memory_space<vmem>>, vector<1x2x128xf32>,
      %cst_104 = arith.constant 1.000000e+00 : f32
      %192 = vector.broadcast %cst_104 : f32 to vector<2x128xf32>
      %193 = arith.addf %153, %192 : vector<2x128xf32>
      %cst_105 = arith.constant 6.000000e+00 : f32
      %194 = vector.broadcast %cst_105 : f32 to vector<2x128xf32>
      %195 = arith.cmpf oge, %193, %194 : vector<2x128xf32>
      %cst_106 = arith.constant 6.000000e+00 : f32
      %196 = vector.broadcast %cst_106 : f32 to vector<2x128xf32>
      %197 = arith.subf %193, %196 : vector<2x128xf32>
      %198 = arith.select %195, %197, %193 : vector<2x128xi1>, vector<2x128xf32>
      %cst_107 = arith.constant 4.000000e+00 : f32
      %199 = vector.broadcast %cst_107 : f32 to vector<2x128xf32>
      %200 = arith.subf %199, %198 : vector<2x128xf32>
      %201 = arith.minimumf %198, %200 : vector<2x128xf32>
      %cst_108 = arith.constant 0.000000e+00 : f32
      %cst_109 = arith.constant 1.000000e+00 : f32
      %202 = vector.broadcast %cst_108 : f32 to vector<2x128xf32>
      %203 = arith.maximumf %202, %201 : vector<2x128xf32>
      %204 = vector.broadcast %cst_109 : f32 to vector<2x128xf32>
      %205 = arith.minimumf %204, %203 : vector<2x128xf32>
      %206 = arith.mulf %121, %205 : vector<2x128xf32>
      %207 = arith.subf %118, %206 : vector<2x128xf32>
      %c2_110 = arith.constant 2 : index
      %c0_111 = arith.constant 0 : index
      %c0_112 = arith.constant 0 : index
      %208 = vector.load %arg5[%c2_110, %c0_111, %c0_112] : memref<3x2x128xf32, #tpu.memory_space<vmem>>, vector<1x2x128xf32>
      %209 = vector.shape_cast %208 : vector<1x2x128xf32> to vector<2x128xf32>
      %210 = vector.shape_cast %207 : vector<2x128xf32> to vector<1x2x128xf32>
      tpu.vector_store %arg5[%c2_110, %c0_111, %c0_112], %210 {strides = array<i32>} : memref<3x2x128xf32, #tpu.memory_space<vmem>>, vector<1x2x128xf32>,
    } else {
    }
    %c1_i32_26 = arith.constant 1 : i32
    %48 = arith.addi %2, %c1_i32_26 : i32
    %49 = arith.index_cast %48 : i32 to index
    %50 = memref.load %arg1[%49] : memref<32xi32, #tpu.memory_space<smem>>
    %c0_i32_27 = arith.constant 0 : i32
    %51 = arith.cmpi eq, %50, %c0_i32_27 : i32
    %52 = arith.extui %51 : i1 to i32
    %c0_i32_28 = arith.constant 0 : i32
    %53 = arith.cmpi ne, %52, %c0_i32_28 : i32
    scf.if %53 {
      %c0_72 = arith.constant 0 : index
      %c0_73 = arith.constant 0 : index
      %c0_74 = arith.constant 0 : index
      %111 = vector.load %arg5[%c0_72, %c0_73, %c0_74] : memref<3x2x128xf32, #tpu.memory_space<vmem>>, vector<1x2x128xf32>
      %112 = vector.shape_cast %111 : vector<1x2x128xf32> to vector<2x128xf32>
      %113 = vector.broadcast %5 : f32 to vector<2x128xf32>
      %114 = arith.mulf %112, %113 : vector<2x128xf32>
      %cst = arith.constant 0.000000e+00 : f32
      %cst_75 = arith.constant 1.000000e+00 : f32
      %115 = vector.broadcast %cst : f32 to vector<2x128xf32>
      %116 = arith.maximumf %115, %114 : vector<2x128xf32>
      %117 = vector.broadcast %cst_75 : f32 to vector<2x128xf32>
      %118 = arith.minimumf %117, %116 : vector<2x128xf32>
      %c0_76 = arith.constant 0 : index
      %c0_77 = arith.constant 0 : index
      %c0_78 = arith.constant 0 : index
      %119 = vector.load %arg5[%c0_76, %c0_77, %c0_78] : memref<3x2x128xf32, #tpu.memory_space<vmem>>, vector<1x2x128xf32>
      %120 = vector.shape_cast %119 : vector<1x2x128xf32> to vector<2x128xf32>
      %121 = vector.shape_cast %118 : vector<2x128xf32> to vector<1x2x128xf32>
      tpu.vector_store %arg5[%c0_76, %c0_77, %c0_78], %121 {strides = array<i32>} : memref<3x2x128xf32, #tpu.memory_space<vmem>>, vector<1x2x128xf32>,
      %c1_79 = arith.constant 1 : index
      %c0_80 = arith.constant 0 : index
      %c0_81 = arith.constant 0 : index
      %122 = vector.load %arg5[%c1_79, %c0_80, %c0_81] : memref<3x2x128xf32, #tpu.memory_space<vmem>>, vector<1x2x128xf32>
      %123 = vector.shape_cast %122 : vector<1x2x128xf32> to vector<2x128xf32>
      %124 = vector.broadcast %5 : f32 to vector<2x128xf32>
      %125 = arith.mulf %123, %124 : vector<2x128xf32>
      %cst_82 = arith.constant 0.000000e+00 : f32
      %cst_83 = arith.constant 1.000000e+00 : f32
      %126 = vector.broadcast %cst_82 : f32 to vector<2x128xf32>
      %127 = arith.maximumf %126, %125 : vector<2x128xf32>
      %128 = vector.broadcast %cst_83 : f32 to vector<2x128xf32>
      %129 = arith.minimumf %128, %127 : vector<2x128xf32>
      %c1_84 = arith.constant 1 : index
      %c0_85 = arith.constant 0 : index
      %c0_86 = arith.constant 0 : index
      %130 = vector.load %arg5[%c1_84, %c0_85, %c0_86] : memref<3x2x128xf32, #tpu.memory_space<vmem>>, vector<1x2x128xf32>
      %131 = vector.shape_cast %130 : vector<1x2x128xf32> to vector<2x128xf32>
      %132 = vector.shape_cast %129 : vector<2x128xf32> to vector<1x2x128xf32>
      tpu.vector_store %arg5[%c1_84, %c0_85, %c0_86], %132 {strides = array<i32>} : memref<3x2x128xf32, #tpu.memory_space<vmem>>, vector<1x2x128xf32>,
      %c2_87 = arith.constant 2 : index
      %c0_88 = arith.constant 0 : index
      %c0_89 = arith.constant 0 : index
      %133 = vector.load %arg5[%c2_87, %c0_88, %c0_89] : memref<3x2x128xf32, #tpu.memory_space<vmem>>, vector<1x2x128xf32>
      %134 = vector.shape_cast %133 : vector<1x2x128xf32> to vector<2x128xf32>
      %135 = vector.broadcast %5 : f32 to vector<2x128xf32>
      %136 = arith.mulf %134, %135 : vector<2x128xf32>
      %cst_90 = arith.constant 0.000000e+00 : f32
      %cst_91 = arith.constant 1.000000e+00 : f32
      %137 = vector.broadcast %cst_90 : f32 to vector<2x128xf32>
      %138 = arith.maximumf %137, %136 : vector<2x128xf32>
      %139 = vector.broadcast %cst_91 : f32 to vector<2x128xf32>
      %140 = arith.minimumf %139, %138 : vector<2x128xf32>
      %c2_92 = arith.constant 2 : index
      %c0_93 = arith.constant 0 : index
      %c0_94 = arith.constant 0 : index
      %141 = vector.load %arg5[%c2_92, %c0_93, %c0_94] : memref<3x2x128xf32, #tpu.memory_space<vmem>>, vector<1x2x128xf32>
      %142 = vector.shape_cast %141 : vector<1x2x128xf32> to vector<2x128xf32>
      %143 = vector.shape_cast %140 : vector<2x128xf32> to vector<1x2x128xf32>
      tpu.vector_store %arg5[%c2_92, %c0_93, %c0_94], %143 {strides = array<i32>} : memref<3x2x128xf32, #tpu.memory_space<vmem>>, vector<1x2x128xf32>,
    } else {
    }
    %c1_i32_29 = arith.constant 1 : i32
    %54 = arith.cmpi eq, %50, %c1_i32_29 : i32
    %55 = arith.extui %54 : i1 to i32
    %c0_i32_30 = arith.constant 0 : i32
    %56 = arith.cmpi ne, %55, %c0_i32_30 : i32
    scf.if %56 {
      %c0_72 = arith.constant 0 : index
      %c0_73 = arith.constant 0 : index
      %c0_74 = arith.constant 0 : index
      %111 = vector.load %arg5[%c0_72, %c0_73, %c0_74] : memref<3x2x128xf32, #tpu.memory_space<vmem>>, vector<1x2x128xf32>
      %112 = vector.shape_cast %111 : vector<1x2x128xf32> to vector<2x128xf32>
      %c1_75 = arith.constant 1 : index
      %c0_76 = arith.constant 0 : index
      %c0_77 = arith.constant 0 : index
      %113 = vector.load %arg5[%c1_75, %c0_76, %c0_77] : memref<3x2x128xf32, #tpu.memory_space<vmem>>, vector<1x2x128xf32>
      %114 = vector.shape_cast %113 : vector<1x2x128xf32> to vector<2x128xf32>
      %c2_78 = arith.constant 2 : index
      %c0_79 = arith.constant 0 : index
      %c0_80 = arith.constant 0 : index
      %115 = vector.load %arg5[%c2_78, %c0_79, %c0_80] : memref<3x2x128xf32, #tpu.memory_space<vmem>>, vector<1x2x128xf32>
      %116 = vector.shape_cast %115 : vector<1x2x128xf32> to vector<2x128xf32>
      %cst = arith.constant 2.989000e-01 : f32
      %117 = vector.broadcast %cst : f32 to vector<2x128xf32>
      %118 = arith.mulf %117, %112 : vector<2x128xf32>
      %cst_81 = arith.constant 5.870000e-01 : f32
      %119 = vector.broadcast %cst_81 : f32 to vector<2x128xf32>
      %120 = arith.mulf %119, %114 : vector<2x128xf32>
      %121 = arith.addf %118, %120 : vector<2x128xf32>
      %cst_82 = arith.constant 1.140000e-01 : f32
      %122 = vector.broadcast %cst_82 : f32 to vector<2x128xf32>
      %123 = arith.mulf %122, %116 : vector<2x128xf32>
      %124 = arith.addf %121, %123 : vector<2x128xf32>
      %125 = vector.shape_cast %124 : vector<2x128xf32> to vector<1x2x128xf32>
      %cst_83 = arith.constant dense<0.000000e+00> : vector<1xf32>
      %126 = vector.multi_reduction <add>, %125, %cst_83 [1, 2] : vector<1x2x128xf32> to vector<1xf32>
      %127 = vector.shape_cast %126 : vector<1xf32> to vector<1x1x1xf32>
      %128 = vector.extract %127[0, 0, 0] : f32 from vector<1x1x1xf32>
      %cst_84 = arith.constant 3.906250e-03 : f32
      %129 = arith.mulf %128, %cst_84 : f32
      %cst_85 = arith.constant 1.000000e+00 : f32
      %130 = arith.subf %cst_85, %8 : f32
      %131 = arith.mulf %130, %129 : f32
      %c0_86 = arith.constant 0 : index
      %c0_87 = arith.constant 0 : index
      %c0_88 = arith.constant 0 : index
      %132 = vector.load %arg5[%c0_86, %c0_87, %c0_88] : memref<3x2x128xf32, #tpu.memory_space<vmem>>, vector<1x2x128xf32>
      %133 = vector.shape_cast %132 : vector<1x2x128xf32> to vector<2x128xf32>
      %134 = vector.broadcast %8 : f32 to vector<2x128xf32>
      %135 = arith.mulf %134, %133 : vector<2x128xf32>
      %136 = vector.broadcast %131 : f32 to vector<2x128xf32>
      %137 = arith.addf %135, %136 : vector<2x128xf32>
      %cst_89 = arith.constant 0.000000e+00 : f32
      %cst_90 = arith.constant 1.000000e+00 : f32
      %138 = vector.broadcast %cst_89 : f32 to vector<2x128xf32>
      %139 = arith.maximumf %138, %137 : vector<2x128xf32>
      %140 = vector.broadcast %cst_90 : f32 to vector<2x128xf32>
      %141 = arith.minimumf %140, %139 : vector<2x128xf32>
      %c0_91 = arith.constant 0 : index
      %c0_92 = arith.constant 0 : index
      %c0_93 = arith.constant 0 : index
      %142 = vector.load %arg5[%c0_91, %c0_92, %c0_93] : memref<3x2x128xf32, #tpu.memory_space<vmem>>, vector<1x2x128xf32>
      %143 = vector.shape_cast %142 : vector<1x2x128xf32> to vector<2x128xf32>
      %144 = vector.shape_cast %141 : vector<2x128xf32> to vector<1x2x128xf32>
      tpu.vector_store %arg5[%c0_91, %c0_92, %c0_93], %144 {strides = array<i32>} : memref<3x2x128xf32, #tpu.memory_space<vmem>>, vector<1x2x128xf32>,
      %c1_94 = arith.constant 1 : index
      %c0_95 = arith.constant 0 : index
      %c0_96 = arith.constant 0 : index
      %145 = vector.load %arg5[%c1_94, %c0_95, %c0_96] : memref<3x2x128xf32, #tpu.memory_space<vmem>>, vector<1x2x128xf32>
      %146 = vector.shape_cast %145 : vector<1x2x128xf32> to vector<2x128xf32>
      %147 = vector.broadcast %8 : f32 to vector<2x128xf32>
      %148 = arith.mulf %147, %146 : vector<2x128xf32>
      %149 = vector.broadcast %131 : f32 to vector<2x128xf32>
      %150 = arith.addf %148, %149 : vector<2x128xf32>
      %cst_97 = arith.constant 0.000000e+00 : f32
      %cst_98 = arith.constant 1.000000e+00 : f32
      %151 = vector.broadcast %cst_97 : f32 to vector<2x128xf32>
      %152 = arith.maximumf %151, %150 : vector<2x128xf32>
      %153 = vector.broadcast %cst_98 : f32 to vector<2x128xf32>
      %154 = arith.minimumf %153, %152 : vector<2x128xf32>
      %c1_99 = arith.constant 1 : index
      %c0_100 = arith.constant 0 : index
      %c0_101 = arith.constant 0 : index
      %155 = vector.load %arg5[%c1_99, %c0_100, %c0_101] : memref<3x2x128xf32, #tpu.memory_space<vmem>>, vector<1x2x128xf32>
      %156 = vector.shape_cast %155 : vector<1x2x128xf32> to vector<2x128xf32>
      %157 = vector.shape_cast %154 : vector<2x128xf32> to vector<1x2x128xf32>
      tpu.vector_store %arg5[%c1_99, %c0_100, %c0_101], %157 {strides = array<i32>} : memref<3x2x128xf32, #tpu.memory_space<vmem>>, vector<1x2x128xf32>,
      %c2_102 = arith.constant 2 : index
      %c0_103 = arith.constant 0 : index
      %c0_104 = arith.constant 0 : index
      %158 = vector.load %arg5[%c2_102, %c0_103, %c0_104] : memref<3x2x128xf32, #tpu.memory_space<vmem>>, vector<1x2x128xf32>
      %159 = vector.shape_cast %158 : vector<1x2x128xf32> to vector<2x128xf32>
      %160 = vector.broadcast %8 : f32 to vector<2x128xf32>
      %161 = arith.mulf %160, %159 : vector<2x128xf32>
      %162 = vector.broadcast %131 : f32 to vector<2x128xf32>
      %163 = arith.addf %161, %162 : vector<2x128xf32>
      %cst_105 = arith.constant 0.000000e+00 : f32
      %cst_106 = arith.constant 1.000000e+00 : f32
      %164 = vector.broadcast %cst_105 : f32 to vector<2x128xf32>
      %165 = arith.maximumf %164, %163 : vector<2x128xf32>
      %166 = vector.broadcast %cst_106 : f32 to vector<2x128xf32>
      %167 = arith.minimumf %166, %165 : vector<2x128xf32>
      %c2_107 = arith.constant 2 : index
      %c0_108 = arith.constant 0 : index
      %c0_109 = arith.constant 0 : index
      %168 = vector.load %arg5[%c2_107, %c0_108, %c0_109] : memref<3x2x128xf32, #tpu.memory_space<vmem>>, vector<1x2x128xf32>
      %169 = vector.shape_cast %168 : vector<1x2x128xf32> to vector<2x128xf32>
      %170 = vector.shape_cast %167 : vector<2x128xf32> to vector<1x2x128xf32>
      tpu.vector_store %arg5[%c2_107, %c0_108, %c0_109], %170 {strides = array<i32>} : memref<3x2x128xf32, #tpu.memory_space<vmem>>, vector<1x2x128xf32>,
    } else {
    }
    %c2_i32_31 = arith.constant 2 : i32
    %57 = arith.cmpi eq, %50, %c2_i32_31 : i32
    %58 = arith.extui %57 : i1 to i32
    %c0_i32_32 = arith.constant 0 : i32
    %59 = arith.cmpi ne, %58, %c0_i32_32 : i32
    scf.if %59 {
      %cst = arith.constant 1.000000e+00 : f32
      %111 = arith.subf %cst, %11 : f32
      %c0_72 = arith.constant 0 : index
      %c0_73 = arith.constant 0 : index
      %c0_74 = arith.constant 0 : index
      %112 = vector.load %arg5[%c0_72, %c0_73, %c0_74] : memref<3x2x128xf32, #tpu.memory_space<vmem>>, vector<1x2x128xf32>
      %113 = vector.shape_cast %112 : vector<1x2x128xf32> to vector<2x128xf32>
      %c1_75 = arith.constant 1 : index
      %c0_76 = arith.constant 0 : index
      %c0_77 = arith.constant 0 : index
      %114 = vector.load %arg5[%c1_75, %c0_76, %c0_77] : memref<3x2x128xf32, #tpu.memory_space<vmem>>, vector<1x2x128xf32>
      %115 = vector.shape_cast %114 : vector<1x2x128xf32> to vector<2x128xf32>
      %c2_78 = arith.constant 2 : index
      %c0_79 = arith.constant 0 : index
      %c0_80 = arith.constant 0 : index
      %116 = vector.load %arg5[%c2_78, %c0_79, %c0_80] : memref<3x2x128xf32, #tpu.memory_space<vmem>>, vector<1x2x128xf32>
      %117 = vector.shape_cast %116 : vector<1x2x128xf32> to vector<2x128xf32>
      %cst_81 = arith.constant 2.989000e-01 : f32
      %118 = vector.broadcast %cst_81 : f32 to vector<2x128xf32>
      %119 = arith.mulf %118, %113 : vector<2x128xf32>
      %cst_82 = arith.constant 5.870000e-01 : f32
      %120 = vector.broadcast %cst_82 : f32 to vector<2x128xf32>
      %121 = arith.mulf %120, %115 : vector<2x128xf32>
      %122 = arith.addf %119, %121 : vector<2x128xf32>
      %cst_83 = arith.constant 1.140000e-01 : f32
      %123 = vector.broadcast %cst_83 : f32 to vector<2x128xf32>
      %124 = arith.mulf %123, %117 : vector<2x128xf32>
      %125 = arith.addf %122, %124 : vector<2x128xf32>
      %126 = vector.broadcast %111 : f32 to vector<2x128xf32>
      %127 = arith.mulf %126, %125 : vector<2x128xf32>
      %128 = vector.broadcast %11 : f32 to vector<2x128xf32>
      %129 = arith.mulf %128, %113 : vector<2x128xf32>
      %130 = arith.addf %129, %127 : vector<2x128xf32>
      %cst_84 = arith.constant 0.000000e+00 : f32
      %cst_85 = arith.constant 1.000000e+00 : f32
      %131 = vector.broadcast %cst_84 : f32 to vector<2x128xf32>
      %132 = arith.maximumf %131, %130 : vector<2x128xf32>
      %133 = vector.broadcast %cst_85 : f32 to vector<2x128xf32>
      %134 = arith.minimumf %133, %132 : vector<2x128xf32>
      %c0_86 = arith.constant 0 : index
      %c0_87 = arith.constant 0 : index
      %c0_88 = arith.constant 0 : index
      %135 = vector.load %arg5[%c0_86, %c0_87, %c0_88] : memref<3x2x128xf32, #tpu.memory_space<vmem>>, vector<1x2x128xf32>
      %136 = vector.shape_cast %135 : vector<1x2x128xf32> to vector<2x128xf32>
      %137 = vector.shape_cast %134 : vector<2x128xf32> to vector<1x2x128xf32>
      tpu.vector_store %arg5[%c0_86, %c0_87, %c0_88], %137 {strides = array<i32>} : memref<3x2x128xf32, #tpu.memory_space<vmem>>, vector<1x2x128xf32>,
      %138 = vector.broadcast %11 : f32 to vector<2x128xf32>
      %139 = arith.mulf %138, %115 : vector<2x128xf32>
      %140 = arith.addf %139, %127 : vector<2x128xf32>
      %cst_89 = arith.constant 0.000000e+00 : f32
      %cst_90 = arith.constant 1.000000e+00 : f32
      %141 = vector.broadcast %cst_89 : f32 to vector<2x128xf32>
      %142 = arith.maximumf %141, %140 : vector<2x128xf32>
      %143 = vector.broadcast %cst_90 : f32 to vector<2x128xf32>
      %144 = arith.minimumf %143, %142 : vector<2x128xf32>
      %c1_91 = arith.constant 1 : index
      %c0_92 = arith.constant 0 : index
      %c0_93 = arith.constant 0 : index
      %145 = vector.load %arg5[%c1_91, %c0_92, %c0_93] : memref<3x2x128xf32, #tpu.memory_space<vmem>>, vector<1x2x128xf32>
      %146 = vector.shape_cast %145 : vector<1x2x128xf32> to vector<2x128xf32>
      %147 = vector.shape_cast %144 : vector<2x128xf32> to vector<1x2x128xf32>
      tpu.vector_store %arg5[%c1_91, %c0_92, %c0_93], %147 {strides = array<i32>} : memref<3x2x128xf32, #tpu.memory_space<vmem>>, vector<1x2x128xf32>,
      %148 = vector.broadcast %11 : f32 to vector<2x128xf32>
      %149 = arith.mulf %148, %117 : vector<2x128xf32>
      %150 = arith.addf %149, %127 : vector<2x128xf32>
      %cst_94 = arith.constant 0.000000e+00 : f32
      %cst_95 = arith.constant 1.000000e+00 : f32
      %151 = vector.broadcast %cst_94 : f32 to vector<2x128xf32>
      %152 = arith.maximumf %151, %150 : vector<2x128xf32>
      %153 = vector.broadcast %cst_95 : f32 to vector<2x128xf32>
      %154 = arith.minimumf %153, %152 : vector<2x128xf32>
      %c2_96 = arith.constant 2 : index
      %c0_97 = arith.constant 0 : index
      %c0_98 = arith.constant 0 : index
      %155 = vector.load %arg5[%c2_96, %c0_97, %c0_98] : memref<3x2x128xf32, #tpu.memory_space<vmem>>, vector<1x2x128xf32>
      %156 = vector.shape_cast %155 : vector<1x2x128xf32> to vector<2x128xf32>
      %157 = vector.shape_cast %154 : vector<2x128xf32> to vector<1x2x128xf32>
      tpu.vector_store %arg5[%c2_96, %c0_97, %c0_98], %157 {strides = array<i32>} : memref<3x2x128xf32, #tpu.memory_space<vmem>>, vector<1x2x128xf32>,
    } else {
    }
    %c3_i32_33 = arith.constant 3 : i32
    %60 = arith.cmpi eq, %50, %c3_i32_33 : i32
    %61 = arith.extui %60 : i1 to i32
    %c0_i32_34 = arith.constant 0 : i32
    %62 = arith.cmpi ne, %61, %c0_i32_34 : i32
    scf.if %62 {
      %c0_72 = arith.constant 0 : index
      %c0_73 = arith.constant 0 : index
      %c0_74 = arith.constant 0 : index
      %111 = vector.load %arg5[%c0_72, %c0_73, %c0_74] : memref<3x2x128xf32, #tpu.memory_space<vmem>>, vector<1x2x128xf32>
      %112 = vector.shape_cast %111 : vector<1x2x128xf32> to vector<2x128xf32>
      %c1_75 = arith.constant 1 : index
      %c0_76 = arith.constant 0 : index
      %c0_77 = arith.constant 0 : index
      %113 = vector.load %arg5[%c1_75, %c0_76, %c0_77] : memref<3x2x128xf32, #tpu.memory_space<vmem>>, vector<1x2x128xf32>
      %114 = vector.shape_cast %113 : vector<1x2x128xf32> to vector<2x128xf32>
      %c2_78 = arith.constant 2 : index
      %c0_79 = arith.constant 0 : index
      %c0_80 = arith.constant 0 : index
      %115 = vector.load %arg5[%c2_78, %c0_79, %c0_80] : memref<3x2x128xf32, #tpu.memory_space<vmem>>, vector<1x2x128xf32>
      %116 = vector.shape_cast %115 : vector<1x2x128xf32> to vector<2x128xf32>
      %117 = arith.maximumf %112, %114 : vector<2x128xf32>
      %118 = arith.maximumf %117, %116 : vector<2x128xf32>
      %119 = arith.minimumf %112, %114 : vector<2x128xf32>
      %120 = arith.minimumf %119, %116 : vector<2x128xf32>
      %121 = arith.subf %118, %120 : vector<2x128xf32>
      %cst = arith.constant 9.99999968E-21 : f32
      %122 = vector.broadcast %cst : f32 to vector<2x128xf32>
      %123 = arith.maximumf %121, %122 : vector<2x128xf32>
      %124 = tpu.reciprocal %123 {approx = true} : vector<2x128xf32> -> vector<2x128xf32>
      %125 = arith.mulf %123, %124 : vector<2x128xf32>
      %cst_81 = arith.constant 2.000000e+00 : f32
      %126 = vector.broadcast %cst_81 : f32 to vector<2x128xf32>
      %127 = arith.subf %126, %125 : vector<2x128xf32>
      %128 = arith.mulf %124, %127 : vector<2x128xf32>
      %129 = arith.subf %118, %112 : vector<2x128xf32>
      %130 = arith.mulf %129, %128 : vector<2x128xf32>
      %131 = arith.subf %118, %114 : vector<2x128xf32>
      %132 = arith.mulf %131, %128 : vector<2x128xf32>
      %133 = arith.subf %118, %116 : vector<2x128xf32>
      %134 = arith.mulf %133, %128 : vector<2x128xf32>
      %135 = arith.cmpf oeq, %118, %112 : vector<2x128xf32>
      %136 = arith.subf %134, %132 : vector<2x128xf32>
      %137 = arith.cmpf oeq, %118, %114 : vector<2x128xf32>
      %cst_82 = arith.constant 2.000000e+00 : f32
      %138 = vector.broadcast %cst_82 : f32 to vector<2x128xf32>
      %139 = arith.addf %138, %130 : vector<2x128xf32>
      %140 = arith.subf %139, %134 : vector<2x128xf32>
      %cst_83 = arith.constant 4.000000e+00 : f32
      %141 = vector.broadcast %cst_83 : f32 to vector<2x128xf32>
      %142 = arith.addf %141, %132 : vector<2x128xf32>
      %143 = arith.subf %142, %130 : vector<2x128xf32>
      %144 = arith.select %137, %140, %143 : vector<2x128xi1>, vector<2x128xf32>
      %145 = arith.select %135, %136, %144 : vector<2x128xi1>, vector<2x128xf32>
      %cst_84 = arith.constant 0.166666672 : f32
      %146 = vector.broadcast %cst_84 : f32 to vector<2x128xf32>
      %147 = arith.mulf %145, %146 : vector<2x128xf32>
      %148 = vector.broadcast %14 : f32 to vector<2x128xf32>
      %149 = arith.addf %147, %148 : vector<2x128xf32>
      %150 = math.floor %149 : vector<2x128xf32>
      %151 = arith.subf %149, %150 : vector<2x128xf32>
      %cst_85 = arith.constant 6.000000e+00 : f32
      %152 = vector.broadcast %cst_85 : f32 to vector<2x128xf32>
      %153 = arith.mulf %151, %152 : vector<2x128xf32>
      %cst_86 = arith.constant 5.000000e+00 : f32
      %154 = vector.broadcast %cst_86 : f32 to vector<2x128xf32>
      %155 = arith.addf %153, %154 : vector<2x128xf32>
      %cst_87 = arith.constant 6.000000e+00 : f32
      %156 = vector.broadcast %cst_87 : f32 to vector<2x128xf32>
      %157 = arith.cmpf oge, %155, %156 : vector<2x128xf32>
      %cst_88 = arith.constant 6.000000e+00 : f32
      %158 = vector.broadcast %cst_88 : f32 to vector<2x128xf32>
      %159 = arith.subf %155, %158 : vector<2x128xf32>
      %160 = arith.select %157, %159, %155 : vector<2x128xi1>, vector<2x128xf32>
      %cst_89 = arith.constant 4.000000e+00 : f32
      %161 = vector.broadcast %cst_89 : f32 to vector<2x128xf32>
      %162 = arith.subf %161, %160 : vector<2x128xf32>
      %163 = arith.minimumf %160, %162 : vector<2x128xf32>
      %cst_90 = arith.constant 0.000000e+00 : f32
      %cst_91 = arith.constant 1.000000e+00 : f32
      %164 = vector.broadcast %cst_90 : f32 to vector<2x128xf32>
      %165 = arith.maximumf %164, %163 : vector<2x128xf32>
      %166 = vector.broadcast %cst_91 : f32 to vector<2x128xf32>
      %167 = arith.minimumf %166, %165 : vector<2x128xf32>
      %168 = arith.mulf %121, %167 : vector<2x128xf32>
      %169 = arith.subf %118, %168 : vector<2x128xf32>
      %c0_92 = arith.constant 0 : index
      %c0_93 = arith.constant 0 : index
      %c0_94 = arith.constant 0 : index
      %170 = vector.load %arg5[%c0_92, %c0_93, %c0_94] : memref<3x2x128xf32, #tpu.memory_space<vmem>>, vector<1x2x128xf32>
      %171 = vector.shape_cast %170 : vector<1x2x128xf32> to vector<2x128xf32>
      %172 = vector.shape_cast %169 : vector<2x128xf32> to vector<1x2x128xf32>
      tpu.vector_store %arg5[%c0_92, %c0_93, %c0_94], %172 {strides = array<i32>} : memref<3x2x128xf32, #tpu.memory_space<vmem>>, vector<1x2x128xf32>,
      %cst_95 = arith.constant 3.000000e+00 : f32
      %173 = vector.broadcast %cst_95 : f32 to vector<2x128xf32>
      %174 = arith.addf %153, %173 : vector<2x128xf32>
      %cst_96 = arith.constant 6.000000e+00 : f32
      %175 = vector.broadcast %cst_96 : f32 to vector<2x128xf32>
      %176 = arith.cmpf oge, %174, %175 : vector<2x128xf32>
      %cst_97 = arith.constant 6.000000e+00 : f32
      %177 = vector.broadcast %cst_97 : f32 to vector<2x128xf32>
      %178 = arith.subf %174, %177 : vector<2x128xf32>
      %179 = arith.select %176, %178, %174 : vector<2x128xi1>, vector<2x128xf32>
      %cst_98 = arith.constant 4.000000e+00 : f32
      %180 = vector.broadcast %cst_98 : f32 to vector<2x128xf32>
      %181 = arith.subf %180, %179 : vector<2x128xf32>
      %182 = arith.minimumf %179, %181 : vector<2x128xf32>
      %cst_99 = arith.constant 0.000000e+00 : f32
      %cst_100 = arith.constant 1.000000e+00 : f32
      %183 = vector.broadcast %cst_99 : f32 to vector<2x128xf32>
      %184 = arith.maximumf %183, %182 : vector<2x128xf32>
      %185 = vector.broadcast %cst_100 : f32 to vector<2x128xf32>
      %186 = arith.minimumf %185, %184 : vector<2x128xf32>
      %187 = arith.mulf %121, %186 : vector<2x128xf32>
      %188 = arith.subf %118, %187 : vector<2x128xf32>
      %c1_101 = arith.constant 1 : index
      %c0_102 = arith.constant 0 : index
      %c0_103 = arith.constant 0 : index
      %189 = vector.load %arg5[%c1_101, %c0_102, %c0_103] : memref<3x2x128xf32, #tpu.memory_space<vmem>>, vector<1x2x128xf32>
      %190 = vector.shape_cast %189 : vector<1x2x128xf32> to vector<2x128xf32>
      %191 = vector.shape_cast %188 : vector<2x128xf32> to vector<1x2x128xf32>
      tpu.vector_store %arg5[%c1_101, %c0_102, %c0_103], %191 {strides = array<i32>} : memref<3x2x128xf32, #tpu.memory_space<vmem>>, vector<1x2x128xf32>,
      %cst_104 = arith.constant 1.000000e+00 : f32
      %192 = vector.broadcast %cst_104 : f32 to vector<2x128xf32>
      %193 = arith.addf %153, %192 : vector<2x128xf32>
      %cst_105 = arith.constant 6.000000e+00 : f32
      %194 = vector.broadcast %cst_105 : f32 to vector<2x128xf32>
      %195 = arith.cmpf oge, %193, %194 : vector<2x128xf32>
      %cst_106 = arith.constant 6.000000e+00 : f32
      %196 = vector.broadcast %cst_106 : f32 to vector<2x128xf32>
      %197 = arith.subf %193, %196 : vector<2x128xf32>
      %198 = arith.select %195, %197, %193 : vector<2x128xi1>, vector<2x128xf32>
      %cst_107 = arith.constant 4.000000e+00 : f32
      %199 = vector.broadcast %cst_107 : f32 to vector<2x128xf32>
      %200 = arith.subf %199, %198 : vector<2x128xf32>
      %201 = arith.minimumf %198, %200 : vector<2x128xf32>
      %cst_108 = arith.constant 0.000000e+00 : f32
      %cst_109 = arith.constant 1.000000e+00 : f32
      %202 = vector.broadcast %cst_108 : f32 to vector<2x128xf32>
      %203 = arith.maximumf %202, %201 : vector<2x128xf32>
      %204 = vector.broadcast %cst_109 : f32 to vector<2x128xf32>
      %205 = arith.minimumf %204, %203 : vector<2x128xf32>
      %206 = arith.mulf %121, %205 : vector<2x128xf32>
      %207 = arith.subf %118, %206 : vector<2x128xf32>
      %c2_110 = arith.constant 2 : index
      %c0_111 = arith.constant 0 : index
      %c0_112 = arith.constant 0 : index
      %208 = vector.load %arg5[%c2_110, %c0_111, %c0_112] : memref<3x2x128xf32, #tpu.memory_space<vmem>>, vector<1x2x128xf32>
      %209 = vector.shape_cast %208 : vector<1x2x128xf32> to vector<2x128xf32>
      %210 = vector.shape_cast %207 : vector<2x128xf32> to vector<1x2x128xf32>
      tpu.vector_store %arg5[%c2_110, %c0_111, %c0_112], %210 {strides = array<i32>} : memref<3x2x128xf32, #tpu.memory_space<vmem>>, vector<1x2x128xf32>,
    } else {
    }
    %c2_i32_35 = arith.constant 2 : i32
    %63 = arith.addi %2, %c2_i32_35 : i32
    %64 = arith.index_cast %63 : i32 to index
    %65 = memref.load %arg1[%64] : memref<32xi32, #tpu.memory_space<smem>>
    %c0_i32_36 = arith.constant 0 : i32
    %66 = arith.cmpi eq, %65, %c0_i32_36 : i32
    %67 = arith.extui %66 : i1 to i32
    %c0_i32_37 = arith.constant 0 : i32
    %68 = arith.cmpi ne, %67, %c0_i32_37 : i32
    scf.if %68 {
      %c0_72 = arith.constant 0 : index
      %c0_73 = arith.constant 0 : index
      %c0_74 = arith.constant 0 : index
      %111 = vector.load %arg5[%c0_72, %c0_73, %c0_74] : memref<3x2x128xf32, #tpu.memory_space<vmem>>, vector<1x2x128xf32>
      %112 = vector.shape_cast %111 : vector<1x2x128xf32> to vector<2x128xf32>
      %113 = vector.broadcast %5 : f32 to vector<2x128xf32>
      %114 = arith.mulf %112, %113 : vector<2x128xf32>
      %cst = arith.constant 0.000000e+00 : f32
      %cst_75 = arith.constant 1.000000e+00 : f32
      %115 = vector.broadcast %cst : f32 to vector<2x128xf32>
      %116 = arith.maximumf %115, %114 : vector<2x128xf32>
      %117 = vector.broadcast %cst_75 : f32 to vector<2x128xf32>
      %118 = arith.minimumf %117, %116 : vector<2x128xf32>
      %c0_76 = arith.constant 0 : index
      %c0_77 = arith.constant 0 : index
      %c0_78 = arith.constant 0 : index
      %119 = vector.load %arg5[%c0_76, %c0_77, %c0_78] : memref<3x2x128xf32, #tpu.memory_space<vmem>>, vector<1x2x128xf32>
      %120 = vector.shape_cast %119 : vector<1x2x128xf32> to vector<2x128xf32>
      %121 = vector.shape_cast %118 : vector<2x128xf32> to vector<1x2x128xf32>
      tpu.vector_store %arg5[%c0_76, %c0_77, %c0_78], %121 {strides = array<i32>} : memref<3x2x128xf32, #tpu.memory_space<vmem>>, vector<1x2x128xf32>,
      %c1_79 = arith.constant 1 : index
      %c0_80 = arith.constant 0 : index
      %c0_81 = arith.constant 0 : index
      %122 = vector.load %arg5[%c1_79, %c0_80, %c0_81] : memref<3x2x128xf32, #tpu.memory_space<vmem>>, vector<1x2x128xf32>
      %123 = vector.shape_cast %122 : vector<1x2x128xf32> to vector<2x128xf32>
      %124 = vector.broadcast %5 : f32 to vector<2x128xf32>
      %125 = arith.mulf %123, %124 : vector<2x128xf32>
      %cst_82 = arith.constant 0.000000e+00 : f32
      %cst_83 = arith.constant 1.000000e+00 : f32
      %126 = vector.broadcast %cst_82 : f32 to vector<2x128xf32>
      %127 = arith.maximumf %126, %125 : vector<2x128xf32>
      %128 = vector.broadcast %cst_83 : f32 to vector<2x128xf32>
      %129 = arith.minimumf %128, %127 : vector<2x128xf32>
      %c1_84 = arith.constant 1 : index
      %c0_85 = arith.constant 0 : index
      %c0_86 = arith.constant 0 : index
      %130 = vector.load %arg5[%c1_84, %c0_85, %c0_86] : memref<3x2x128xf32, #tpu.memory_space<vmem>>, vector<1x2x128xf32>
      %131 = vector.shape_cast %130 : vector<1x2x128xf32> to vector<2x128xf32>
      %132 = vector.shape_cast %129 : vector<2x128xf32> to vector<1x2x128xf32>
      tpu.vector_store %arg5[%c1_84, %c0_85, %c0_86], %132 {strides = array<i32>} : memref<3x2x128xf32, #tpu.memory_space<vmem>>, vector<1x2x128xf32>,
      %c2_87 = arith.constant 2 : index
      %c0_88 = arith.constant 0 : index
      %c0_89 = arith.constant 0 : index
      %133 = vector.load %arg5[%c2_87, %c0_88, %c0_89] : memref<3x2x128xf32, #tpu.memory_space<vmem>>, vector<1x2x128xf32>
      %134 = vector.shape_cast %133 : vector<1x2x128xf32> to vector<2x128xf32>
      %135 = vector.broadcast %5 : f32 to vector<2x128xf32>
      %136 = arith.mulf %134, %135 : vector<2x128xf32>
      %cst_90 = arith.constant 0.000000e+00 : f32
      %cst_91 = arith.constant 1.000000e+00 : f32
      %137 = vector.broadcast %cst_90 : f32 to vector<2x128xf32>
      %138 = arith.maximumf %137, %136 : vector<2x128xf32>
      %139 = vector.broadcast %cst_91 : f32 to vector<2x128xf32>
      %140 = arith.minimumf %139, %138 : vector<2x128xf32>
      %c2_92 = arith.constant 2 : index
      %c0_93 = arith.constant 0 : index
      %c0_94 = arith.constant 0 : index
      %141 = vector.load %arg5[%c2_92, %c0_93, %c0_94] : memref<3x2x128xf32, #tpu.memory_space<vmem>>, vector<1x2x128xf32>
      %142 = vector.shape_cast %141 : vector<1x2x128xf32> to vector<2x128xf32>
      %143 = vector.shape_cast %140 : vector<2x128xf32> to vector<1x2x128xf32>
      tpu.vector_store %arg5[%c2_92, %c0_93, %c0_94], %143 {strides = array<i32>} : memref<3x2x128xf32, #tpu.memory_space<vmem>>, vector<1x2x128xf32>,
    } else {
    }
    %c1_i32_38 = arith.constant 1 : i32
    %69 = arith.cmpi eq, %65, %c1_i32_38 : i32
    %70 = arith.extui %69 : i1 to i32
    %c0_i32_39 = arith.constant 0 : i32
    %71 = arith.cmpi ne, %70, %c0_i32_39 : i32
    scf.if %71 {
      %c0_72 = arith.constant 0 : index
      %c0_73 = arith.constant 0 : index
      %c0_74 = arith.constant 0 : index
      %111 = vector.load %arg5[%c0_72, %c0_73, %c0_74] : memref<3x2x128xf32, #tpu.memory_space<vmem>>, vector<1x2x128xf32>
      %112 = vector.shape_cast %111 : vector<1x2x128xf32> to vector<2x128xf32>
      %c1_75 = arith.constant 1 : index
      %c0_76 = arith.constant 0 : index
      %c0_77 = arith.constant 0 : index
      %113 = vector.load %arg5[%c1_75, %c0_76, %c0_77] : memref<3x2x128xf32, #tpu.memory_space<vmem>>, vector<1x2x128xf32>
      %114 = vector.shape_cast %113 : vector<1x2x128xf32> to vector<2x128xf32>
      %c2_78 = arith.constant 2 : index
      %c0_79 = arith.constant 0 : index
      %c0_80 = arith.constant 0 : index
      %115 = vector.load %arg5[%c2_78, %c0_79, %c0_80] : memref<3x2x128xf32, #tpu.memory_space<vmem>>, vector<1x2x128xf32>
      %116 = vector.shape_cast %115 : vector<1x2x128xf32> to vector<2x128xf32>
      %cst = arith.constant 2.989000e-01 : f32
      %117 = vector.broadcast %cst : f32 to vector<2x128xf32>
      %118 = arith.mulf %117, %112 : vector<2x128xf32>
      %cst_81 = arith.constant 5.870000e-01 : f32
      %119 = vector.broadcast %cst_81 : f32 to vector<2x128xf32>
      %120 = arith.mulf %119, %114 : vector<2x128xf32>
      %121 = arith.addf %118, %120 : vector<2x128xf32>
      %cst_82 = arith.constant 1.140000e-01 : f32
      %122 = vector.broadcast %cst_82 : f32 to vector<2x128xf32>
      %123 = arith.mulf %122, %116 : vector<2x128xf32>
      %124 = arith.addf %121, %123 : vector<2x128xf32>
      %125 = vector.shape_cast %124 : vector<2x128xf32> to vector<1x2x128xf32>
      %cst_83 = arith.constant dense<0.000000e+00> : vector<1xf32>
      %126 = vector.multi_reduction <add>, %125, %cst_83 [1, 2] : vector<1x2x128xf32> to vector<1xf32>
      %127 = vector.shape_cast %126 : vector<1xf32> to vector<1x1x1xf32>
      %128 = vector.extract %127[0, 0, 0] : f32 from vector<1x1x1xf32>
      %cst_84 = arith.constant 3.906250e-03 : f32
      %129 = arith.mulf %128, %cst_84 : f32
      %cst_85 = arith.constant 1.000000e+00 : f32
      %130 = arith.subf %cst_85, %8 : f32
      %131 = arith.mulf %130, %129 : f32
      %c0_86 = arith.constant 0 : index
      %c0_87 = arith.constant 0 : index
      %c0_88 = arith.constant 0 : index
      %132 = vector.load %arg5[%c0_86, %c0_87, %c0_88] : memref<3x2x128xf32, #tpu.memory_space<vmem>>, vector<1x2x128xf32>
      %133 = vector.shape_cast %132 : vector<1x2x128xf32> to vector<2x128xf32>
      %134 = vector.broadcast %8 : f32 to vector<2x128xf32>
      %135 = arith.mulf %134, %133 : vector<2x128xf32>
      %136 = vector.broadcast %131 : f32 to vector<2x128xf32>
      %137 = arith.addf %135, %136 : vector<2x128xf32>
      %cst_89 = arith.constant 0.000000e+00 : f32
      %cst_90 = arith.constant 1.000000e+00 : f32
      %138 = vector.broadcast %cst_89 : f32 to vector<2x128xf32>
      %139 = arith.maximumf %138, %137 : vector<2x128xf32>
      %140 = vector.broadcast %cst_90 : f32 to vector<2x128xf32>
      %141 = arith.minimumf %140, %139 : vector<2x128xf32>
      %c0_91 = arith.constant 0 : index
      %c0_92 = arith.constant 0 : index
      %c0_93 = arith.constant 0 : index
      %142 = vector.load %arg5[%c0_91, %c0_92, %c0_93] : memref<3x2x128xf32, #tpu.memory_space<vmem>>, vector<1x2x128xf32>
      %143 = vector.shape_cast %142 : vector<1x2x128xf32> to vector<2x128xf32>
      %144 = vector.shape_cast %141 : vector<2x128xf32> to vector<1x2x128xf32>
      tpu.vector_store %arg5[%c0_91, %c0_92, %c0_93], %144 {strides = array<i32>} : memref<3x2x128xf32, #tpu.memory_space<vmem>>, vector<1x2x128xf32>,
      %c1_94 = arith.constant 1 : index
      %c0_95 = arith.constant 0 : index
      %c0_96 = arith.constant 0 : index
      %145 = vector.load %arg5[%c1_94, %c0_95, %c0_96] : memref<3x2x128xf32, #tpu.memory_space<vmem>>, vector<1x2x128xf32>
      %146 = vector.shape_cast %145 : vector<1x2x128xf32> to vector<2x128xf32>
      %147 = vector.broadcast %8 : f32 to vector<2x128xf32>
      %148 = arith.mulf %147, %146 : vector<2x128xf32>
      %149 = vector.broadcast %131 : f32 to vector<2x128xf32>
      %150 = arith.addf %148, %149 : vector<2x128xf32>
      %cst_97 = arith.constant 0.000000e+00 : f32
      %cst_98 = arith.constant 1.000000e+00 : f32
      %151 = vector.broadcast %cst_97 : f32 to vector<2x128xf32>
      %152 = arith.maximumf %151, %150 : vector<2x128xf32>
      %153 = vector.broadcast %cst_98 : f32 to vector<2x128xf32>
      %154 = arith.minimumf %153, %152 : vector<2x128xf32>
      %c1_99 = arith.constant 1 : index
      %c0_100 = arith.constant 0 : index
      %c0_101 = arith.constant 0 : index
      %155 = vector.load %arg5[%c1_99, %c0_100, %c0_101] : memref<3x2x128xf32, #tpu.memory_space<vmem>>, vector<1x2x128xf32>
      %156 = vector.shape_cast %155 : vector<1x2x128xf32> to vector<2x128xf32>
      %157 = vector.shape_cast %154 : vector<2x128xf32> to vector<1x2x128xf32>
      tpu.vector_store %arg5[%c1_99, %c0_100, %c0_101], %157 {strides = array<i32>} : memref<3x2x128xf32, #tpu.memory_space<vmem>>, vector<1x2x128xf32>,
      %c2_102 = arith.constant 2 : index
      %c0_103 = arith.constant 0 : index
      %c0_104 = arith.constant 0 : index
      %158 = vector.load %arg5[%c2_102, %c0_103, %c0_104] : memref<3x2x128xf32, #tpu.memory_space<vmem>>, vector<1x2x128xf32>
      %159 = vector.shape_cast %158 : vector<1x2x128xf32> to vector<2x128xf32>
      %160 = vector.broadcast %8 : f32 to vector<2x128xf32>
      %161 = arith.mulf %160, %159 : vector<2x128xf32>
      %162 = vector.broadcast %131 : f32 to vector<2x128xf32>
      %163 = arith.addf %161, %162 : vector<2x128xf32>
      %cst_105 = arith.constant 0.000000e+00 : f32
      %cst_106 = arith.constant 1.000000e+00 : f32
      %164 = vector.broadcast %cst_105 : f32 to vector<2x128xf32>
      %165 = arith.maximumf %164, %163 : vector<2x128xf32>
      %166 = vector.broadcast %cst_106 : f32 to vector<2x128xf32>
      %167 = arith.minimumf %166, %165 : vector<2x128xf32>
      %c2_107 = arith.constant 2 : index
      %c0_108 = arith.constant 0 : index
      %c0_109 = arith.constant 0 : index
      %168 = vector.load %arg5[%c2_107, %c0_108, %c0_109] : memref<3x2x128xf32, #tpu.memory_space<vmem>>, vector<1x2x128xf32>
      %169 = vector.shape_cast %168 : vector<1x2x128xf32> to vector<2x128xf32>
      %170 = vector.shape_cast %167 : vector<2x128xf32> to vector<1x2x128xf32>
      tpu.vector_store %arg5[%c2_107, %c0_108, %c0_109], %170 {strides = array<i32>} : memref<3x2x128xf32, #tpu.memory_space<vmem>>, vector<1x2x128xf32>,
    } else {
    }
    %c2_i32_40 = arith.constant 2 : i32
    %72 = arith.cmpi eq, %65, %c2_i32_40 : i32
    %73 = arith.extui %72 : i1 to i32
    %c0_i32_41 = arith.constant 0 : i32
    %74 = arith.cmpi ne, %73, %c0_i32_41 : i32
    scf.if %74 {
      %cst = arith.constant 1.000000e+00 : f32
      %111 = arith.subf %cst, %11 : f32
      %c0_72 = arith.constant 0 : index
      %c0_73 = arith.constant 0 : index
      %c0_74 = arith.constant 0 : index
      %112 = vector.load %arg5[%c0_72, %c0_73, %c0_74] : memref<3x2x128xf32, #tpu.memory_space<vmem>>, vector<1x2x128xf32>
      %113 = vector.shape_cast %112 : vector<1x2x128xf32> to vector<2x128xf32>
      %c1_75 = arith.constant 1 : index
      %c0_76 = arith.constant 0 : index
      %c0_77 = arith.constant 0 : index
      %114 = vector.load %arg5[%c1_75, %c0_76, %c0_77] : memref<3x2x128xf32, #tpu.memory_space<vmem>>, vector<1x2x128xf32>
      %115 = vector.shape_cast %114 : vector<1x2x128xf32> to vector<2x128xf32>
      %c2_78 = arith.constant 2 : index
      %c0_79 = arith.constant 0 : index
      %c0_80 = arith.constant 0 : index
      %116 = vector.load %arg5[%c2_78, %c0_79, %c0_80] : memref<3x2x128xf32, #tpu.memory_space<vmem>>, vector<1x2x128xf32>
      %117 = vector.shape_cast %116 : vector<1x2x128xf32> to vector<2x128xf32>
      %cst_81 = arith.constant 2.989000e-01 : f32
      %118 = vector.broadcast %cst_81 : f32 to vector<2x128xf32>
      %119 = arith.mulf %118, %113 : vector<2x128xf32>
      %cst_82 = arith.constant 5.870000e-01 : f32
      %120 = vector.broadcast %cst_82 : f32 to vector<2x128xf32>
      %121 = arith.mulf %120, %115 : vector<2x128xf32>
      %122 = arith.addf %119, %121 : vector<2x128xf32>
      %cst_83 = arith.constant 1.140000e-01 : f32
      %123 = vector.broadcast %cst_83 : f32 to vector<2x128xf32>
      %124 = arith.mulf %123, %117 : vector<2x128xf32>
      %125 = arith.addf %122, %124 : vector<2x128xf32>
      %126 = vector.broadcast %111 : f32 to vector<2x128xf32>
      %127 = arith.mulf %126, %125 : vector<2x128xf32>
      %128 = vector.broadcast %11 : f32 to vector<2x128xf32>
      %129 = arith.mulf %128, %113 : vector<2x128xf32>
      %130 = arith.addf %129, %127 : vector<2x128xf32>
      %cst_84 = arith.constant 0.000000e+00 : f32
      %cst_85 = arith.constant 1.000000e+00 : f32
      %131 = vector.broadcast %cst_84 : f32 to vector<2x128xf32>
      %132 = arith.maximumf %131, %130 : vector<2x128xf32>
      %133 = vector.broadcast %cst_85 : f32 to vector<2x128xf32>
      %134 = arith.minimumf %133, %132 : vector<2x128xf32>
      %c0_86 = arith.constant 0 : index
      %c0_87 = arith.constant 0 : index
      %c0_88 = arith.constant 0 : index
      %135 = vector.load %arg5[%c0_86, %c0_87, %c0_88] : memref<3x2x128xf32, #tpu.memory_space<vmem>>, vector<1x2x128xf32>
      %136 = vector.shape_cast %135 : vector<1x2x128xf32> to vector<2x128xf32>
      %137 = vector.shape_cast %134 : vector<2x128xf32> to vector<1x2x128xf32>
      tpu.vector_store %arg5[%c0_86, %c0_87, %c0_88], %137 {strides = array<i32>} : memref<3x2x128xf32, #tpu.memory_space<vmem>>, vector<1x2x128xf32>,
      %138 = vector.broadcast %11 : f32 to vector<2x128xf32>
      %139 = arith.mulf %138, %115 : vector<2x128xf32>
      %140 = arith.addf %139, %127 : vector<2x128xf32>
      %cst_89 = arith.constant 0.000000e+00 : f32
      %cst_90 = arith.constant 1.000000e+00 : f32
      %141 = vector.broadcast %cst_89 : f32 to vector<2x128xf32>
      %142 = arith.maximumf %141, %140 : vector<2x128xf32>
      %143 = vector.broadcast %cst_90 : f32 to vector<2x128xf32>
      %144 = arith.minimumf %143, %142 : vector<2x128xf32>
      %c1_91 = arith.constant 1 : index
      %c0_92 = arith.constant 0 : index
      %c0_93 = arith.constant 0 : index
      %145 = vector.load %arg5[%c1_91, %c0_92, %c0_93] : memref<3x2x128xf32, #tpu.memory_space<vmem>>, vector<1x2x128xf32>
      %146 = vector.shape_cast %145 : vector<1x2x128xf32> to vector<2x128xf32>
      %147 = vector.shape_cast %144 : vector<2x128xf32> to vector<1x2x128xf32>
      tpu.vector_store %arg5[%c1_91, %c0_92, %c0_93], %147 {strides = array<i32>} : memref<3x2x128xf32, #tpu.memory_space<vmem>>, vector<1x2x128xf32>,
      %148 = vector.broadcast %11 : f32 to vector<2x128xf32>
      %149 = arith.mulf %148, %117 : vector<2x128xf32>
      %150 = arith.addf %149, %127 : vector<2x128xf32>
      %cst_94 = arith.constant 0.000000e+00 : f32
      %cst_95 = arith.constant 1.000000e+00 : f32
      %151 = vector.broadcast %cst_94 : f32 to vector<2x128xf32>
      %152 = arith.maximumf %151, %150 : vector<2x128xf32>
      %153 = vector.broadcast %cst_95 : f32 to vector<2x128xf32>
      %154 = arith.minimumf %153, %152 : vector<2x128xf32>
      %c2_96 = arith.constant 2 : index
      %c0_97 = arith.constant 0 : index
      %c0_98 = arith.constant 0 : index
      %155 = vector.load %arg5[%c2_96, %c0_97, %c0_98] : memref<3x2x128xf32, #tpu.memory_space<vmem>>, vector<1x2x128xf32>
      %156 = vector.shape_cast %155 : vector<1x2x128xf32> to vector<2x128xf32>
      %157 = vector.shape_cast %154 : vector<2x128xf32> to vector<1x2x128xf32>
      tpu.vector_store %arg5[%c2_96, %c0_97, %c0_98], %157 {strides = array<i32>} : memref<3x2x128xf32, #tpu.memory_space<vmem>>, vector<1x2x128xf32>,
    } else {
    }
    %c3_i32_42 = arith.constant 3 : i32
    %75 = arith.cmpi eq, %65, %c3_i32_42 : i32
    %76 = arith.extui %75 : i1 to i32
    %c0_i32_43 = arith.constant 0 : i32
    %77 = arith.cmpi ne, %76, %c0_i32_43 : i32
    scf.if %77 {
      %c0_72 = arith.constant 0 : index
      %c0_73 = arith.constant 0 : index
      %c0_74 = arith.constant 0 : index
      %111 = vector.load %arg5[%c0_72, %c0_73, %c0_74] : memref<3x2x128xf32, #tpu.memory_space<vmem>>, vector<1x2x128xf32>
      %112 = vector.shape_cast %111 : vector<1x2x128xf32> to vector<2x128xf32>
      %c1_75 = arith.constant 1 : index
      %c0_76 = arith.constant 0 : index
      %c0_77 = arith.constant 0 : index
      %113 = vector.load %arg5[%c1_75, %c0_76, %c0_77] : memref<3x2x128xf32, #tpu.memory_space<vmem>>, vector<1x2x128xf32>
      %114 = vector.shape_cast %113 : vector<1x2x128xf32> to vector<2x128xf32>
      %c2_78 = arith.constant 2 : index
      %c0_79 = arith.constant 0 : index
      %c0_80 = arith.constant 0 : index
      %115 = vector.load %arg5[%c2_78, %c0_79, %c0_80] : memref<3x2x128xf32, #tpu.memory_space<vmem>>, vector<1x2x128xf32>
      %116 = vector.shape_cast %115 : vector<1x2x128xf32> to vector<2x128xf32>
      %117 = arith.maximumf %112, %114 : vector<2x128xf32>
      %118 = arith.maximumf %117, %116 : vector<2x128xf32>
      %119 = arith.minimumf %112, %114 : vector<2x128xf32>
      %120 = arith.minimumf %119, %116 : vector<2x128xf32>
      %121 = arith.subf %118, %120 : vector<2x128xf32>
      %cst = arith.constant 9.99999968E-21 : f32
      %122 = vector.broadcast %cst : f32 to vector<2x128xf32>
      %123 = arith.maximumf %121, %122 : vector<2x128xf32>
      %124 = tpu.reciprocal %123 {approx = true} : vector<2x128xf32> -> vector<2x128xf32>
      %125 = arith.mulf %123, %124 : vector<2x128xf32>
      %cst_81 = arith.constant 2.000000e+00 : f32
      %126 = vector.broadcast %cst_81 : f32 to vector<2x128xf32>
      %127 = arith.subf %126, %125 : vector<2x128xf32>
      %128 = arith.mulf %124, %127 : vector<2x128xf32>
      %129 = arith.subf %118, %112 : vector<2x128xf32>
      %130 = arith.mulf %129, %128 : vector<2x128xf32>
      %131 = arith.subf %118, %114 : vector<2x128xf32>
      %132 = arith.mulf %131, %128 : vector<2x128xf32>
      %133 = arith.subf %118, %116 : vector<2x128xf32>
      %134 = arith.mulf %133, %128 : vector<2x128xf32>
      %135 = arith.cmpf oeq, %118, %112 : vector<2x128xf32>
      %136 = arith.subf %134, %132 : vector<2x128xf32>
      %137 = arith.cmpf oeq, %118, %114 : vector<2x128xf32>
      %cst_82 = arith.constant 2.000000e+00 : f32
      %138 = vector.broadcast %cst_82 : f32 to vector<2x128xf32>
      %139 = arith.addf %138, %130 : vector<2x128xf32>
      %140 = arith.subf %139, %134 : vector<2x128xf32>
      %cst_83 = arith.constant 4.000000e+00 : f32
      %141 = vector.broadcast %cst_83 : f32 to vector<2x128xf32>
      %142 = arith.addf %141, %132 : vector<2x128xf32>
      %143 = arith.subf %142, %130 : vector<2x128xf32>
      %144 = arith.select %137, %140, %143 : vector<2x128xi1>, vector<2x128xf32>
      %145 = arith.select %135, %136, %144 : vector<2x128xi1>, vector<2x128xf32>
      %cst_84 = arith.constant 0.166666672 : f32
      %146 = vector.broadcast %cst_84 : f32 to vector<2x128xf32>
      %147 = arith.mulf %145, %146 : vector<2x128xf32>
      %148 = vector.broadcast %14 : f32 to vector<2x128xf32>
      %149 = arith.addf %147, %148 : vector<2x128xf32>
      %150 = math.floor %149 : vector<2x128xf32>
      %151 = arith.subf %149, %150 : vector<2x128xf32>
      %cst_85 = arith.constant 6.000000e+00 : f32
      %152 = vector.broadcast %cst_85 : f32 to vector<2x128xf32>
      %153 = arith.mulf %151, %152 : vector<2x128xf32>
      %cst_86 = arith.constant 5.000000e+00 : f32
      %154 = vector.broadcast %cst_86 : f32 to vector<2x128xf32>
      %155 = arith.addf %153, %154 : vector<2x128xf32>
      %cst_87 = arith.constant 6.000000e+00 : f32
      %156 = vector.broadcast %cst_87 : f32 to vector<2x128xf32>
      %157 = arith.cmpf oge, %155, %156 : vector<2x128xf32>
      %cst_88 = arith.constant 6.000000e+00 : f32
      %158 = vector.broadcast %cst_88 : f32 to vector<2x128xf32>
      %159 = arith.subf %155, %158 : vector<2x128xf32>
      %160 = arith.select %157, %159, %155 : vector<2x128xi1>, vector<2x128xf32>
      %cst_89 = arith.constant 4.000000e+00 : f32
      %161 = vector.broadcast %cst_89 : f32 to vector<2x128xf32>
      %162 = arith.subf %161, %160 : vector<2x128xf32>
      %163 = arith.minimumf %160, %162 : vector<2x128xf32>
      %cst_90 = arith.constant 0.000000e+00 : f32
      %cst_91 = arith.constant 1.000000e+00 : f32
      %164 = vector.broadcast %cst_90 : f32 to vector<2x128xf32>
      %165 = arith.maximumf %164, %163 : vector<2x128xf32>
      %166 = vector.broadcast %cst_91 : f32 to vector<2x128xf32>
      %167 = arith.minimumf %166, %165 : vector<2x128xf32>
      %168 = arith.mulf %121, %167 : vector<2x128xf32>
      %169 = arith.subf %118, %168 : vector<2x128xf32>
      %c0_92 = arith.constant 0 : index
      %c0_93 = arith.constant 0 : index
      %c0_94 = arith.constant 0 : index
      %170 = vector.load %arg5[%c0_92, %c0_93, %c0_94] : memref<3x2x128xf32, #tpu.memory_space<vmem>>, vector<1x2x128xf32>
      %171 = vector.shape_cast %170 : vector<1x2x128xf32> to vector<2x128xf32>
      %172 = vector.shape_cast %169 : vector<2x128xf32> to vector<1x2x128xf32>
      tpu.vector_store %arg5[%c0_92, %c0_93, %c0_94], %172 {strides = array<i32>} : memref<3x2x128xf32, #tpu.memory_space<vmem>>, vector<1x2x128xf32>,
      %cst_95 = arith.constant 3.000000e+00 : f32
      %173 = vector.broadcast %cst_95 : f32 to vector<2x128xf32>
      %174 = arith.addf %153, %173 : vector<2x128xf32>
      %cst_96 = arith.constant 6.000000e+00 : f32
      %175 = vector.broadcast %cst_96 : f32 to vector<2x128xf32>
      %176 = arith.cmpf oge, %174, %175 : vector<2x128xf32>
      %cst_97 = arith.constant 6.000000e+00 : f32
      %177 = vector.broadcast %cst_97 : f32 to vector<2x128xf32>
      %178 = arith.subf %174, %177 : vector<2x128xf32>
      %179 = arith.select %176, %178, %174 : vector<2x128xi1>, vector<2x128xf32>
      %cst_98 = arith.constant 4.000000e+00 : f32
      %180 = vector.broadcast %cst_98 : f32 to vector<2x128xf32>
      %181 = arith.subf %180, %179 : vector<2x128xf32>
      %182 = arith.minimumf %179, %181 : vector<2x128xf32>
      %cst_99 = arith.constant 0.000000e+00 : f32
      %cst_100 = arith.constant 1.000000e+00 : f32
      %183 = vector.broadcast %cst_99 : f32 to vector<2x128xf32>
      %184 = arith.maximumf %183, %182 : vector<2x128xf32>
      %185 = vector.broadcast %cst_100 : f32 to vector<2x128xf32>
      %186 = arith.minimumf %185, %184 : vector<2x128xf32>
      %187 = arith.mulf %121, %186 : vector<2x128xf32>
      %188 = arith.subf %118, %187 : vector<2x128xf32>
      %c1_101 = arith.constant 1 : index
      %c0_102 = arith.constant 0 : index
      %c0_103 = arith.constant 0 : index
      %189 = vector.load %arg5[%c1_101, %c0_102, %c0_103] : memref<3x2x128xf32, #tpu.memory_space<vmem>>, vector<1x2x128xf32>
      %190 = vector.shape_cast %189 : vector<1x2x128xf32> to vector<2x128xf32>
      %191 = vector.shape_cast %188 : vector<2x128xf32> to vector<1x2x128xf32>
      tpu.vector_store %arg5[%c1_101, %c0_102, %c0_103], %191 {strides = array<i32>} : memref<3x2x128xf32, #tpu.memory_space<vmem>>, vector<1x2x128xf32>,
      %cst_104 = arith.constant 1.000000e+00 : f32
      %192 = vector.broadcast %cst_104 : f32 to vector<2x128xf32>
      %193 = arith.addf %153, %192 : vector<2x128xf32>
      %cst_105 = arith.constant 6.000000e+00 : f32
      %194 = vector.broadcast %cst_105 : f32 to vector<2x128xf32>
      %195 = arith.cmpf oge, %193, %194 : vector<2x128xf32>
      %cst_106 = arith.constant 6.000000e+00 : f32
      %196 = vector.broadcast %cst_106 : f32 to vector<2x128xf32>
      %197 = arith.subf %193, %196 : vector<2x128xf32>
      %198 = arith.select %195, %197, %193 : vector<2x128xi1>, vector<2x128xf32>
      %cst_107 = arith.constant 4.000000e+00 : f32
      %199 = vector.broadcast %cst_107 : f32 to vector<2x128xf32>
      %200 = arith.subf %199, %198 : vector<2x128xf32>
      %201 = arith.minimumf %198, %200 : vector<2x128xf32>
      %cst_108 = arith.constant 0.000000e+00 : f32
      %cst_109 = arith.constant 1.000000e+00 : f32
      %202 = vector.broadcast %cst_108 : f32 to vector<2x128xf32>
      %203 = arith.maximumf %202, %201 : vector<2x128xf32>
      %204 = vector.broadcast %cst_109 : f32 to vector<2x128xf32>
      %205 = arith.minimumf %204, %203 : vector<2x128xf32>
      %206 = arith.mulf %121, %205 : vector<2x128xf32>
      %207 = arith.subf %118, %206 : vector<2x128xf32>
      %c2_110 = arith.constant 2 : index
      %c0_111 = arith.constant 0 : index
      %c0_112 = arith.constant 0 : index
      %208 = vector.load %arg5[%c2_110, %c0_111, %c0_112] : memref<3x2x128xf32, #tpu.memory_space<vmem>>, vector<1x2x128xf32>
      %209 = vector.shape_cast %208 : vector<1x2x128xf32> to vector<2x128xf32>
      %210 = vector.shape_cast %207 : vector<2x128xf32> to vector<1x2x128xf32>
      tpu.vector_store %arg5[%c2_110, %c0_111, %c0_112], %210 {strides = array<i32>} : memref<3x2x128xf32, #tpu.memory_space<vmem>>, vector<1x2x128xf32>,
    } else {
    }
    %c3_i32_44 = arith.constant 3 : i32
    %78 = arith.addi %2, %c3_i32_44 : i32
    %79 = arith.index_cast %78 : i32 to index
    %80 = memref.load %arg1[%79] : memref<32xi32, #tpu.memory_space<smem>>
    %c0_i32_45 = arith.constant 0 : i32
    %81 = arith.cmpi eq, %80, %c0_i32_45 : i32
    %82 = arith.extui %81 : i1 to i32
    %c0_i32_46 = arith.constant 0 : i32
    %83 = arith.cmpi ne, %82, %c0_i32_46 : i32
    scf.if %83 {
      %c0_72 = arith.constant 0 : index
      %c0_73 = arith.constant 0 : index
      %c0_74 = arith.constant 0 : index
      %111 = vector.load %arg5[%c0_72, %c0_73, %c0_74] : memref<3x2x128xf32, #tpu.memory_space<vmem>>, vector<1x2x128xf32>
      %112 = vector.shape_cast %111 : vector<1x2x128xf32> to vector<2x128xf32>
      %113 = vector.broadcast %5 : f32 to vector<2x128xf32>
      %114 = arith.mulf %112, %113 : vector<2x128xf32>
      %cst = arith.constant 0.000000e+00 : f32
      %cst_75 = arith.constant 1.000000e+00 : f32
      %115 = vector.broadcast %cst : f32 to vector<2x128xf32>
      %116 = arith.maximumf %115, %114 : vector<2x128xf32>
      %117 = vector.broadcast %cst_75 : f32 to vector<2x128xf32>
      %118 = arith.minimumf %117, %116 : vector<2x128xf32>
      %c0_76 = arith.constant 0 : index
      %c0_77 = arith.constant 0 : index
      %c0_78 = arith.constant 0 : index
      %119 = vector.load %arg5[%c0_76, %c0_77, %c0_78] : memref<3x2x128xf32, #tpu.memory_space<vmem>>, vector<1x2x128xf32>
      %120 = vector.shape_cast %119 : vector<1x2x128xf32> to vector<2x128xf32>
      %121 = vector.shape_cast %118 : vector<2x128xf32> to vector<1x2x128xf32>
      tpu.vector_store %arg5[%c0_76, %c0_77, %c0_78], %121 {strides = array<i32>} : memref<3x2x128xf32, #tpu.memory_space<vmem>>, vector<1x2x128xf32>,
      %c1_79 = arith.constant 1 : index
      %c0_80 = arith.constant 0 : index
      %c0_81 = arith.constant 0 : index
      %122 = vector.load %arg5[%c1_79, %c0_80, %c0_81] : memref<3x2x128xf32, #tpu.memory_space<vmem>>, vector<1x2x128xf32>
      %123 = vector.shape_cast %122 : vector<1x2x128xf32> to vector<2x128xf32>
      %124 = vector.broadcast %5 : f32 to vector<2x128xf32>
      %125 = arith.mulf %123, %124 : vector<2x128xf32>
      %cst_82 = arith.constant 0.000000e+00 : f32
      %cst_83 = arith.constant 1.000000e+00 : f32
      %126 = vector.broadcast %cst_82 : f32 to vector<2x128xf32>
      %127 = arith.maximumf %126, %125 : vector<2x128xf32>
      %128 = vector.broadcast %cst_83 : f32 to vector<2x128xf32>
      %129 = arith.minimumf %128, %127 : vector<2x128xf32>
      %c1_84 = arith.constant 1 : index
      %c0_85 = arith.constant 0 : index
      %c0_86 = arith.constant 0 : index
      %130 = vector.load %arg5[%c1_84, %c0_85, %c0_86] : memref<3x2x128xf32, #tpu.memory_space<vmem>>, vector<1x2x128xf32>
      %131 = vector.shape_cast %130 : vector<1x2x128xf32> to vector<2x128xf32>
      %132 = vector.shape_cast %129 : vector<2x128xf32> to vector<1x2x128xf32>
      tpu.vector_store %arg5[%c1_84, %c0_85, %c0_86], %132 {strides = array<i32>} : memref<3x2x128xf32, #tpu.memory_space<vmem>>, vector<1x2x128xf32>,
      %c2_87 = arith.constant 2 : index
      %c0_88 = arith.constant 0 : index
      %c0_89 = arith.constant 0 : index
      %133 = vector.load %arg5[%c2_87, %c0_88, %c0_89] : memref<3x2x128xf32, #tpu.memory_space<vmem>>, vector<1x2x128xf32>
      %134 = vector.shape_cast %133 : vector<1x2x128xf32> to vector<2x128xf32>
      %135 = vector.broadcast %5 : f32 to vector<2x128xf32>
      %136 = arith.mulf %134, %135 : vector<2x128xf32>
      %cst_90 = arith.constant 0.000000e+00 : f32
      %cst_91 = arith.constant 1.000000e+00 : f32
      %137 = vector.broadcast %cst_90 : f32 to vector<2x128xf32>
      %138 = arith.maximumf %137, %136 : vector<2x128xf32>
      %139 = vector.broadcast %cst_91 : f32 to vector<2x128xf32>
      %140 = arith.minimumf %139, %138 : vector<2x128xf32>
      %c2_92 = arith.constant 2 : index
      %c0_93 = arith.constant 0 : index
      %c0_94 = arith.constant 0 : index
      %141 = vector.load %arg5[%c2_92, %c0_93, %c0_94] : memref<3x2x128xf32, #tpu.memory_space<vmem>>, vector<1x2x128xf32>
      %142 = vector.shape_cast %141 : vector<1x2x128xf32> to vector<2x128xf32>
      %143 = vector.shape_cast %140 : vector<2x128xf32> to vector<1x2x128xf32>
      tpu.vector_store %arg5[%c2_92, %c0_93, %c0_94], %143 {strides = array<i32>} : memref<3x2x128xf32, #tpu.memory_space<vmem>>, vector<1x2x128xf32>,
    } else {
    }
    %c1_i32_47 = arith.constant 1 : i32
    %84 = arith.cmpi eq, %80, %c1_i32_47 : i32
    %85 = arith.extui %84 : i1 to i32
    %c0_i32_48 = arith.constant 0 : i32
    %86 = arith.cmpi ne, %85, %c0_i32_48 : i32
    scf.if %86 {
      %c0_72 = arith.constant 0 : index
      %c0_73 = arith.constant 0 : index
      %c0_74 = arith.constant 0 : index
      %111 = vector.load %arg5[%c0_72, %c0_73, %c0_74] : memref<3x2x128xf32, #tpu.memory_space<vmem>>, vector<1x2x128xf32>
      %112 = vector.shape_cast %111 : vector<1x2x128xf32> to vector<2x128xf32>
      %c1_75 = arith.constant 1 : index
      %c0_76 = arith.constant 0 : index
      %c0_77 = arith.constant 0 : index
      %113 = vector.load %arg5[%c1_75, %c0_76, %c0_77] : memref<3x2x128xf32, #tpu.memory_space<vmem>>, vector<1x2x128xf32>
      %114 = vector.shape_cast %113 : vector<1x2x128xf32> to vector<2x128xf32>
      %c2_78 = arith.constant 2 : index
      %c0_79 = arith.constant 0 : index
      %c0_80 = arith.constant 0 : index
      %115 = vector.load %arg5[%c2_78, %c0_79, %c0_80] : memref<3x2x128xf32, #tpu.memory_space<vmem>>, vector<1x2x128xf32>
      %116 = vector.shape_cast %115 : vector<1x2x128xf32> to vector<2x128xf32>
      %cst = arith.constant 2.989000e-01 : f32
      %117 = vector.broadcast %cst : f32 to vector<2x128xf32>
      %118 = arith.mulf %117, %112 : vector<2x128xf32>
      %cst_81 = arith.constant 5.870000e-01 : f32
      %119 = vector.broadcast %cst_81 : f32 to vector<2x128xf32>
      %120 = arith.mulf %119, %114 : vector<2x128xf32>
      %121 = arith.addf %118, %120 : vector<2x128xf32>
      %cst_82 = arith.constant 1.140000e-01 : f32
      %122 = vector.broadcast %cst_82 : f32 to vector<2x128xf32>
      %123 = arith.mulf %122, %116 : vector<2x128xf32>
      %124 = arith.addf %121, %123 : vector<2x128xf32>
      %125 = vector.shape_cast %124 : vector<2x128xf32> to vector<1x2x128xf32>
      %cst_83 = arith.constant dense<0.000000e+00> : vector<1xf32>
      %126 = vector.multi_reduction <add>, %125, %cst_83 [1, 2] : vector<1x2x128xf32> to vector<1xf32>
      %127 = vector.shape_cast %126 : vector<1xf32> to vector<1x1x1xf32>
      %128 = vector.extract %127[0, 0, 0] : f32 from vector<1x1x1xf32>
      %cst_84 = arith.constant 3.906250e-03 : f32
      %129 = arith.mulf %128, %cst_84 : f32
      %cst_85 = arith.constant 1.000000e+00 : f32
      %130 = arith.subf %cst_85, %8 : f32
      %131 = arith.mulf %130, %129 : f32
      %c0_86 = arith.constant 0 : index
      %c0_87 = arith.constant 0 : index
      %c0_88 = arith.constant 0 : index
      %132 = vector.load %arg5[%c0_86, %c0_87, %c0_88] : memref<3x2x128xf32, #tpu.memory_space<vmem>>, vector<1x2x128xf32>
      %133 = vector.shape_cast %132 : vector<1x2x128xf32> to vector<2x128xf32>
      %134 = vector.broadcast %8 : f32 to vector<2x128xf32>
      %135 = arith.mulf %134, %133 : vector<2x128xf32>
      %136 = vector.broadcast %131 : f32 to vector<2x128xf32>
      %137 = arith.addf %135, %136 : vector<2x128xf32>
      %cst_89 = arith.constant 0.000000e+00 : f32
      %cst_90 = arith.constant 1.000000e+00 : f32
      %138 = vector.broadcast %cst_89 : f32 to vector<2x128xf32>
      %139 = arith.maximumf %138, %137 : vector<2x128xf32>
      %140 = vector.broadcast %cst_90 : f32 to vector<2x128xf32>
      %141 = arith.minimumf %140, %139 : vector<2x128xf32>
      %c0_91 = arith.constant 0 : index
      %c0_92 = arith.constant 0 : index
      %c0_93 = arith.constant 0 : index
      %142 = vector.load %arg5[%c0_91, %c0_92, %c0_93] : memref<3x2x128xf32, #tpu.memory_space<vmem>>, vector<1x2x128xf32>
      %143 = vector.shape_cast %142 : vector<1x2x128xf32> to vector<2x128xf32>
      %144 = vector.shape_cast %141 : vector<2x128xf32> to vector<1x2x128xf32>
      tpu.vector_store %arg5[%c0_91, %c0_92, %c0_93], %144 {strides = array<i32>} : memref<3x2x128xf32, #tpu.memory_space<vmem>>, vector<1x2x128xf32>,
      %c1_94 = arith.constant 1 : index
      %c0_95 = arith.constant 0 : index
      %c0_96 = arith.constant 0 : index
      %145 = vector.load %arg5[%c1_94, %c0_95, %c0_96] : memref<3x2x128xf32, #tpu.memory_space<vmem>>, vector<1x2x128xf32>
      %146 = vector.shape_cast %145 : vector<1x2x128xf32> to vector<2x128xf32>
      %147 = vector.broadcast %8 : f32 to vector<2x128xf32>
      %148 = arith.mulf %147, %146 : vector<2x128xf32>
      %149 = vector.broadcast %131 : f32 to vector<2x128xf32>
      %150 = arith.addf %148, %149 : vector<2x128xf32>
      %cst_97 = arith.constant 0.000000e+00 : f32
      %cst_98 = arith.constant 1.000000e+00 : f32
      %151 = vector.broadcast %cst_97 : f32 to vector<2x128xf32>
      %152 = arith.maximumf %151, %150 : vector<2x128xf32>
      %153 = vector.broadcast %cst_98 : f32 to vector<2x128xf32>
      %154 = arith.minimumf %153, %152 : vector<2x128xf32>
      %c1_99 = arith.constant 1 : index
      %c0_100 = arith.constant 0 : index
      %c0_101 = arith.constant 0 : index
      %155 = vector.load %arg5[%c1_99, %c0_100, %c0_101] : memref<3x2x128xf32, #tpu.memory_space<vmem>>, vector<1x2x128xf32>
      %156 = vector.shape_cast %155 : vector<1x2x128xf32> to vector<2x128xf32>
      %157 = vector.shape_cast %154 : vector<2x128xf32> to vector<1x2x128xf32>
      tpu.vector_store %arg5[%c1_99, %c0_100, %c0_101], %157 {strides = array<i32>} : memref<3x2x128xf32, #tpu.memory_space<vmem>>, vector<1x2x128xf32>,
      %c2_102 = arith.constant 2 : index
      %c0_103 = arith.constant 0 : index
      %c0_104 = arith.constant 0 : index
      %158 = vector.load %arg5[%c2_102, %c0_103, %c0_104] : memref<3x2x128xf32, #tpu.memory_space<vmem>>, vector<1x2x128xf32>
      %159 = vector.shape_cast %158 : vector<1x2x128xf32> to vector<2x128xf32>
      %160 = vector.broadcast %8 : f32 to vector<2x128xf32>
      %161 = arith.mulf %160, %159 : vector<2x128xf32>
      %162 = vector.broadcast %131 : f32 to vector<2x128xf32>
      %163 = arith.addf %161, %162 : vector<2x128xf32>
      %cst_105 = arith.constant 0.000000e+00 : f32
      %cst_106 = arith.constant 1.000000e+00 : f32
      %164 = vector.broadcast %cst_105 : f32 to vector<2x128xf32>
      %165 = arith.maximumf %164, %163 : vector<2x128xf32>
      %166 = vector.broadcast %cst_106 : f32 to vector<2x128xf32>
      %167 = arith.minimumf %166, %165 : vector<2x128xf32>
      %c2_107 = arith.constant 2 : index
      %c0_108 = arith.constant 0 : index
      %c0_109 = arith.constant 0 : index
      %168 = vector.load %arg5[%c2_107, %c0_108, %c0_109] : memref<3x2x128xf32, #tpu.memory_space<vmem>>, vector<1x2x128xf32>
      %169 = vector.shape_cast %168 : vector<1x2x128xf32> to vector<2x128xf32>
      %170 = vector.shape_cast %167 : vector<2x128xf32> to vector<1x2x128xf32>
      tpu.vector_store %arg5[%c2_107, %c0_108, %c0_109], %170 {strides = array<i32>} : memref<3x2x128xf32, #tpu.memory_space<vmem>>, vector<1x2x128xf32>,
    } else {
    }
    %c2_i32_49 = arith.constant 2 : i32
    %87 = arith.cmpi eq, %80, %c2_i32_49 : i32
    %88 = arith.extui %87 : i1 to i32
    %c0_i32_50 = arith.constant 0 : i32
    %89 = arith.cmpi ne, %88, %c0_i32_50 : i32
    scf.if %89 {
      %cst = arith.constant 1.000000e+00 : f32
      %111 = arith.subf %cst, %11 : f32
      %c0_72 = arith.constant 0 : index
      %c0_73 = arith.constant 0 : index
      %c0_74 = arith.constant 0 : index
      %112 = vector.load %arg5[%c0_72, %c0_73, %c0_74] : memref<3x2x128xf32, #tpu.memory_space<vmem>>, vector<1x2x128xf32>
      %113 = vector.shape_cast %112 : vector<1x2x128xf32> to vector<2x128xf32>
      %c1_75 = arith.constant 1 : index
      %c0_76 = arith.constant 0 : index
      %c0_77 = arith.constant 0 : index
      %114 = vector.load %arg5[%c1_75, %c0_76, %c0_77] : memref<3x2x128xf32, #tpu.memory_space<vmem>>, vector<1x2x128xf32>
      %115 = vector.shape_cast %114 : vector<1x2x128xf32> to vector<2x128xf32>
      %c2_78 = arith.constant 2 : index
      %c0_79 = arith.constant 0 : index
      %c0_80 = arith.constant 0 : index
      %116 = vector.load %arg5[%c2_78, %c0_79, %c0_80] : memref<3x2x128xf32, #tpu.memory_space<vmem>>, vector<1x2x128xf32>
      %117 = vector.shape_cast %116 : vector<1x2x128xf32> to vector<2x128xf32>
      %cst_81 = arith.constant 2.989000e-01 : f32
      %118 = vector.broadcast %cst_81 : f32 to vector<2x128xf32>
      %119 = arith.mulf %118, %113 : vector<2x128xf32>
      %cst_82 = arith.constant 5.870000e-01 : f32
      %120 = vector.broadcast %cst_82 : f32 to vector<2x128xf32>
      %121 = arith.mulf %120, %115 : vector<2x128xf32>
      %122 = arith.addf %119, %121 : vector<2x128xf32>
      %cst_83 = arith.constant 1.140000e-01 : f32
      %123 = vector.broadcast %cst_83 : f32 to vector<2x128xf32>
      %124 = arith.mulf %123, %117 : vector<2x128xf32>
      %125 = arith.addf %122, %124 : vector<2x128xf32>
      %126 = vector.broadcast %111 : f32 to vector<2x128xf32>
      %127 = arith.mulf %126, %125 : vector<2x128xf32>
      %128 = vector.broadcast %11 : f32 to vector<2x128xf32>
      %129 = arith.mulf %128, %113 : vector<2x128xf32>
      %130 = arith.addf %129, %127 : vector<2x128xf32>
      %cst_84 = arith.constant 0.000000e+00 : f32
      %cst_85 = arith.constant 1.000000e+00 : f32
      %131 = vector.broadcast %cst_84 : f32 to vector<2x128xf32>
      %132 = arith.maximumf %131, %130 : vector<2x128xf32>
      %133 = vector.broadcast %cst_85 : f32 to vector<2x128xf32>
      %134 = arith.minimumf %133, %132 : vector<2x128xf32>
      %c0_86 = arith.constant 0 : index
      %c0_87 = arith.constant 0 : index
      %c0_88 = arith.constant 0 : index
      %135 = vector.load %arg5[%c0_86, %c0_87, %c0_88] : memref<3x2x128xf32, #tpu.memory_space<vmem>>, vector<1x2x128xf32>
      %136 = vector.shape_cast %135 : vector<1x2x128xf32> to vector<2x128xf32>
      %137 = vector.shape_cast %134 : vector<2x128xf32> to vector<1x2x128xf32>
      tpu.vector_store %arg5[%c0_86, %c0_87, %c0_88], %137 {strides = array<i32>} : memref<3x2x128xf32, #tpu.memory_space<vmem>>, vector<1x2x128xf32>,
      %138 = vector.broadcast %11 : f32 to vector<2x128xf32>
      %139 = arith.mulf %138, %115 : vector<2x128xf32>
      %140 = arith.addf %139, %127 : vector<2x128xf32>
      %cst_89 = arith.constant 0.000000e+00 : f32
      %cst_90 = arith.constant 1.000000e+00 : f32
      %141 = vector.broadcast %cst_89 : f32 to vector<2x128xf32>
      %142 = arith.maximumf %141, %140 : vector<2x128xf32>
      %143 = vector.broadcast %cst_90 : f32 to vector<2x128xf32>
      %144 = arith.minimumf %143, %142 : vector<2x128xf32>
      %c1_91 = arith.constant 1 : index
      %c0_92 = arith.constant 0 : index
      %c0_93 = arith.constant 0 : index
      %145 = vector.load %arg5[%c1_91, %c0_92, %c0_93] : memref<3x2x128xf32, #tpu.memory_space<vmem>>, vector<1x2x128xf32>
      %146 = vector.shape_cast %145 : vector<1x2x128xf32> to vector<2x128xf32>
      %147 = vector.shape_cast %144 : vector<2x128xf32> to vector<1x2x128xf32>
      tpu.vector_store %arg5[%c1_91, %c0_92, %c0_93], %147 {strides = array<i32>} : memref<3x2x128xf32, #tpu.memory_space<vmem>>, vector<1x2x128xf32>,
      %148 = vector.broadcast %11 : f32 to vector<2x128xf32>
      %149 = arith.mulf %148, %117 : vector<2x128xf32>
      %150 = arith.addf %149, %127 : vector<2x128xf32>
      %cst_94 = arith.constant 0.000000e+00 : f32
      %cst_95 = arith.constant 1.000000e+00 : f32
      %151 = vector.broadcast %cst_94 : f32 to vector<2x128xf32>
      %152 = arith.maximumf %151, %150 : vector<2x128xf32>
      %153 = vector.broadcast %cst_95 : f32 to vector<2x128xf32>
      %154 = arith.minimumf %153, %152 : vector<2x128xf32>
      %c2_96 = arith.constant 2 : index
      %c0_97 = arith.constant 0 : index
      %c0_98 = arith.constant 0 : index
      %155 = vector.load %arg5[%c2_96, %c0_97, %c0_98] : memref<3x2x128xf32, #tpu.memory_space<vmem>>, vector<1x2x128xf32>
      %156 = vector.shape_cast %155 : vector<1x2x128xf32> to vector<2x128xf32>
      %157 = vector.shape_cast %154 : vector<2x128xf32> to vector<1x2x128xf32>
      tpu.vector_store %arg5[%c2_96, %c0_97, %c0_98], %157 {strides = array<i32>} : memref<3x2x128xf32, #tpu.memory_space<vmem>>, vector<1x2x128xf32>,
    } else {
    }
    %c3_i32_51 = arith.constant 3 : i32
    %90 = arith.cmpi eq, %80, %c3_i32_51 : i32
    %91 = arith.extui %90 : i1 to i32
    %c0_i32_52 = arith.constant 0 : i32
    %92 = arith.cmpi ne, %91, %c0_i32_52 : i32
    scf.if %92 {
      %c0_72 = arith.constant 0 : index
      %c0_73 = arith.constant 0 : index
      %c0_74 = arith.constant 0 : index
      %111 = vector.load %arg5[%c0_72, %c0_73, %c0_74] : memref<3x2x128xf32, #tpu.memory_space<vmem>>, vector<1x2x128xf32>
      %112 = vector.shape_cast %111 : vector<1x2x128xf32> to vector<2x128xf32>
      %c1_75 = arith.constant 1 : index
      %c0_76 = arith.constant 0 : index
      %c0_77 = arith.constant 0 : index
      %113 = vector.load %arg5[%c1_75, %c0_76, %c0_77] : memref<3x2x128xf32, #tpu.memory_space<vmem>>, vector<1x2x128xf32>
      %114 = vector.shape_cast %113 : vector<1x2x128xf32> to vector<2x128xf32>
      %c2_78 = arith.constant 2 : index
      %c0_79 = arith.constant 0 : index
      %c0_80 = arith.constant 0 : index
      %115 = vector.load %arg5[%c2_78, %c0_79, %c0_80] : memref<3x2x128xf32, #tpu.memory_space<vmem>>, vector<1x2x128xf32>
      %116 = vector.shape_cast %115 : vector<1x2x128xf32> to vector<2x128xf32>
      %117 = arith.maximumf %112, %114 : vector<2x128xf32>
      %118 = arith.maximumf %117, %116 : vector<2x128xf32>
      %119 = arith.minimumf %112, %114 : vector<2x128xf32>
      %120 = arith.minimumf %119, %116 : vector<2x128xf32>
      %121 = arith.subf %118, %120 : vector<2x128xf32>
      %cst = arith.constant 9.99999968E-21 : f32
      %122 = vector.broadcast %cst : f32 to vector<2x128xf32>
      %123 = arith.maximumf %121, %122 : vector<2x128xf32>
      %124 = tpu.reciprocal %123 {approx = true} : vector<2x128xf32> -> vector<2x128xf32>
      %125 = arith.mulf %123, %124 : vector<2x128xf32>
      %cst_81 = arith.constant 2.000000e+00 : f32
      %126 = vector.broadcast %cst_81 : f32 to vector<2x128xf32>
      %127 = arith.subf %126, %125 : vector<2x128xf32>
      %128 = arith.mulf %124, %127 : vector<2x128xf32>
      %129 = arith.subf %118, %112 : vector<2x128xf32>
      %130 = arith.mulf %129, %128 : vector<2x128xf32>
      %131 = arith.subf %118, %114 : vector<2x128xf32>
      %132 = arith.mulf %131, %128 : vector<2x128xf32>
      %133 = arith.subf %118, %116 : vector<2x128xf32>
      %134 = arith.mulf %133, %128 : vector<2x128xf32>
      %135 = arith.cmpf oeq, %118, %112 : vector<2x128xf32>
      %136 = arith.subf %134, %132 : vector<2x128xf32>
      %137 = arith.cmpf oeq, %118, %114 : vector<2x128xf32>
      %cst_82 = arith.constant 2.000000e+00 : f32
      %138 = vector.broadcast %cst_82 : f32 to vector<2x128xf32>
      %139 = arith.addf %138, %130 : vector<2x128xf32>
      %140 = arith.subf %139, %134 : vector<2x128xf32>
      %cst_83 = arith.constant 4.000000e+00 : f32
      %141 = vector.broadcast %cst_83 : f32 to vector<2x128xf32>
      %142 = arith.addf %141, %132 : vector<2x128xf32>
      %143 = arith.subf %142, %130 : vector<2x128xf32>
      %144 = arith.select %137, %140, %143 : vector<2x128xi1>, vector<2x128xf32>
      %145 = arith.select %135, %136, %144 : vector<2x128xi1>, vector<2x128xf32>
      %cst_84 = arith.constant 0.166666672 : f32
      %146 = vector.broadcast %cst_84 : f32 to vector<2x128xf32>
      %147 = arith.mulf %145, %146 : vector<2x128xf32>
      %148 = vector.broadcast %14 : f32 to vector<2x128xf32>
      %149 = arith.addf %147, %148 : vector<2x128xf32>
      %150 = math.floor %149 : vector<2x128xf32>
      %151 = arith.subf %149, %150 : vector<2x128xf32>
      %cst_85 = arith.constant 6.000000e+00 : f32
      %152 = vector.broadcast %cst_85 : f32 to vector<2x128xf32>
      %153 = arith.mulf %151, %152 : vector<2x128xf32>
      %cst_86 = arith.constant 5.000000e+00 : f32
      %154 = vector.broadcast %cst_86 : f32 to vector<2x128xf32>
      %155 = arith.addf %153, %154 : vector<2x128xf32>
      %cst_87 = arith.constant 6.000000e+00 : f32
      %156 = vector.broadcast %cst_87 : f32 to vector<2x128xf32>
      %157 = arith.cmpf oge, %155, %156 : vector<2x128xf32>
      %cst_88 = arith.constant 6.000000e+00 : f32
      %158 = vector.broadcast %cst_88 : f32 to vector<2x128xf32>
      %159 = arith.subf %155, %158 : vector<2x128xf32>
      %160 = arith.select %157, %159, %155 : vector<2x128xi1>, vector<2x128xf32>
      %cst_89 = arith.constant 4.000000e+00 : f32
      %161 = vector.broadcast %cst_89 : f32 to vector<2x128xf32>
      %162 = arith.subf %161, %160 : vector<2x128xf32>
      %163 = arith.minimumf %160, %162 : vector<2x128xf32>
      %cst_90 = arith.constant 0.000000e+00 : f32
      %cst_91 = arith.constant 1.000000e+00 : f32
      %164 = vector.broadcast %cst_90 : f32 to vector<2x128xf32>
      %165 = arith.maximumf %164, %163 : vector<2x128xf32>
      %166 = vector.broadcast %cst_91 : f32 to vector<2x128xf32>
      %167 = arith.minimumf %166, %165 : vector<2x128xf32>
      %168 = arith.mulf %121, %167 : vector<2x128xf32>
      %169 = arith.subf %118, %168 : vector<2x128xf32>
      %c0_92 = arith.constant 0 : index
      %c0_93 = arith.constant 0 : index
      %c0_94 = arith.constant 0 : index
      %170 = vector.load %arg5[%c0_92, %c0_93, %c0_94] : memref<3x2x128xf32, #tpu.memory_space<vmem>>, vector<1x2x128xf32>
      %171 = vector.shape_cast %170 : vector<1x2x128xf32> to vector<2x128xf32>
      %172 = vector.shape_cast %169 : vector<2x128xf32> to vector<1x2x128xf32>
      tpu.vector_store %arg5[%c0_92, %c0_93, %c0_94], %172 {strides = array<i32>} : memref<3x2x128xf32, #tpu.memory_space<vmem>>, vector<1x2x128xf32>,
      %cst_95 = arith.constant 3.000000e+00 : f32
      %173 = vector.broadcast %cst_95 : f32 to vector<2x128xf32>
      %174 = arith.addf %153, %173 : vector<2x128xf32>
      %cst_96 = arith.constant 6.000000e+00 : f32
      %175 = vector.broadcast %cst_96 : f32 to vector<2x128xf32>
      %176 = arith.cmpf oge, %174, %175 : vector<2x128xf32>
      %cst_97 = arith.constant 6.000000e+00 : f32
      %177 = vector.broadcast %cst_97 : f32 to vector<2x128xf32>
      %178 = arith.subf %174, %177 : vector<2x128xf32>
      %179 = arith.select %176, %178, %174 : vector<2x128xi1>, vector<2x128xf32>
      %cst_98 = arith.constant 4.000000e+00 : f32
      %180 = vector.broadcast %cst_98 : f32 to vector<2x128xf32>
      %181 = arith.subf %180, %179 : vector<2x128xf32>
      %182 = arith.minimumf %179, %181 : vector<2x128xf32>
      %cst_99 = arith.constant 0.000000e+00 : f32
      %cst_100 = arith.constant 1.000000e+00 : f32
      %183 = vector.broadcast %cst_99 : f32 to vector<2x128xf32>
      %184 = arith.maximumf %183, %182 : vector<2x128xf32>
      %185 = vector.broadcast %cst_100 : f32 to vector<2x128xf32>
      %186 = arith.minimumf %185, %184 : vector<2x128xf32>
      %187 = arith.mulf %121, %186 : vector<2x128xf32>
      %188 = arith.subf %118, %187 : vector<2x128xf32>
      %c1_101 = arith.constant 1 : index
      %c0_102 = arith.constant 0 : index
      %c0_103 = arith.constant 0 : index
      %189 = vector.load %arg5[%c1_101, %c0_102, %c0_103] : memref<3x2x128xf32, #tpu.memory_space<vmem>>, vector<1x2x128xf32>
      %190 = vector.shape_cast %189 : vector<1x2x128xf32> to vector<2x128xf32>
      %191 = vector.shape_cast %188 : vector<2x128xf32> to vector<1x2x128xf32>
      tpu.vector_store %arg5[%c1_101, %c0_102, %c0_103], %191 {strides = array<i32>} : memref<3x2x128xf32, #tpu.memory_space<vmem>>, vector<1x2x128xf32>,
      %cst_104 = arith.constant 1.000000e+00 : f32
      %192 = vector.broadcast %cst_104 : f32 to vector<2x128xf32>
      %193 = arith.addf %153, %192 : vector<2x128xf32>
      %cst_105 = arith.constant 6.000000e+00 : f32
      %194 = vector.broadcast %cst_105 : f32 to vector<2x128xf32>
      %195 = arith.cmpf oge, %193, %194 : vector<2x128xf32>
      %cst_106 = arith.constant 6.000000e+00 : f32
      %196 = vector.broadcast %cst_106 : f32 to vector<2x128xf32>
      %197 = arith.subf %193, %196 : vector<2x128xf32>
      %198 = arith.select %195, %197, %193 : vector<2x128xi1>, vector<2x128xf32>
      %cst_107 = arith.constant 4.000000e+00 : f32
      %199 = vector.broadcast %cst_107 : f32 to vector<2x128xf32>
      %200 = arith.subf %199, %198 : vector<2x128xf32>
      %201 = arith.minimumf %198, %200 : vector<2x128xf32>
      %cst_108 = arith.constant 0.000000e+00 : f32
      %cst_109 = arith.constant 1.000000e+00 : f32
      %202 = vector.broadcast %cst_108 : f32 to vector<2x128xf32>
      %203 = arith.maximumf %202, %201 : vector<2x128xf32>
      %204 = vector.broadcast %cst_109 : f32 to vector<2x128xf32>
      %205 = arith.minimumf %204, %203 : vector<2x128xf32>
      %206 = arith.mulf %121, %205 : vector<2x128xf32>
      %207 = arith.subf %118, %206 : vector<2x128xf32>
      %c2_110 = arith.constant 2 : index
      %c0_111 = arith.constant 0 : index
      %c0_112 = arith.constant 0 : index
      %208 = vector.load %arg5[%c2_110, %c0_111, %c0_112] : memref<3x2x128xf32, #tpu.memory_space<vmem>>, vector<1x2x128xf32>
      %209 = vector.shape_cast %208 : vector<1x2x128xf32> to vector<2x128xf32>
      %210 = vector.shape_cast %207 : vector<2x128xf32> to vector<1x2x128xf32>
      tpu.vector_store %arg5[%c2_110, %c0_111, %c0_112], %210 {strides = array<i32>} : memref<3x2x128xf32, #tpu.memory_space<vmem>>, vector<1x2x128xf32>,
    } else {
    }
    %c0_53 = arith.constant 0 : index
    %c0_54 = arith.constant 0 : index
    %c0_55 = arith.constant 0 : index
    %93 = vector.load %arg5[%c0_53, %c0_54, %c0_55] : memref<3x2x128xf32, #tpu.memory_space<vmem>>, vector<1x2x128xf32>
    %94 = vector.shape_cast %93 : vector<1x2x128xf32> to vector<2x128xf32>
    %95 = arith.index_cast %c0_i32 : i32 to index
    %c0_56 = arith.constant 0 : index
    %c0_57 = arith.constant 0 : index
    %c0_58 = arith.constant 0 : index
    %96 = vector.load %arg4[%95, %c0_56, %c0_57, %c0_58] : memref<1x3x2x128xf32, #tpu.memory_space<vmem>>, vector<1x1x2x128xf32>
    %97 = vector.shape_cast %96 : vector<1x1x2x128xf32> to vector<2x128xf32>
    %98 = vector.shape_cast %94 : vector<2x128xf32> to vector<1x1x2x128xf32>
    tpu.vector_store %arg4[%95, %c0_56, %c0_57, %c0_58], %98 {strides = array<i32>} : memref<1x3x2x128xf32, #tpu.memory_space<vmem>>, vector<1x1x2x128xf32>,
    %c1_59 = arith.constant 1 : index
    %c0_60 = arith.constant 0 : index
    %c0_61 = arith.constant 0 : index
    %99 = vector.load %arg5[%c1_59, %c0_60, %c0_61] : memref<3x2x128xf32, #tpu.memory_space<vmem>>, vector<1x2x128xf32>
    %100 = vector.shape_cast %99 : vector<1x2x128xf32> to vector<2x128xf32>
    %101 = arith.index_cast %c0_i32 : i32 to index
    %c1_62 = arith.constant 1 : index
    %c0_63 = arith.constant 0 : index
    %c0_64 = arith.constant 0 : index
    %102 = vector.load %arg4[%101, %c1_62, %c0_63, %c0_64] : memref<1x3x2x128xf32, #tpu.memory_space<vmem>>, vector<1x1x2x128xf32>
    %103 = vector.shape_cast %102 : vector<1x1x2x128xf32> to vector<2x128xf32>
    %104 = vector.shape_cast %100 : vector<2x128xf32> to vector<1x1x2x128xf32>
    tpu.vector_store %arg4[%101, %c1_62, %c0_63, %c0_64], %104 {strides = array<i32>} : memref<1x3x2x128xf32, #tpu.memory_space<vmem>>, vector<1x1x2x128xf32>,
    %c2_65 = arith.constant 2 : index
    %c0_66 = arith.constant 0 : index
    %c0_67 = arith.constant 0 : index
    %105 = vector.load %arg5[%c2_65, %c0_66, %c0_67] : memref<3x2x128xf32, #tpu.memory_space<vmem>>, vector<1x2x128xf32>
    %106 = vector.shape_cast %105 : vector<1x2x128xf32> to vector<2x128xf32>
    %107 = arith.index_cast %c0_i32 : i32 to index
    %c2_68 = arith.constant 2 : index
    %c0_69 = arith.constant 0 : index
    %c0_70 = arith.constant 0 : index
    %108 = vector.load %arg4[%107, %c2_68, %c0_69, %c0_70] : memref<1x3x2x128xf32, #tpu.memory_space<vmem>>, vector<1x1x2x128xf32>
    %109 = vector.shape_cast %108 : vector<1x1x2x128xf32> to vector<2x128xf32>
    %110 = vector.shape_cast %106 : vector<2x128xf32> to vector<1x1x2x128xf32>
    tpu.vector_store %arg4[%107, %c2_68, %c0_69, %c0_70], %110 {strides = array<i32>} : memref<1x3x2x128xf32, #tpu.memory_space<vmem>>, vector<1x1x2x128xf32>,
    %c1_i32_71 = arith.constant 1 : i32
    return
  }
  func.func @transform_0(%arg0: i32, %arg1: memref<32xi32, #tpu.memory_space<smem>>, %arg2: memref<32xf32, #tpu.memory_space<smem>>) -> (i32, i32, i32, i32) {
    %c0_i32 = arith.constant 0 : i32
    %c0_i32_0 = arith.constant 0 : i32
    %c0_i32_1 = arith.constant 0 : i32
    %c0_i32_2 = arith.constant 0 : i32
    return %arg0, %c0_i32, %c0_i32_0, %c0_i32_1 : i32, i32, i32, i32
  }
  func.func @transform_1(%arg0: i32, %arg1: memref<32xi32, #tpu.memory_space<smem>>, %arg2: memref<32xf32, #tpu.memory_space<smem>>) -> (i32, i32, i32, i32) {
    %c0_i32 = arith.constant 0 : i32
    %c0_i32_0 = arith.constant 0 : i32
    %c0_i32_1 = arith.constant 0 : i32
    %c0_i32_2 = arith.constant 0 : i32
    return %arg0, %c0_i32, %c0_i32_0, %c0_i32_1 : i32, i32, i32, i32
  }
}

</mosaic_0001>

<llo_original>
// kernel: color_jitter_framewise.4
$region0: #{color_jitter_framewise.4}
  #allocation0 [shape = 'u32[]', space=smem, size = 0x4, offset = 0x4, fixed_abs, tag = 'smem constant byte address 0x4 - core index']
  #allocation1 [shape = 'u32[72,128]{1,0:T(1,128)}', space=vmem, size = 0x9000, scoped, tag = 'internal scratch']
  #allocation2 [shape = 'f32[3,2,128]{2,1,0:T(2,128)}', space=vmem, size = 0xc00, scoped, tag = 'scratch operand']
  #allocation3 [shape = 's32[1]{0}', space=sflag, size = 0x4, scoped, tag = 'scoped memory for color_jitter_framewise.4']
  #allocation4 [shape = 'u8[512]{0}', space=smem, size = 0x200, scoped, tag = 'prefetched SMEM operand 0']
  #allocation5 [shape = 'u8[512]{0}', space=smem, size = 0x200, scoped, tag = 'prefetched SMEM operand 1']
  %s0 = inlined_call_operand.vmem [shape: s32[32], index: 0, kind: input, shape index: {}]
  %s1 = inlined_call_operand.vmem [shape: f32[32], index: 1, kind: input, shape index: {}]
  %s2 = inlined_call_operand.vmem [shape: f32[8,3,2,128], index: 2, kind: input, shape index: {}]
  %s3 = inlined_call_operand.vmem [shape: f32[8,3,2,128], index: 3, kind: output, shape index: {}]
  %s4 = sld [smem:[#allocation0]]
  $region101: #{color_jitter_framewise.4} parent=0
    _
  %s6 = ssub.s32 1, %s4
  %s7 = scalar_select 0, %s6, %s4
  %s9 = sshll.u32 %s0, 4
  %s10 = int_to_ptr.vmem [resolvable:$true] %s9
  %12 = dma.vmem_to_smem %s10, 16, [#allocation4], [#allocation3]
  %s14 = sshll.u32 %s1, 4
  %s15 = int_to_ptr.vmem [resolvable:$true] %s14
  %17 = dma.vmem_to_smem %s15, 16, [#allocation5], [#allocation3]
  %19 = dma.done [#allocation3], 32
  %20 = sfence
  loop: start=0, step=1, limit=10
  $region2: #{color_jitter_framewise.4} parent=0 // loop_pre_header
    _
  $region3: #{color_jitter_framewise.4} parent=0 // loop_header
    %s22 = sphi 0, %s26
    %p23 = scmp.ge.s32.totalorder %s22, 10
    %s32 = sphi 0, %s34
    %s35 = sphi 0, %s32
    %s36 = sphi 0, %s35
    %s52 = sphi 0, %s36
    %s58 = sphi 0, %s60
    %s61 = sphi 0, %s58
    %s62 = sphi 0, %s61
    %s78 = sphi 0, %s62
  $region4: #{color_jitter_framewise.4} parent=0 // loop_header_branch
    %25 = sbr.rel (%p23) target = $region8
  $region5: #{color_jitter_framewise.4} parent=0 // loop_body
    %s27 = ssub.s32 %s22, 1
    %s28 = ssub.s32 %s22, 2
    %s29 = sadd.s32 %s22, 1
    %s30 = ssub.s32 %s22, %s29
    %p31 = scmp.eq.s32.totalorder %s30, 0
    %s33 = sadd.s32 %s32, 1
    %s34 = scalar_select %p31, %s32, %s33
    %p37 = pneg %p31
    %p38 = scmp.eq.s32.totalorder %s22, 7
    %p39 = por %p37, %p38
    %p40 = scmp.ne.s32.totalorder %s32, %s35
    %p41 = scmp.eq.s32.totalorder %s22, 0
    %p42 = por %p40, %p41
    %p43 = scmp.ne.s32.totalorder %s32, %s35
    %p44 = scmp.eq.s32.totalorder %s27, 7
    %p45 = por %p43, %p44
    %p46 = scmp.ne.s32.totalorder %s35, %s36
    %p47 = scmp.eq.s32.totalorder %s27, 0
    %p48 = por %p46, %p47
    %p49 = scmp.ne.s32.totalorder %s35, %s36
    %p50 = scmp.eq.s32.totalorder %s28, 7
    %p51 = por %p49, %p50
    %p53 = scmp.ne.s32.totalorder %s36, %s52
    %p54 = scmp.eq.s32.totalorder %s28, 0
    %p55 = por %p53, %p54
    %s56 = ssub.s32 %s22, %s29
    %p57 = scmp.eq.s32.totalorder %s56, 0
    %s59 = sadd.s32 %s58, 1
    %s60 = scalar_select %p57, %s58, %s59
    %p63 = pneg %p57
    %p64 = scmp.eq.s32.totalorder %s22, 7
    %p65 = por %p63, %p64
    %p66 = scmp.ne.s32.totalorder %s58, %s61
    %p67 = scmp.eq.s32.totalorder %s22, 0
    %p68 = por %p66, %p67
    %p69 = scmp.ne.s32.totalorder %s58, %s61
    %p70 = scmp.eq.s32.totalorder %s27, 7
    %p71 = por %p69, %p70
    %p72 = scmp.ne.s32.totalorder %s61, %s62
    %p73 = scmp.eq.s32.totalorder %s27, 0
    %p74 = por %p72, %p73
    %p75 = scmp.ne.s32.totalorder %s61, %s62
    %p76 = scmp.eq.s32.totalorder %s28, 7
    %p77 = por %p75, %p76
    %p79 = scmp.ne.s32.totalorder %s62, %s78
    %p80 = scmp.eq.s32.totalorder %s28, 0
    %p81 = por %p79, %p80
    %p82 = scmp.le.s32.totalorder 1, %s22
    %p83 = scmp.lt.s32.totalorder %s22, 9
    %p84 = pnand %p82, %p83
    %p85 = pneg %p84
    // Predicated region
    $region9: #{color_jitter_framewise.4} parent=5 // pred_check
      _
    $region10: #{color_jitter_framewise.4} parent=5 // pred_check_branch
      %87 = sbr.rel (%p84) target = $region12
    $region11: #{color_jitter_framewise.4} parent=5 // pred_region
      %s88 = ssub.s32 %s22, 1
    $region12: #{color_jitter_framewise.4} parent=5 // pred_fallthru
      _
    %p89 = scmp.lt.s32.totalorder %s22, 8
    // Predicated region
    $region13: #{color_jitter_framewise.4} parent=5 // pred_check
      %p90 = pneg %p89
    $region14: #{color_jitter_framewise.4} parent=5 // pred_check_branch
      %92 = sbr.rel (%p90) target = $region16
    $region15: #{color_jitter_framewise.4} parent=5 // pred_region
      // Predicated region
      $region17: #{color_jitter_framewise.4} parent=15 // pred_check
        %p93 = pneg %p42
      $region18: #{color_jitter_framewise.4} parent=15 // pred_check_branch
        %95 = sbr.rel (%p93) target = $region20
      $region19: #{color_jitter_framewise.4} parent=15 // pred_region
        %p96 = scmp.lt.s32.totalorder %s22, 7
        %s97 = scalar_select %p96, %s22, 7
        %s98 = smul.addr %s97, 3
        %s99 = smul.addr %s98, 2
        %s100 = scalar_lea.vmem %s2, %s99
      $region20: #{color_jitter_framewise.4} parent=15 // pred_fallthru
        _
    $region16: #{color_jitter_framewise.4} parent=5 // pred_fallthru
      _
    %p101 = scmp.le.s32.totalorder 1, %s22
    %p102 = scmp.lt.s32.totalorder %s22, 9
    %p103 = pnand %p101, %p102
    %p104 = pneg %p103
    // Predicated region
    $region21: #{color_jitter_framewise.4} parent=5 // pred_check
      _
    $region22: #{color_jitter_framewise.4} parent=5 // pred_check_branch
      %106 = sbr.rel (%p103) target = $region24
    $region23: #{color_jitter_framewise.4} parent=5 // pred_region
      %s107 = ssub.s32 %s22, 1
      %p108 = scmp.lt.s32.totalorder %s27, 7
      %s109 = scalar_select %p108, %s27, 7
      %s110 = smul.addr %s109, 3
      %s111 = smul.addr %s110, 2
      %s112 = scalar_lea.vmem %s2, %s111
      %p113 = pneg %p48
      %p114 = pneg %p45
      %p115 = pneg %p74
      %p116 = pneg %p71
      %p117 = scmp.lt.s32.totalorder %s27, 7
      %s118 = scalar_select %p117, %s27, 7
      %s119 = smul.addr %s118, 3
      %s120 = smul.addr %s119, 2
      %s121 = scalar_lea.vmem %s3, %s120
      %p122 = scmp.lt.s32.totalorder %s27, 7
      %s123 = scalar_select %p122, %s27, 7
      %s124 = smul.addr %s123, 3
      %s125 = smul.addr %s124, 2
      %s126 = scalar_lea.vmem %s2, %s125
      %p127 = scmp.lt.s32.totalorder %s27, 7
      %s128 = scalar_select %p127, %s27, 7
      %s129 = smul.addr %s128, 3
      %s130 = smul.addr %s129, 2
      %s131 = scalar_lea.vmem %s3, %s130
      %s132 = smul.u32 %s27, 4
      %s133 = sld [smem:[#allocation5 + %s132]]
      %s134 = sadd.s32 %s132, 1
      %s135 = sld [smem:[#allocation5 + %s134]]
      %s136 = sadd.s32 %s132, 2
      %s137 = sld [smem:[#allocation5 + %s136]]
      %s138 = sadd.s32 %s132, 3
      %s139 = sld [smem:[#allocation5 + %s138]]
      %v140 = vld [vmem:[%s126] sm:$0x3]
      %141 = vst [vmem:[#allocation2] sm:$0x3] %v140
      %s142 = scalar_lea.vmem %s126, 2
      %v143 = vld [vmem:[%s142] sm:$0x3]
      %s144 = scalar_lea.vmem [#allocation2], 2
      %145 = vst [vmem:[%s144] sm:$0x3] %v143
      %s146 = scalar_lea.vmem %s126, 4
      %v147 = vld [vmem:[%s146] sm:$0x3]
      %s148 = scalar_lea.vmem [#allocation2], 4
      %149 = vst [vmem:[%s148] sm:$0x3] %v147
      %s150 = sld [smem:[#allocation4 + %s132]]
      %p151 = scmp.eq.s32.totalorder %s150, 0
      // Predicated region
      $region25: #{color_jitter_framewise.4} parent=23 // pred_check
        %p152 = pneg %p151
      $region26: #{color_jitter_framewise.4} parent=23 // pred_check_branch
        %154 = sbr.rel (%p152) target = $region28
      $region27: #{color_jitter_framewise.4} parent=23 // pred_region
        %v155 = vld [vmem:[#allocation2] sm:$0x3]
        %v156 = vstv %s133
        %v157 = vmul.f32 %v155, %v156
        %v158 = vmax.f32 %v157, 0.0
        %v159 = vmin.f32 %v158, 1.0
        %160 = vst [vmem:[#allocation2] sm:$0x3] %v159
        %v161 = vld [vmem:[%s144] sm:$0x3]
        %v162 = vmul.f32 %v161, %v156
        %v163 = vmax.f32 %v162, 0.0
        %v164 = vmin.f32 %v163, 1.0
        %165 = vst [vmem:[%s144] sm:$0x3] %v164
        %v166 = vld [vmem:[%s148] sm:$0x3]
        %v167 = vmul.f32 %v166, %v156
        %v168 = vmax.f32 %v167, 0.0
        %v169 = vmin.f32 %v168, 1.0
        %170 = vst [vmem:[%s148] sm:$0x3] %v169
      $region28: #{color_jitter_framewise.4} parent=23 // pred_fallthru
        _
      %p171 = scmp.eq.s32.totalorder %s150, 1
      // Predicated region
      $region29: #{color_jitter_framewise.4} parent=23 // pred_check
        %p172 = pneg %p171
      $region30: #{color_jitter_framewise.4} parent=23 // pred_check_branch
        %174 = sbr.rel (%p172) target = $region32
      $region31: #{color_jitter_framewise.4} parent=23 // pred_region
        %v175 = vld [vmem:[#allocation2] sm:$0x3]
        %v176 = vld [vmem:[%s144] sm:$0x3]
        %v177 = vld [vmem:[%s148] sm:$0x3]
        %v178 = vmul.f32 %v175, 0.2989
        %v179 = vmul.f32 %v176, 0.587
        %v180 = vadd.f32 %v178, %v179
        %v181 = vmul.f32 %v177, 0.114
        %v182 = vadd.f32 %v180, %v181
        %vm183 = vcmask 1041408
        %v184 = vsel %vm183, %v182, 0.0
        %185 = vadd.xlane.f32.xlu0 %v184
        %v186 = vpop.xlane.xlu0 %185
        %v187 = vrot.slane %v186, 4
        %v188 = vadd.f32 %v186, %v187
        %v189 = vrot.slane %v188, 2
        %v190 = vadd.f32 %v188, %v189
        %v191 = vrot.slane %v190, 1
        %v192 = vadd.f32 %v190, %v191
        %s193 = vtos %v192
        %s194 = smul.f32 %s193, 0.00390625
        %s195 = ssub.f32 1.0, %s135
        %s196 = smul.f32 %s195, %s194
        %v197 = vstv %s135
        %v198 = vmul.f32 %v197, %v175
        %v199 = vstv %s196
        %v200 = vadd.f32 %v198, %v199
        %v201 = vmax.f32 %v200, 0.0
        %v202 = vmin.f32 %v201, 1.0
        %203 = vst [vmem:[#allocation2] sm:$0x3] %v202
        %v204 = vld [vmem:[%s144] sm:$0x3]
        %v205 = vmul.f32 %v197, %v204
        %v206 = vadd.f32 %v205, %v199
        %v207 = vmax.f32 %v206, 0.0
        %v208 = vmin.f32 %v207, 1.0
        %209 = vst [vmem:[%s144] sm:$0x3] %v208
        %v210 = vld [vmem:[%s148] sm:$0x3]
        %v211 = vmul.f32 %v197, %v210
        %v212 = vadd.f32 %v211, %v199
        %v213 = vmax.f32 %v212, 0.0
        %v214 = vmin.f32 %v213, 1.0
        %215 = vst [vmem:[%s148] sm:$0x3] %v214
      $region32: #{color_jitter_framewise.4} parent=23 // pred_fallthru
        _
      %p216 = scmp.eq.s32.totalorder %s150, 2
      // Predicated region
      $region33: #{color_jitter_framewise.4} parent=23 // pred_check
        %p217 = pneg %p216
      $region34: #{color_jitter_framewise.4} parent=23 // pred_check_branch
        %219 = sbr.rel (%p217) target = $region36
      $region35: #{color_jitter_framewise.4} parent=23 // pred_region
        %s220 = ssub.f32 1.0, %s137
        %v221 = vld [vmem:[#allocation2] sm:$0x3]
        %v222 = vld [vmem:[%s144] sm:$0x3]
        %v223 = vld [vmem:[%s148] sm:$0x3]
        %v224 = vmul.f32 %v221, 0.2989
        %v225 = vmul.f32 %v222, 0.587
        %v226 = vadd.f32 %v224, %v225
        %v227 = vmul.f32 %v223, 0.114
        %v228 = vadd.f32 %v226, %v227
        %v229 = vstv %s220
        %v230 = vmul.f32 %v229, %v228
        %v231 = vstv %s137
        %v232 = vmul.f32 %v231, %v221
        %v233 = vadd.f32 %v232, %v230
        %v234 = vmax.f32 %v233, 0.0
        %v235 = vmin.f32 %v234, 1.0
        %236 = vst [vmem:[#allocation2] sm:$0x3] %v235
        %v237 = vmul.f32 %v231, %v222
        %v238 = vadd.f32 %v237, %v230
        %v239 = vmax.f32 %v238, 0.0
        %v240 = vmin.f32 %v239, 1.0
        %241 = vst [vmem:[%s144] sm:$0x3] %v240
        %v242 = vmul.f32 %v231, %v223
        %v243 = vadd.f32 %v242, %v230
        %v244 = vmax.f32 %v243, 0.0
        %v245 = vmin.f32 %v244, 1.0
        %246 = vst [vmem:[%s148] sm:$0x3] %v245
      $region36: #{color_jitter_framewise.4} parent=23 // pred_fallthru
        _
      %p247 = scmp.eq.s32.totalorder %s150, 3
      // Predicated region
      $region37: #{color_jitter_framewise.4} parent=23 // pred_check
        %p248 = pneg %p247
      $region38: #{color_jitter_framewise.4} parent=23 // pred_check_branch
        %250 = sbr.rel (%p248) target = $region40
      $region39: #{color_jitter_framewise.4} parent=23 // pred_region
        %v251 = vld [vmem:[#allocation2] sm:$0x3]
        %v252 = vld [vmem:[%s144] sm:$0x3]
        %v253 = vld [vmem:[%s148] sm:$0x3]
        %v254 = vmax.f32 %v251, %v252
        %v255 = vmax.f32 %v254, %v253
        %v256 = vmin.f32 %v251, %v252
        %v257 = vmin.f32 %v256, %v253
        %v258 = vsub.f32 %v255, %v257
        %v259 = vmax.f32 %v258, 1e-20
        %v260 = vrcp.pop %v259
        %v261 = vmul.f32 %v259, %v260
        %v262 = vsub.f32 2.0, %v261
        %v263 = vmul.f32 %v260, %v262
        %v264 = vsub.f32 %v255, %v251
        %v265 = vmul.f32 %v264, %v263
        %v266 = vsub.f32 %v255, %v252
        %v267 = vmul.f32 %v266, %v263
        %v268 = vsub.f32 %v255, %v253
        %v269 = vmul.f32 %v268, %v263
        %vm270 = vcmp.eq.f32.partialorder %v255, %v251
        %v271 = vsub.f32 %v269, %v267
        %vm272 = vcmp.eq.f32.partialorder %v255, %v252
        %v273 = vadd.f32 %v265, 2.0
        %v274 = vsub.f32 %v273, %v269
        %v275 = vadd.f32 %v267, 4.0
        %v276 = vsub.f32 %v275, %v265
        %v277 = vsel %vm272, %v274, %v276
        %v278 = vsel %vm270, %v271, %v277
        %v279 = vmul.f32 %v278, 0.16666667
        %v280 = vstv %s139
        %v281 = vadd.f32 %v279, %v280
        %v282 = vfloor.f32 %v281
        %v283 = vsub.f32 %v281, %v282
        %v284 = vmul.f32 %v283, 6.0
        %v285 = vadd.f32 %v284, 5.0
        %vm286 = vcmp.ge.f32.partialorder %v285, 6.0
        %v287 = vsub.f32 %v285, 6.0
        %v288 = vsel %vm286, %v287, %v285
        %v289 = vsub.f32 4.0, %v288
        %v290 = vmin.f32 %v288, %v289
        %v291 = vmax.f32 %v290, 0.0
        %v292 = vmin.f32 %v291, 1.0
        %v293 = vmul.f32 %v258, %v292
        %v294 = vsub.f32 %v255, %v293
        %295 = vst [vmem:[#allocation2] sm:$0x3] %v294
        %v296 = vadd.f32 %v284, 3.0
        %vm297 = vcmp.ge.f32.partialorder %v296, 6.0
        %v298 = vsub.f32 %v296, 6.0
        %v299 = vsel %vm297, %v298, %v296
        %v300 = vsub.f32 4.0, %v299
        %v301 = vmin.f32 %v299, %v300
        %v302 = vmax.f32 %v301, 0.0
        %v303 = vmin.f32 %v302, 1.0
        %v304 = vmul.f32 %v258, %v303
        %v305 = vsub.f32 %v255, %v304
        %306 = vst [vmem:[%s144] sm:$0x3] %v305
        %v307 = vadd.f32 %v284, 1.0
        %vm308 = vcmp.ge.f32.partialorder %v307, 6.0
        %v309 = vsub.f32 %v307, 6.0
        %v310 = vsel %vm308, %v309, %v307
        %v311 = vsub.f32 4.0, %v310
        %v312 = vmin.f32 %v310, %v311
        %v313 = vmax.f32 %v312, 0.0
        %v314 = vmin.f32 %v313, 1.0
        %v315 = vmul.f32 %v258, %v314
        %v316 = vsub.f32 %v255, %v315
        %317 = vst [vmem:[%s148] sm:$0x3] %v316
      $region40: #{color_jitter_framewise.4} parent=23 // pred_fallthru
        _
      %s318 = sld [smem:[#allocation4 + %s134]]
      %p319 = scmp.eq.s32.totalorder %s318, 0
      // Predicated region
      $region41: #{color_jitter_framewise.4} parent=23 // pred_check
        %p320 = pneg %p319
      $region42: #{color_jitter_framewise.4} parent=23 // pred_check_branch
        %322 = sbr.rel (%p320) target = $region44
      $region43: #{color_jitter_framewise.4} parent=23 // pred_region
        %v323 = vld [vmem:[#allocation2] sm:$0x3]
        %v324 = vstv %s133
        %v325 = vmul.f32 %v323, %v324
        %v326 = vmax.f32 %v325, 0.0
        %v327 = vmin.f32 %v326, 1.0
        %328 = vst [vmem:[#allocation2] sm:$0x3] %v327
        %v329 = vld [vmem:[%s144] sm:$0x3]
        %v330 = vmul.f32 %v329, %v324
        %v331 = vmax.f32 %v330, 0.0
        %v332 = vmin.f32 %v331, 1.0
        %333 = vst [vmem:[%s144] sm:$0x3] %v332
        %v334 = vld [vmem:[%s148] sm:$0x3]
        %v335 = vmul.f32 %v334, %v324
        %v336 = vmax.f32 %v335, 0.0
        %v337 = vmin.f32 %v336, 1.0
        %338 = vst [vmem:[%s148] sm:$0x3] %v337
      $region44: #{color_jitter_framewise.4} parent=23 // pred_fallthru
        _
      %p339 = scmp.eq.s32.totalorder %s318, 1
      // Predicated region
      $region45: #{color_jitter_framewise.4} parent=23 // pred_check
        %p340 = pneg %p339
      $region46: #{color_jitter_framewise.4} parent=23 // pred_check_branch
        %342 = sbr.rel (%p340) target = $region48
      $region47: #{color_jitter_framewise.4} parent=23 // pred_region
        %v343 = vld [vmem:[#allocation2] sm:$0x3]
        %v344 = vld [vmem:[%s144] sm:$0x3]
        %v345 = vld [vmem:[%s148] sm:$0x3]
        %v346 = vmul.f32 %v343, 0.2989
        %v347 = vmul.f32 %v344, 0.587
        %v348 = vadd.f32 %v346, %v347
        %v349 = vmul.f32 %v345, 0.114
        %v350 = vadd.f32 %v348, %v349
        %vm351 = vcmask 1041408
        %v352 = vsel %vm351, %v350, 0.0
        %353 = vadd.xlane.f32.xlu0 %v352
        %v354 = vpop.xlane.xlu0 %353
        %v355 = vrot.slane %v354, 4
        %v356 = vadd.f32 %v354, %v355
        %v357 = vrot.slane %v356, 2
        %v358 = vadd.f32 %v356, %v357
        %v359 = vrot.slane %v358, 1
        %v360 = vadd.f32 %v358, %v359
        %s361 = vtos %v360
        %s362 = smul.f32 %s361, 0.00390625
        %s363 = ssub.f32 1.0, %s135
        %s364 = smul.f32 %s363, %s362
        %v365 = vstv %s135
        %v366 = vmul.f32 %v365, %v343
        %v367 = vstv %s364
        %v368 = vadd.f32 %v366, %v367
        %v369 = vmax.f32 %v368, 0.0
        %v370 = vmin.f32 %v369, 1.0
        %371 = vst [vmem:[#allocation2] sm:$0x3] %v370
        %v372 = vld [vmem:[%s144] sm:$0x3]
        %v373 = vmul.f32 %v365, %v372
        %v374 = vadd.f32 %v373, %v367
        %v375 = vmax.f32 %v374, 0.0
        %v376 = vmin.f32 %v375, 1.0
        %377 = vst [vmem:[%s144] sm:$0x3] %v376
        %v378 = vld [vmem:[%s148] sm:$0x3]
        %v379 = vmul.f32 %v365, %v378
        %v380 = vadd.f32 %v379, %v367
        %v381 = vmax.f32 %v380, 0.0
        %v382 = vmin.f32 %v381, 1.0
        %383 = vst [vmem:[%s148] sm:$0x3] %v382
      $region48: #{color_jitter_framewise.4} parent=23 // pred_fallthru
        _
      %p384 = scmp.eq.s32.totalorder %s318, 2
      // Predicated region
      $region49: #{color_jitter_framewise.4} parent=23 // pred_check
        %p385 = pneg %p384
      $region50: #{color_jitter_framewise.4} parent=23 // pred_check_branch
        %387 = sbr.rel (%p385) target = $region52
      $region51: #{color_jitter_framewise.4} parent=23 // pred_region
        %s388 = ssub.f32 1.0, %s137
        %v389 = vld [vmem:[#allocation2] sm:$0x3]
        %v390 = vld [vmem:[%s144] sm:$0x3]
        %v391 = vld [vmem:[%s148] sm:$0x3]
        %v392 = vmul.f32 %v389, 0.2989
        %v393 = vmul.f32 %v390, 0.587
        %v394 = vadd.f32 %v392, %v393
        %v395 = vmul.f32 %v391, 0.114
        %v396 = vadd.f32 %v394, %v395
        %v397 = vstv %s388
        %v398 = vmul.f32 %v397, %v396
        %v399 = vstv %s137
        %v400 = vmul.f32 %v399, %v389
        %v401 = vadd.f32 %v400, %v398
        %v402 = vmax.f32 %v401, 0.0
        %v403 = vmin.f32 %v402, 1.0
        %404 = vst [vmem:[#allocation2] sm:$0x3] %v403
        %v405 = vmul.f32 %v399, %v390
        %v406 = vadd.f32 %v405, %v398
        %v407 = vmax.f32 %v406, 0.0
        %v408 = vmin.f32 %v407, 1.0
        %409 = vst [vmem:[%s144] sm:$0x3] %v408
        %v410 = vmul.f32 %v399, %v391
        %v411 = vadd.f32 %v410, %v398
        %v412 = vmax.f32 %v411, 0.0
        %v413 = vmin.f32 %v412, 1.0
        %414 = vst [vmem:[%s148] sm:$0x3] %v413
      $region52: #{color_jitter_framewise.4} parent=23 // pred_fallthru
        _
      %p415 = scmp.eq.s32.totalorder %s318, 3
      // Predicated region
      $region53: #{color_jitter_framewise.4} parent=23 // pred_check
        %p416 = pneg %p415
      $region54: #{color_jitter_framewise.4} parent=23 // pred_check_branch
        %418 = sbr.rel (%p416) target = $region56
      $region55: #{color_jitter_framewise.4} parent=23 // pred_region
        %v419 = vld [vmem:[#allocation2] sm:$0x3]
        %v420 = vld [vmem:[%s144] sm:$0x3]
        %v421 = vld [vmem:[%s148] sm:$0x3]
        %v422 = vmax.f32 %v419, %v420
        %v423 = vmax.f32 %v422, %v421
        %v424 = vmin.f32 %v419, %v420
        %v425 = vmin.f32 %v424, %v421
        %v426 = vsub.f32 %v423, %v425
        %v427 = vmax.f32 %v426, 1e-20
        %v428 = vrcp.pop %v427
        %v429 = vmul.f32 %v427, %v428
        %v430 = vsub.f32 2.0, %v429
        %v431 = vmul.f32 %v428, %v430
        %v432 = vsub.f32 %v423, %v419
        %v433 = vmul.f32 %v432, %v431
        %v434 = vsub.f32 %v423, %v420
        %v435 = vmul.f32 %v434, %v431
        %v436 = vsub.f32 %v423, %v421
        %v437 = vmul.f32 %v436, %v431
        %vm438 = vcmp.eq.f32.partialorder %v423, %v419
        %v439 = vsub.f32 %v437, %v435
        %vm440 = vcmp.eq.f32.partialorder %v423, %v420
        %v441 = vadd.f32 %v433, 2.0
        %v442 = vsub.f32 %v441, %v437
        %v443 = vadd.f32 %v435, 4.0
        %v444 = vsub.f32 %v443, %v433
        %v445 = vsel %vm440, %v442, %v444
        %v446 = vsel %vm438, %v439, %v445
        %v447 = vmul.f32 %v446, 0.16666667
        %v448 = vstv %s139
        %v449 = vadd.f32 %v447, %v448
        %v450 = vfloor.f32 %v449
        %v451 = vsub.f32 %v449, %v450
        %v452 = vmul.f32 %v451, 6.0
        %v453 = vadd.f32 %v452, 5.0
        %vm454 = vcmp.ge.f32.partialorder %v453, 6.0
        %v455 = vsub.f32 %v453, 6.0
        %v456 = vsel %vm454, %v455, %v453
        %v457 = vsub.f32 4.0, %v456
        %v458 = vmin.f32 %v456, %v457
        %v459 = vmax.f32 %v458, 0.0
        %v460 = vmin.f32 %v459, 1.0
        %v461 = vmul.f32 %v426, %v460
        %v462 = vsub.f32 %v423, %v461
        %463 = vst [vmem:[#allocation2] sm:$0x3] %v462
        %v464 = vadd.f32 %v452, 3.0
        %vm465 = vcmp.ge.f32.partialorder %v464, 6.0
        %v466 = vsub.f32 %v464, 6.0
        %v467 = vsel %vm465, %v466, %v464
        %v468 = vsub.f32 4.0, %v467
        %v469 = vmin.f32 %v467, %v468
        %v470 = vmax.f32 %v469, 0.0
        %v471 = vmin.f32 %v470, 1.0
        %v472 = vmul.f32 %v426, %v471
        %v473 = vsub.f32 %v423, %v472
        %474 = vst [vmem:[%s144] sm:$0x3] %v473
        %v475 = vadd.f32 %v452, 1.0
        %vm476 = vcmp.ge.f32.partialorder %v475, 6.0
        %v477 = vsub.f32 %v475, 6.0
        %v478 = vsel %vm476, %v477, %v475
        %v479 = vsub.f32 4.0, %v478
        %v480 = vmin.f32 %v478, %v479
        %v481 = vmax.f32 %v480, 0.0
        %v482 = vmin.f32 %v481, 1.0
        %v483 = vmul.f32 %v426, %v482
        %v484 = vsub.f32 %v423, %v483
        %485 = vst [vmem:[%s148] sm:$0x3] %v484
      $region56: #{color_jitter_framewise.4} parent=23 // pred_fallthru
        _
      %s486 = sld [smem:[#allocation4 + %s136]]
      %p487 = scmp.eq.s32.totalorder %s486, 0
      // Predicated region
      $region57: #{color_jitter_framewise.4} parent=23 // pred_check
        %p488 = pneg %p487
      $region58: #{color_jitter_framewise.4} parent=23 // pred_check_branch
        %490 = sbr.rel (%p488) target = $region60
      $region59: #{color_jitter_framewise.4} parent=23 // pred_region
        %v491 = vld [vmem:[#allocation2] sm:$0x3]
        %v492 = vstv %s133
        %v493 = vmul.f32 %v491, %v492
        %v494 = vmax.f32 %v493, 0.0
        %v495 = vmin.f32 %v494, 1.0
        %496 = vst [vmem:[#allocation2] sm:$0x3] %v495
        %v497 = vld [vmem:[%s144] sm:$0x3]
        %v498 = vmul.f32 %v497, %v492
        %v499 = vmax.f32 %v498, 0.0
        %v500 = vmin.f32 %v499, 1.0
        %501 = vst [vmem:[%s144] sm:$0x3] %v500
        %v502 = vld [vmem:[%s148] sm:$0x3]
        %v503 = vmul.f32 %v502, %v492
        %v504 = vmax.f32 %v503, 0.0
        %v505 = vmin.f32 %v504, 1.0
        %506 = vst [vmem:[%s148] sm:$0x3] %v505
      $region60: #{color_jitter_framewise.4} parent=23 // pred_fallthru
        _
      %p507 = scmp.eq.s32.totalorder %s486, 1
      // Predicated region
      $region61: #{color_jitter_framewise.4} parent=23 // pred_check
        %p508 = pneg %p507
      $region62: #{color_jitter_framewise.4} parent=23 // pred_check_branch
        %510 = sbr.rel (%p508) target = $region64
      $region63: #{color_jitter_framewise.4} parent=23 // pred_region
        %v511 = vld [vmem:[#allocation2] sm:$0x3]
        %v512 = vld [vmem:[%s144] sm:$0x3]
        %v513 = vld [vmem:[%s148] sm:$0x3]
        %v514 = vmul.f32 %v511, 0.2989
        %v515 = vmul.f32 %v512, 0.587
        %v516 = vadd.f32 %v514, %v515
        %v517 = vmul.f32 %v513, 0.114
        %v518 = vadd.f32 %v516, %v517
        %vm519 = vcmask 1041408
        %v520 = vsel %vm519, %v518, 0.0
        %521 = vadd.xlane.f32.xlu0 %v520
        %v522 = vpop.xlane.xlu0 %521
        %v523 = vrot.slane %v522, 4
        %v524 = vadd.f32 %v522, %v523
        %v525 = vrot.slane %v524, 2
        %v526 = vadd.f32 %v524, %v525
        %v527 = vrot.slane %v526, 1
        %v528 = vadd.f32 %v526, %v527
        %s529 = vtos %v528
        %s530 = smul.f32 %s529, 0.00390625
        %s531 = ssub.f32 1.0, %s135
        %s532 = smul.f32 %s531, %s530
        %v533 = vstv %s135
        %v534 = vmul.f32 %v533, %v511
        %v535 = vstv %s532
        %v536 = vadd.f32 %v534, %v535
        %v537 = vmax.f32 %v536, 0.0
        %v538 = vmin.f32 %v537, 1.0
        %539 = vst [vmem:[#allocation2] sm:$0x3] %v538
        %v540 = vld [vmem:[%s144] sm:$0x3]
        %v541 = vmul.f32 %v533, %v540
        %v542 = vadd.f32 %v541, %v535
        %v543 = vmax.f32 %v542, 0.0
        %v544 = vmin.f32 %v543, 1.0
        %545 = vst [vmem:[%s144] sm:$0x3] %v544
        %v546 = vld [vmem:[%s148] sm:$0x3]
        %v547 = vmul.f32 %v533, %v546
        %v548 = vadd.f32 %v547, %v535
        %v549 = vmax.f32 %v548, 0.0
        %v550 = vmin.f32 %v549, 1.0
        %551 = vst [vmem:[%s148] sm:$0x3] %v550
      $region64: #{color_jitter_framewise.4} parent=23 // pred_fallthru
        _
      %p552 = scmp.eq.s32.totalorder %s486, 2
      // Predicated region
      $region65: #{color_jitter_framewise.4} parent=23 // pred_check
        %p553 = pneg %p552
      $region66: #{color_jitter_framewise.4} parent=23 // pred_check_branch
        %555 = sbr.rel (%p553) target = $region68
      $region67: #{color_jitter_framewise.4} parent=23 // pred_region
        %s556 = ssub.f32 1.0, %s137
        %v557 = vld [vmem:[#allocation2] sm:$0x3]
        %v558 = vld [vmem:[%s144] sm:$0x3]
        %v559 = vld [vmem:[%s148] sm:$0x3]
        %v560 = vmul.f32 %v557, 0.2989
        %v561 = vmul.f32 %v558, 0.587
        %v562 = vadd.f32 %v560, %v561
        %v563 = vmul.f32 %v559, 0.114
        %v564 = vadd.f32 %v562, %v563
        %v565 = vstv %s556
        %v566 = vmul.f32 %v565, %v564
        %v567 = vstv %s137
        %v568 = vmul.f32 %v567, %v557
        %v569 = vadd.f32 %v568, %v566
        %v570 = vmax.f32 %v569, 0.0
        %v571 = vmin.f32 %v570, 1.0
        %572 = vst [vmem:[#allocation2] sm:$0x3] %v571
        %v573 = vmul.f32 %v567, %v558
        %v574 = vadd.f32 %v573, %v566
        %v575 = vmax.f32 %v574, 0.0
        %v576 = vmin.f32 %v575, 1.0
        %577 = vst [vmem:[%s144] sm:$0x3] %v576
        %v578 = vmul.f32 %v567, %v559
        %v579 = vadd.f32 %v578, %v566
        %v580 = vmax.f32 %v579, 0.0
        %v581 = vmin.f32 %v580, 1.0
        %582 = vst [vmem:[%s148] sm:$0x3] %v581
      $region68: #{color_jitter_framewise.4} parent=23 // pred_fallthru
        _
      %p583 = scmp.eq.s32.totalorder %s486, 3
      // Predicated region
      $region69: #{color_jitter_framewise.4} parent=23 // pred_check
        %p584 = pneg %p583
      $region70: #{color_jitter_framewise.4} parent=23 // pred_check_branch
        %586 = sbr.rel (%p584) target = $region72
      $region71: #{color_jitter_framewise.4} parent=23 // pred_region
        %v587 = vld [vmem:[#allocation2] sm:$0x3]
        %v588 = vld [vmem:[%s144] sm:$0x3]
        %v589 = vld [vmem:[%s148] sm:$0x3]
        %v590 = vmax.f32 %v587, %v588
        %v591 = vmax.f32 %v590, %v589
        %v592 = vmin.f32 %v587, %v588
        %v593 = vmin.f32 %v592, %v589
        %v594 = vsub.f32 %v591, %v593
        %v595 = vmax.f32 %v594, 1e-20
        %v596 = vrcp.pop %v595
        %v597 = vmul.f32 %v595, %v596
        %v598 = vsub.f32 2.0, %v597
        %v599 = vmul.f32 %v596, %v598
        %v600 = vsub.f32 %v591, %v587
        %v601 = vmul.f32 %v600, %v599
        %v602 = vsub.f32 %v591, %v588
        %v603 = vmul.f32 %v602, %v599
        %v604 = vsub.f32 %v591, %v589
        %v605 = vmul.f32 %v604, %v599
        %vm606 = vcmp.eq.f32.partialorder %v591, %v587
        %v607 = vsub.f32 %v605, %v603
        %vm608 = vcmp.eq.f32.partialorder %v591, %v588
        %v609 = vadd.f32 %v601, 2.0
        %v610 = vsub.f32 %v609, %v605
        %v611 = vadd.f32 %v603, 4.0
        %v612 = vsub.f32 %v611, %v601
        %v613 = vsel %vm608, %v610, %v612
        %v614 = vsel %vm606, %v607, %v613
        %v615 = vmul.f32 %v614, 0.16666667
        %v616 = vstv %s139
        %v617 = vadd.f32 %v615, %v616
        %v618 = vfloor.f32 %v617
        %v619 = vsub.f32 %v617, %v618
        %v620 = vmul.f32 %v619, 6.0
        %v621 = vadd.f32 %v620, 5.0
        %vm622 = vcmp.ge.f32.partialorder %v621, 6.0
        %v623 = vsub.f32 %v621, 6.0
        %v624 = vsel %vm622, %v623, %v621
        %v625 = vsub.f32 4.0, %v624
        %v626 = vmin.f32 %v624, %v625
        %v627 = vmax.f32 %v626, 0.0
        %v628 = vmin.f32 %v627, 1.0
        %v629 = vmul.f32 %v594, %v628
        %v630 = vsub.f32 %v591, %v629
        %631 = vst [vmem:[#allocation2] sm:$0x3] %v630
        %v632 = vadd.f32 %v620, 3.0
        %vm633 = vcmp.ge.f32.partialorder %v632, 6.0
        %v634 = vsub.f32 %v632, 6.0
        %v635 = vsel %vm633, %v634, %v632
        %v636 = vsub.f32 4.0, %v635
        %v637 = vmin.f32 %v635, %v636
        %v638 = vmax.f32 %v637, 0.0
        %v639 = vmin.f32 %v638, 1.0
        %v640 = vmul.f32 %v594, %v639
        %v641 = vsub.f32 %v591, %v640
        %642 = vst [vmem:[%s144] sm:$0x3] %v641
        %v643 = vadd.f32 %v620, 1.0
        %vm644 = vcmp.ge.f32.partialorder %v643, 6.0
        %v645 = vsub.f32 %v643, 6.0
        %v646 = vsel %vm644, %v645, %v643
        %v647 = vsub.f32 4.0, %v646
        %v648 = vmin.f32 %v646, %v647
        %v649 = vmax.f32 %v648, 0.0
        %v650 = vmin.f32 %v649, 1.0
        %v651 = vmul.f32 %v594, %v650
        %v652 = vsub.f32 %v591, %v651
        %653 = vst [vmem:[%s148] sm:$0x3] %v652
      $region72: #{color_jitter_framewise.4} parent=23 // pred_fallthru
        _
      %s654 = sld [smem:[#allocation4 + %s138]]
      %p655 = scmp.eq.s32.totalorder %s654, 0
      // Predicated region
      $region73: #{color_jitter_framewise.4} parent=23 // pred_check
        %p656 = pneg %p655
      $region74: #{color_jitter_framewise.4} parent=23 // pred_check_branch
        %658 = sbr.rel (%p656) target = $region76
      $region75: #{color_jitter_framewise.4} parent=23 // pred_region
        %v659 = vld [vmem:[#allocation2] sm:$0x3]
        %v660 = vstv %s133
        %v661 = vmul.f32 %v659, %v660
        %v662 = vmax.f32 %v661, 0.0
        %v663 = vmin.f32 %v662, 1.0
        %664 = vst [vmem:[#allocation2] sm:$0x3] %v663
        %v665 = vld [vmem:[%s144] sm:$0x3]
        %v666 = vmul.f32 %v665, %v660
        %v667 = vmax.f32 %v666, 0.0
        %v668 = vmin.f32 %v667, 1.0
        %669 = vst [vmem:[%s144] sm:$0x3] %v668
        %v670 = vld [vmem:[%s148] sm:$0x3]
        %v671 = vmul.f32 %v670, %v660
        %v672 = vmax.f32 %v671, 0.0
        %v673 = vmin.f32 %v672, 1.0
        %674 = vst [vmem:[%s148] sm:$0x3] %v673
      $region76: #{color_jitter_framewise.4} parent=23 // pred_fallthru
        _
      %p675 = scmp.eq.s32.totalorder %s654, 1
      // Predicated region
      $region77: #{color_jitter_framewise.4} parent=23 // pred_check
        %p676 = pneg %p675
      $region78: #{color_jitter_framewise.4} parent=23 // pred_check_branch
        %678 = sbr.rel (%p676) target = $region80
      $region79: #{color_jitter_framewise.4} parent=23 // pred_region
        %v679 = vld [vmem:[#allocation2] sm:$0x3]
        %v680 = vld [vmem:[%s144] sm:$0x3]
        %v681 = vld [vmem:[%s148] sm:$0x3]
        %v682 = vmul.f32 %v679, 0.2989
        %v683 = vmul.f32 %v680, 0.587
        %v684 = vadd.f32 %v682, %v683
        %v685 = vmul.f32 %v681, 0.114
        %v686 = vadd.f32 %v684, %v685
        %vm687 = vcmask 1041408
        %v688 = vsel %vm687, %v686, 0.0
        %689 = vadd.xlane.f32.xlu0 %v688
        %v690 = vpop.xlane.xlu0 %689
        %v691 = vrot.slane %v690, 4
        %v692 = vadd.f32 %v690, %v691
        %v693 = vrot.slane %v692, 2
        %v694 = vadd.f32 %v692, %v693
        %v695 = vrot.slane %v694, 1
        %v696 = vadd.f32 %v694, %v695
        %s697 = vtos %v696
        %s698 = smul.f32 %s697, 0.00390625
        %s699 = ssub.f32 1.0, %s135
        %s700 = smul.f32 %s699, %s698
        %v701 = vstv %s135
        %v702 = vmul.f32 %v701, %v679
        %v703 = vstv %s700
        %v704 = vadd.f32 %v702, %v703
        %v705 = vmax.f32 %v704, 0.0
        %v706 = vmin.f32 %v705, 1.0
        %707 = vst [vmem:[#allocation2] sm:$0x3] %v706
        %v708 = vld [vmem:[%s144] sm:$0x3]
        %v709 = vmul.f32 %v701, %v708
        %v710 = vadd.f32 %v709, %v703
        %v711 = vmax.f32 %v710, 0.0
        %v712 = vmin.f32 %v711, 1.0
        %713 = vst [vmem:[%s144] sm:$0x3] %v712
        %v714 = vld [vmem:[%s148] sm:$0x3]
        %v715 = vmul.f32 %v701, %v714
        %v716 = vadd.f32 %v715, %v703
        %v717 = vmax.f32 %v716, 0.0
        %v718 = vmin.f32 %v717, 1.0
        %719 = vst [vmem:[%s148] sm:$0x3] %v718
      $region80: #{color_jitter_framewise.4} parent=23 // pred_fallthru
        _
      %p720 = scmp.eq.s32.totalorder %s654, 2
      // Predicated region
      $region81: #{color_jitter_framewise.4} parent=23 // pred_check
        %p721 = pneg %p720
      $region82: #{color_jitter_framewise.4} parent=23 // pred_check_branch
        %723 = sbr.rel (%p721) target = $region84
      $region83: #{color_jitter_framewise.4} parent=23 // pred_region
        %s724 = ssub.f32 1.0, %s137
        %v725 = vld [vmem:[#allocation2] sm:$0x3]
        %v726 = vld [vmem:[%s144] sm:$0x3]
        %v727 = vld [vmem:[%s148] sm:$0x3]
        %v728 = vmul.f32 %v725, 0.2989
        %v729 = vmul.f32 %v726, 0.587
        %v730 = vadd.f32 %v728, %v729
        %v731 = vmul.f32 %v727, 0.114
        %v732 = vadd.f32 %v730, %v731
        %v733 = vstv %s724
        %v734 = vmul.f32 %v733, %v732
        %v735 = vstv %s137
        %v736 = vmul.f32 %v735, %v725
        %v737 = vadd.f32 %v736, %v734
        %v738 = vmax.f32 %v737, 0.0
        %v739 = vmin.f32 %v738, 1.0
        %740 = vst [vmem:[#allocation2] sm:$0x3] %v739
        %v741 = vmul.f32 %v735, %v726
        %v742 = vadd.f32 %v741, %v734
        %v743 = vmax.f32 %v742, 0.0
        %v744 = vmin.f32 %v743, 1.0
        %745 = vst [vmem:[%s144] sm:$0x3] %v744
        %v746 = vmul.f32 %v735, %v727
        %v747 = vadd.f32 %v746, %v734
        %v748 = vmax.f32 %v747, 0.0
        %v749 = vmin.f32 %v748, 1.0
        %750 = vst [vmem:[%s148] sm:$0x3] %v749
      $region84: #{color_jitter_framewise.4} parent=23 // pred_fallthru
        _
      %p751 = scmp.eq.s32.totalorder %s654, 3
      // Predicated region
      $region85: #{color_jitter_framewise.4} parent=23 // pred_check
        %p752 = pneg %p751
      $region86: #{color_jitter_framewise.4} parent=23 // pred_check_branch
        %754 = sbr.rel (%p752) target = $region88
      $region87: #{color_jitter_framewise.4} parent=23 // pred_region
        %v755 = vld [vmem:[#allocation2] sm:$0x3]
        %v756 = vld [vmem:[%s144] sm:$0x3]
        %v757 = vld [vmem:[%s148] sm:$0x3]
        %v758 = vmax.f32 %v755, %v756
        %v759 = vmax.f32 %v758, %v757
        %v760 = vmin.f32 %v755, %v756
        %v761 = vmin.f32 %v760, %v757
        %v762 = vsub.f32 %v759, %v761
        %v763 = vmax.f32 %v762, 1e-20
        %v764 = vrcp.pop %v763
        %v765 = vmul.f32 %v763, %v764
        %v766 = vsub.f32 2.0, %v765
        %v767 = vmul.f32 %v764, %v766
        %v768 = vsub.f32 %v759, %v755
        %v769 = vmul.f32 %v768, %v767
        %v770 = vsub.f32 %v759, %v756
        %v771 = vmul.f32 %v770, %v767
        %v772 = vsub.f32 %v759, %v757
        %v773 = vmul.f32 %v772, %v767
        %vm774 = vcmp.eq.f32.partialorder %v759, %v755
        %v775 = vsub.f32 %v773, %v771
        %vm776 = vcmp.eq.f32.partialorder %v759, %v756
        %v777 = vadd.f32 %v769, 2.0
        %v778 = vsub.f32 %v777, %v773
        %v779 = vadd.f32 %v771, 4.0
        %v780 = vsub.f32 %v779, %v769
        %v781 = vsel %vm776, %v778, %v780
        %v782 = vsel %vm774, %v775, %v781
        %v783 = vmul.f32 %v782, 0.16666667
        %v784 = vstv %s139
        %v785 = vadd.f32 %v783, %v784
        %v786 = vfloor.f32 %v785
        %v787 = vsub.f32 %v785, %v786
        %v788 = vmul.f32 %v787, 6.0
        %v789 = vadd.f32 %v788, 5.0
        %vm790 = vcmp.ge.f32.partialorder %v789, 6.0
        %v791 = vsub.f32 %v789, 6.0
        %v792 = vsel %vm790, %v791, %v789
        %v793 = vsub.f32 4.0, %v792
        %v794 = vmin.f32 %v792, %v793
        %v795 = vmax.f32 %v794, 0.0
        %v796 = vmin.f32 %v795, 1.0
        %v797 = vmul.f32 %v762, %v796
        %v798 = vsub.f32 %v759, %v797
        %799 = vst [vmem:[#allocation2] sm:$0x3] %v798
        %v800 = vadd.f32 %v788, 3.0
        %vm801 = vcmp.ge.f32.partialorder %v800, 6.0
        %v802 = vsub.f32 %v800, 6.0
        %v803 = vsel %vm801, %v802, %v800
        %v804 = vsub.f32 4.0, %v803
        %v805 = vmin.f32 %v803, %v804
        %v806 = vmax.f32 %v805, 0.0
        %v807 = vmin.f32 %v806, 1.0
        %v808 = vmul.f32 %v762, %v807
        %v809 = vsub.f32 %v759, %v808
        %810 = vst [vmem:[%s144] sm:$0x3] %v809
        %v811 = vadd.f32 %v788, 1.0
        %vm812 = vcmp.ge.f32.partialorder %v811, 6.0
        %v813 = vsub.f32 %v811, 6.0
        %v814 = vsel %vm812, %v813, %v811
        %v815 = vsub.f32 4.0, %v814
        %v816 = vmin.f32 %v814, %v815
        %v817 = vmax.f32 %v816, 0.0
        %v818 = vmin.f32 %v817, 1.0
        %v819 = vmul.f32 %v762, %v818
        %v820 = vsub.f32 %v759, %v819
        %821 = vst [vmem:[%s148] sm:$0x3] %v820
      $region88: #{color_jitter_framewise.4} parent=23 // pred_fallthru
        _
      %v822 = vld [vmem:[#allocation2] sm:$0x3]
      %823 = vst [vmem:[%s131] sm:$0x3] %v822
      %v824 = vld [vmem:[%s144] sm:$0x3]
      %s825 = scalar_lea.vmem %s131, 2
      %826 = vst [vmem:[%s825] sm:$0x3] %v824
      %v827 = vld [vmem:[%s148] sm:$0x3]
      %s828 = scalar_lea.vmem %s131, 4
      %829 = vst [vmem:[%s828] sm:$0x3] %v827
      %p830 = scmp.lt.s32.totalorder %s27, 7
      %s831 = scalar_select %p830, %s27, 7
      %s832 = smul.addr %s831, 3
      %s833 = smul.addr %s832, 2
      %s834 = scalar_lea.vmem %s3, %s833
      // Predicated region
      $region89: #{color_jitter_framewise.4} parent=23 // pred_check
        %p835 = pneg %p71
      $region90: #{color_jitter_framewise.4} parent=23 // pred_check_branch
        %837 = sbr.rel (%p835) target = $region92
      $region91: #{color_jitter_framewise.4} parent=23 // pred_region
        _
      $region92: #{color_jitter_framewise.4} parent=23 // pred_fallthru
        _
    $region24: #{color_jitter_framewise.4} parent=5 // pred_fallthru
      _
    %p838 = scmp.le.s32.totalorder 2, %s22
    // Predicated region
    $region93: #{color_jitter_framewise.4} parent=5 // pred_check
      %p839 = pneg %p838
    $region94: #{color_jitter_framewise.4} parent=5 // pred_check_branch
      %841 = sbr.rel (%p839) target = $region96
    $region95: #{color_jitter_framewise.4} parent=5 // pred_region
      %s842 = ssub.s32 %s22, 2
      // Predicated region
      $region97: #{color_jitter_framewise.4} parent=95 // pred_check
        %p843 = pneg %p77
      $region98: #{color_jitter_framewise.4} parent=95 // pred_check_branch
        %845 = sbr.rel (%p843) target = $region100
      $region99: #{color_jitter_framewise.4} parent=95 // pred_region
        %p846 = scmp.lt.s32.totalorder %s28, 7
        %s847 = scalar_select %p846, %s28, 7
        %s848 = smul.addr %s847, 3
        %s849 = smul.addr %s848, 2
        %s850 = scalar_lea.vmem %s3, %s849
      $region100: #{color_jitter_framewise.4} parent=95 // pred_fallthru
        _
    $region96: #{color_jitter_framewise.4} parent=5 // pred_fallthru
      _
  $region6: #{color_jitter_framewise.4} parent=0 // loop_footer
    %s26 = sadd.s32 1, %s22
  $region7: #{color_jitter_framewise.4} parent=0 // loop_footer_branch
    %21 = sbr.rel target = $region3
  $region8: #{color_jitter_framewise.4} parent=0 // loop_exit
    _

</llo_original>
